<compile_context>
chip_gen: v7x
topology: tpu7x:2x2x1
jax: 0.10.0
libtpu: 0.0.40
codegen_flags: <defaults>
</compile_context>

<pallas_src>
import math
import functools

import jax
import jax.numpy as jnp
from jax.experimental import pallas as pl
from jax.experimental.pallas import tpu as pltpu

# MXU input dtype. Activations are cast to this right before every matmul; accumulation,
# LayerNorm statistics, softmax and the residual stream stay float32.
MXU_DTYPE = jnp.bfloat16
_NEG_INF = -1e9


def _vmem_limit_bytes():
    # Per-generation VMEM budget: ~3/4 of physical, capped at 100 MiB (v5e/v6e have 128 MiB,
    # v7x only 64 MiB -> 48 MiB).
    try:
        cap = int(pltpu.get_tpu_info().vmem_capacity_bytes)
    except Exception:
        cap = 128 * 1024 * 1024
    return min(cap * 3 // 4, 100 * 1024 * 1024)


# ----------------------------- in-kernel helpers -----------------------------

def _layernorm(x, gamma, beta):
    # f32 statistics (kept in f32 even though matmul inputs are bf16)
    mu = jnp.mean(x, axis=-1, keepdims=True)
    var = jnp.mean(jnp.square(x - mu), axis=-1, keepdims=True)
    return (x - mu) * jax.lax.rsqrt(var + 1e-5) * gamma + beta


def _qkt(q, k):
    """(Tq, d) x (Tk, d) -> (Tq, Tk), contracting the last dim (no explicit transpose)."""
    return jax.lax.dot_general(q, k, (((1,), (1,)), ((), ())),
                               preferred_element_type=jnp.float32)


def _softmax(s):
    # f32 softmax; reciprocal goes to the (otherwise idle) EUP slot.
    s = s - jnp.max(s, axis=-1, keepdims=True)
    p = jnp.exp(s)
    return p * pl.reciprocal(jnp.sum(p, axis=-1, keepdims=True), approx=True)


# ----------------------------- fused decoder-layer kernel -----------------------------

def _decoder_layer_kernel(x_ref, m_ref, tpad_ref, spad_ref,
                          ln0g_ref, ln0b_ref, wqkv_ref, bqkv_ref, wo0_ref, bo0_ref,
                          ln1g_ref, ln1b_ref, wqv_ref, bqv_ref, wk_ref, bk_ref,
                          wo1_ref, bo1_ref,
                          ln2g_ref, ln2b_ref, w1_ref, b1_ref, w2_ref, b2_ref,
                          o_ref, *, num_heads):
    x = x_ref[0]                                   # (T, D) f32 residual stream
    m = m_ref[0]                                   # (S, D) f32 encoder memory
    T, D = x.shape
    S = m.shape[0]
    dk = D // num_heads

    # ---------------- sublayer 0: x = x + SelfAttn(LN0(x)) ----------------
    xn = _layernorm(x, ln0g_ref[...], ln0b_ref[...])
    # Fused QKV projection: one (T, D) @ (D, 3D) MXU pass. 1/sqrt(dk) already folded into
    # the query columns of wqkv / bqkv.
    qkv = jnp.dot(xn.astype(MXU_DTYPE), wqkv_ref[...],
                  preferred_element_type=jnp.float32) + bqkv_ref[...]
    qkv = qkv.astype(MXU_DTYPE)                    # single bf16 cast outside the head loop

    # Additive mask built fully in-register: causal from iota, padding from the tiny (1,T) keep-mask.
    row = jax.lax.broadcasted_iota(jnp.int32, (T, T), 0)
    col = jax.lax.broadcasted_iota(jnp.int32, (T, T), 1)
    keep0 = jnp.logical_and(tpad_ref[0] > 0.5, row >= col)       # (T, T)
    add_mask0 = jnp.where(keep0, 0.0, _NEG_INF)

    # TODO(synk): batch the per-head QK^T / PV matmuls with a head-leading dot_general at
    # production H / dk; the static unroll is kept here for lowering robustness at toy shapes.
    ctx = []
    for h in range(num_heads):
        c = h * dk
        p = _softmax(_qkt(qkv[:, c:c + dk], qkv[:, D + c:D + c + dk]) + add_mask0)
        ctx.append(jnp.dot(p.astype(MXU_DTYPE), qkv[:, 2 * D + c:2 * D + c + dk],
                           preferred_element_type=jnp.float32))   # (T, dk)
    ctx = jnp.concatenate(ctx, axis=-1).astype(MXU_DTYPE)          # (T, D)
    y0 = jnp.dot(ctx, wo0_ref[...], preferred_element_type=jnp.float32) + bo0_ref[...]
    x1 = x + y0                                                    # residual, f32

    # ---------------- sublayer 1: x = x + SrcAttn(m, LN1(x), m) ----------------
    # Reference wiring: query = encoder memory, key = LN1(x), value = encoder memory.
    kn = _layernorm(x1, ln1g_ref[...], ln1b_ref[...])
    qv = jnp.dot(m.astype(MXU_DTYPE), wqv_ref[...],
                 preferred_element_type=jnp.float32) + bqv_ref[...]          # (S, 2D)
    qv = qv.astype(MXU_DTYPE)
    kk = (jnp.dot(kn.astype(MXU_DTYPE), wk_ref[...],
                  preferred_element_type=jnp.float32) + bk_ref[...]).astype(MXU_DTYPE)  # (T, D)

    # src padding mask over the key axis (key length T == S, as required by the reference).
    add_mask1 = jnp.where(spad_ref[0] > 0.5, 0.0, _NEG_INF)                  # (1, S)

    ctx = []
    for h in range(num_heads):
        c = h * dk
        p = _softmax(_qkt(qv[:, c:c + dk], kk[:, c:c + dk]) + add_mask1)     # (S, T)
        ctx.append(jnp.dot(p.astype(MXU_DTYPE), qv[:, D + c:D + c + dk],
                           preferred_element_type=jnp.float32))              # (S, dk)
    ctx = jnp.concatenate(ctx, axis=-1).astype(MXU_DTYPE)                    # (S, D)
    y1 = jnp.dot(ctx, wo1_ref[...], preferred_element_type=jnp.float32) + bo1_ref[...]
    x2 = x1 + y1                                   # residual (requires S == T, as in the reference)

    # ---------------- sublayer 2: x = x + FFN(LN2(x)) ----------------
    xn2 = _layernorm(x2, ln2g_ref[...], ln2b_ref[...])
    hdn = jnp.dot(xn2.astype(MXU_DTYPE), w1_ref[...],
                  preferred_element_type=jnp.float32) + b1_ref[...]
    hdn = jnp.maximum(hdn, 0.0)                    # (T, DFF) stays in VMEM / vregs
    y2 = jnp.dot(hdn.astype(MXU_DTYPE), w2_ref[...],
                 preferred_element_type=jnp.float32) + b2_ref[...]

    o_ref[0] = (x2 + y2).astype(o_ref.dtype)       # final residual fused in the epilogue


# ----------------------------- wrapper -----------------------------

def _resident(shape):
    # Full-array block whose block index never changes across the grid -> stays VMEM-resident.
    n = len(shape)
    return pl.BlockSpec(shape, lambda *_: (0,) * n)


def decoder_layer_forward(params, x, encoder_out, src_mask_padding,
                          tgt_mask_padding, tgt_mask_causal, num_heads):
    B, T, D = x.shape
    S = encoder_out.shape[1]
    assert D % num_heads == 0, "model dim must be divisible by num_heads"
    assert S == T, "reference residual / key-mask semantics require S == T"
    # Causal mask is rebuilt in-kernel from broadcasted_iota (standard lower-triangular mask,
    # as constructed in the reference usage) -> no (T,T) HBM/VMEM tensor needed.
    del tgt_mask_causal

    tgt_pad = tgt_mask_padding.astype(jnp.float32).reshape(B, 1, T)
    src_pad = src_mask_padding.astype(jnp.float32).reshape(B, 1, S)

    sa, ca, fp = params["self_attn"], params["src_attn"], params["ffn"]
    dff = fp["w1"].shape[1]
    kern = functools.partial(_decoder_layer_kernel, num_heads=num_heads)

    return pl.pallas_call(
        kern,
        out_shape=jax.ShapeDtypeStruct((B, T, D), x.dtype),
        grid=(B,),
        in_specs=[
            pl.BlockSpec((1, T, D), lambda b: (b, 0, 0)),       # x (per-batch block)
            pl.BlockSpec((1, S, D), lambda b: (b, 0, 0)),       # encoder memory
            pl.BlockSpec((1, 1, T), lambda b: (b, 0, 0)),       # tgt padding keep-mask
            pl.BlockSpec((1, 1, S), lambda b: (b, 0, 0)),       # src padding keep-mask
            _resident((1, D)), _resident((1, D)),               # LN0 gamma / beta
            _resident((D, 3 * D)), _resident((1, 3 * D)),       # fused Wq|Wk|Wv (bf16, scale folded) / bias
            _resident((D, D)), _resident((1, D)),               # Wo (self) / bo
            _resident((1, D)), _resident((1, D)),               # LN1 gamma / beta
            _resident((D, 2 * D)), _resident((1, 2 * D)),       # fused Wq|Wv on memory (scale folded)
            _resident((D, D)), _resident((1, D)),               # Wk on LN1(x) / bk
            _resident((D, D)), _resident((1, D)),               # Wo (cross) / bo
            _resident((1, D)), _resident((1, D)),               # LN2 gamma / beta
            _resident((D, dff)), _resident((1, dff)),           # W1 (bf16) / b1
            _resident((dff, D)), _resident((1, D)),             # W2 (bf16) / b2
        ],
        out_specs=pl.BlockSpec((1, T, D), lambda b: (b, 0, 0)),
        compiler_params=pltpu.CompilerParams(
            dimension_semantics=("parallel",),
            vmem_limit_bytes=_vmem_limit_bytes()),
    )(x, encoder_out, tgt_pad, src_pad,
      params["ln0_g"].reshape(1, D), params["ln0_b"].reshape(1, D),
      sa["wqkv"], sa["bqkv"].reshape(1, 3 * D), sa["wo"], sa["bo"].reshape(1, D),
      params["ln1_g"].reshape(1, D), params["ln1_b"].reshape(1, D),
      ca["wqv"], ca["bqv"].reshape(1, 2 * D), ca["wk"], ca["bk"].reshape(1, D),
      ca["wo"], ca["bo"].reshape(1, D),
      params["ln2_g"].reshape(1, D), params["ln2_b"].reshape(1, D),
      fp["w1"], fp["b1"].reshape(1, dff), fp["w2"], fp["b2"].reshape(1, D))


# ----------------------------- param init -----------------------------

def init_params(key, dim, d_ff, num_heads):
    scale = 1.0 / math.sqrt(dim // num_heads)

    def dense(k, din, dout):
        kw, kb = jax.random.split(k)
        w = jax.random.normal(kw, (din, dout), jnp.float32) * 0.02
        b = jax.random.normal(kb, (dout,), jnp.float32) * 0.02
        return w, b

    keys = jax.random.split(key, 10)

    # self-attention: fuse Wq|Wk|Wv into one (D, 3D) matrix; 1/sqrt(dk) folded into Wq/bq
    # (mathematically identical to scaling the scores).
    wq, bq = dense(keys[0], dim, dim)
    wk, bk = dense(keys[1], dim, dim)
    wv, bv = dense(keys[2], dim, dim)
    wo, bo = dense(keys[3], dim, dim)
    self_attn = dict(
        wqkv=jnp.concatenate([wq * scale, wk, wv], axis=1).astype(MXU_DTYPE),
        bqkv=jnp.concatenate([bq * scale, bk, bv], axis=0),
        wo=wo.astype(MXU_DTYPE), bo=bo)

    # cross-attention: query & value both come from encoder memory -> fuse Wq|Wv (scale folded into Wq)
    wq, bq = dense(keys[4], dim, dim)
    wk, bk = dense(keys[5], dim, dim)
    wv, bv = dense(keys[6], dim, dim)
    wo, bo = dense(keys[7], dim, dim)
    src_attn = dict(
        wqv=jnp.concatenate([wq * scale, wv], axis=1).astype(MXU_DTYPE),
        bqv=jnp.concatenate([bq * scale, bv], axis=0),
        wk=wk.astype(MXU_DTYPE), bk=bk,
        wo=wo.astype(MXU_DTYPE), bo=bo)

    w1, b1 = dense(keys[8], dim, d_ff)
    w2, b2 = dense(keys[9], d_ff, dim)
    ffn = dict(w1=w1.astype(MXU_DTYPE), b1=b1, w2=w2.astype(MXU_DTYPE), b2=b2)

    ones = jnp.ones((dim,), jnp.float32)
    zeros = jnp.zeros((dim,), jnp.float32)
    return dict(self_attn=self_attn, src_attn=src_attn, ffn=ffn,
                ln0_g=ones, ln0_b=zeros, ln1_g=ones, ln1_b=zeros,
                ln2_g=ones, ln2_b=zeros)


# ----------------------------- main -----------------------------

if __name__ == "__main__":
    B, T, S, D, H, DFF = 2, 8, 8, 32, 4, 64   # S == T so the src_attn residual is well-defined

    key = jax.random.PRNGKey(0)
    k_p, k_x, k_m = jax.random.split(key, 3)

    params = init_params(k_p, D, DFF, H)
    x = jax.random.normal(k_x, (B, T, D), jnp.float32)
    encoder_out = jax.random.normal(k_m, (B, S, D), jnp.float32)

    # deterministic masks: True = keep
    tgt_mask_padding = jnp.ones((B, T), dtype=bool).at[1, T - 1].set(False)
    src_mask_padding = jnp.ones((B, S), dtype=bool).at[0, S - 2:].set(False)
    tgt_mask_causal = jnp.tril(jnp.ones((T, T), dtype=bool))

    fwd = jax.jit(functools.partial(decoder_layer_forward, num_heads=H))
    out = fwd(params, x, encoder_out, src_mask_padding, tgt_mask_padding, tgt_mask_causal)
    out = jax.block_until_ready(out)

    assert out.shape == (B, T, D)
    assert bool(jnp.all(jnp.isfinite(out)))
    print("KERNEL_OK")
</pallas_src>

<mosaic_0001>
module attributes {stable_mosaic.version = 11 : i64} {
  func.func @_decoder_layer_kernel(%arg0: i32, %arg1: memref<1x8x32xf32, #tpu.memory_space<vmem>>, %arg2: memref<1x8x32xf32, #tpu.memory_space<vmem>>, %arg3: memref<1x1x8xf32, #tpu.memory_space<vmem>>, %arg4: memref<1x1x8xf32, #tpu.memory_space<vmem>>, %arg5: memref<1x32xf32, #tpu.memory_space<vmem>>, %arg6: memref<1x32xf32, #tpu.memory_space<vmem>>, %arg7: memref<32x96xbf16, #tpu.memory_space<vmem>>, %arg8: memref<1x96xf32, #tpu.memory_space<vmem>>, %arg9: memref<32x32xbf16, #tpu.memory_space<vmem>>, %arg10: memref<1x32xf32, #tpu.memory_space<vmem>>, %arg11: memref<1x32xf32, #tpu.memory_space<vmem>>, %arg12: memref<1x32xf32, #tpu.memory_space<vmem>>, %arg13: memref<32x64xbf16, #tpu.memory_space<vmem>>, %arg14: memref<1x64xf32, #tpu.memory_space<vmem>>, %arg15: memref<32x32xbf16, #tpu.memory_space<vmem>>, %arg16: memref<1x32xf32, #tpu.memory_space<vmem>>, %arg17: memref<32x32xbf16, #tpu.memory_space<vmem>>, %arg18: memref<1x32xf32, #tpu.memory_space<vmem>>, %arg19: memref<1x32xf32, #tpu.memory_space<vmem>>, %arg20: memref<1x32xf32, #tpu.memory_space<vmem>>, %arg21: memref<32x64xbf16, #tpu.memory_space<vmem>>, %arg22: memref<1x64xf32, #tpu.memory_space<vmem>>, %arg23: memref<64x32xbf16, #tpu.memory_space<vmem>>, %arg24: memref<1x32xf32, #tpu.memory_space<vmem>>, %arg25: memref<1x8x32xf32, #tpu.memory_space<vmem>>) attributes {dimension_semantics = [#tpu.dimension_semantics<parallel>], iteration_bounds = array<i64: 2>, scalar_prefetch = 0 : i64, scratch_operands = 0 : i64, tpu.core_type = #tpu.core_type<tc>, window_params = [{transform_indices = @transform_0, window_bounds = array<i64: 1, 8, 32>}, {transform_indices = @transform_1, window_bounds = array<i64: 1, 8, 32>}, {transform_indices = @transform_2, window_bounds = array<i64: 1, 1, 8>}, {transform_indices = @transform_3, window_bounds = array<i64: 1, 1, 8>}, {pipeline_mode = #tpu.pipeline_mode<synchronous>, transform_indices = @transform_4, window_bounds = array<i64: 1, 32>}, {pipeline_mode = #tpu.pipeline_mode<synchronous>, transform_indices = @transform_5, window_bounds = array<i64: 1, 32>}, {pipeline_mode = #tpu.pipeline_mode<synchronous>, transform_indices = @transform_6, window_bounds = array<i64: 32, 96>}, {pipeline_mode = #tpu.pipeline_mode<synchronous>, transform_indices = @transform_7, window_bounds = array<i64: 1, 96>}, {pipeline_mode = #tpu.pipeline_mode<synchronous>, transform_indices = @transform_8, window_bounds = array<i64: 32, 32>}, {pipeline_mode = #tpu.pipeline_mode<synchronous>, transform_indices = @transform_9, window_bounds = array<i64: 1, 32>}, {pipeline_mode = #tpu.pipeline_mode<synchronous>, transform_indices = @transform_10, window_bounds = array<i64: 1, 32>}, {pipeline_mode = #tpu.pipeline_mode<synchronous>, transform_indices = @transform_11, window_bounds = array<i64: 1, 32>}, {pipeline_mode = #tpu.pipeline_mode<synchronous>, transform_indices = @transform_12, window_bounds = array<i64: 32, 64>}, {pipeline_mode = #tpu.pipeline_mode<synchronous>, transform_indices = @transform_13, window_bounds = array<i64: 1, 64>}, {pipeline_mode = #tpu.pipeline_mode<synchronous>, transform_indices = @transform_14, window_bounds = array<i64: 32, 32>}, {pipeline_mode = #tpu.pipeline_mode<synchronous>, transform_indices = @transform_15, window_bounds = array<i64: 1, 32>}, {pipeline_mode = #tpu.pipeline_mode<synchronous>, transform_indices = @transform_16, window_bounds = array<i64: 32, 32>}, {pipeline_mode = #tpu.pipeline_mode<synchronous>, transform_indices = @transform_17, window_bounds = array<i64: 1, 32>}, {pipeline_mode = #tpu.pipeline_mode<synchronous>, transform_indices = @transform_18, window_bounds = array<i64: 1, 32>}, {pipeline_mode = #tpu.pipeline_mode<synchronous>, transform_indices = @transform_19, window_bounds = array<i64: 1, 32>}, {pipeline_mode = #tpu.pipeline_mode<synchronous>, transform_indices = @transform_20, window_bounds = array<i64: 32, 64>}, {pipeline_mode = #tpu.pipeline_mode<synchronous>, transform_indices = @transform_21, window_bounds = array<i64: 1, 64>}, {pipeline_mode = #tpu.pipeline_mode<synchronous>, transform_indices = @transform_22, window_bounds = array<i64: 64, 32>}, {pipeline_mode = #tpu.pipeline_mode<synchronous>, transform_indices = @transform_23, window_bounds = array<i64: 1, 32>}, {transform_indices = @transform_24, window_bounds = array<i64: 1, 8, 32>}]} {
    %c0 = arith.constant 0 : index
    %c0_0 = arith.constant 0 : index
    %c0_1 = arith.constant 0 : index
    %0 = vector.load %arg1[%c0, %c0_0, %c0_1] : memref<1x8x32xf32, #tpu.memory_space<vmem>>, vector<1x8x32xf32>
    %1 = vector.shape_cast %0 : vector<1x8x32xf32> to vector<8x32xf32>
    %c0_2 = arith.constant 0 : index
    %c0_3 = arith.constant 0 : index
    %c0_4 = arith.constant 0 : index
    %2 = vector.load %arg2[%c0_2, %c0_3, %c0_4] : memref<1x8x32xf32, #tpu.memory_space<vmem>>, vector<1x8x32xf32>
    %3 = vector.shape_cast %2 : vector<1x8x32xf32> to vector<8x32xf32>
    %c0_5 = arith.constant 0 : index
    %c0_6 = arith.constant 0 : index
    %4 = vector.load %arg5[%c0_5, %c0_6] : memref<1x32xf32, #tpu.memory_space<vmem>>, vector<1x32xf32>
    %c0_7 = arith.constant 0 : index
    %c0_8 = arith.constant 0 : index
    %5 = vector.load %arg6[%c0_7, %c0_8] : memref<1x32xf32, #tpu.memory_space<vmem>>, vector<1x32xf32>
    %cst = arith.constant dense<0.000000e+00> : vector<8xf32>
    %6 = vector.multi_reduction <add>, %1, %cst [1] : vector<8x32xf32> to vector<8xf32>
    %7 = vector.shape_cast %6 : vector<8xf32> to vector<8x1xf32>
    %cst_9 = arith.constant 3.200000e+01 : f32
    %8 = vector.broadcast %cst_9 : f32 to vector<8x1xf32>
    %9 = arith.divf %7, %8 : vector<8x1xf32>
    %10 = vector.broadcast %9 : vector<8x1xf32> to vector<8x32xf32>
    %11 = arith.subf %1, %10 : vector<8x32xf32>
    %12 = arith.mulf %11, %11 : vector<8x32xf32>
    %cst_10 = arith.constant dense<0.000000e+00> : vector<8xf32>
    %13 = vector.multi_reduction <add>, %12, %cst_10 [1] : vector<8x32xf32> to vector<8xf32>
    %14 = vector.shape_cast %13 : vector<8xf32> to vector<8x1xf32>
    %cst_11 = arith.constant 3.200000e+01 : f32
    %15 = vector.broadcast %cst_11 : f32 to vector<8x1xf32>
    %16 = arith.divf %14, %15 : vector<8x1xf32>
    %17 = vector.broadcast %9 : vector<8x1xf32> to vector<8x32xf32>
    %18 = arith.subf %1, %17 : vector<8x32xf32>
    %cst_12 = arith.constant 9.99999974E-6 : f32
    %19 = vector.broadcast %cst_12 : f32 to vector<8x1xf32>
    %20 = arith.addf %16, %19 : vector<8x1xf32>
    %21 = math.rsqrt %20 : vector<8x1xf32>
    %22 = vector.broadcast %21 : vector<8x1xf32> to vector<8x32xf32>
    %23 = arith.mulf %18, %22 : vector<8x32xf32>
    %24 = vector.broadcast %4 : vector<1x32xf32> to vector<8x32xf32>
    %25 = arith.mulf %23, %24 : vector<8x32xf32>
    %26 = vector.broadcast %5 : vector<1x32xf32> to vector<8x32xf32>
    %27 = arith.addf %25, %26 : vector<8x32xf32>
    %28 = arith.truncf %27 : vector<8x32xf32> to vector<8x32xbf16>
    %c0_13 = arith.constant 0 : index
    %c0_14 = arith.constant 0 : index
    %29 = vector.load %arg7[%c0_13, %c0_14] : memref<32x96xbf16, #tpu.memory_space<vmem>>, vector<32x96xbf16>
    %cst_15 = arith.constant dense<0.000000e+00> : vector<8x96xf32>
    %30 = tpu.matmul %28, %29, %cst_15 {dimension_numbers = #tpu.dot_dimension_numbers<[1], [0], [0], [1], [0, 0, 1, 1], [], []>} : vector<8x32xbf16>, vector<32x96xbf16>, vector<8x96xf32> -> vector<8x96xf32>
    %c0_16 = arith.constant 0 : index
    %c0_17 = arith.constant 0 : index
    %31 = vector.load %arg8[%c0_16, %c0_17] : memref<1x96xf32, #tpu.memory_space<vmem>>, vector<1x96xf32>
    %32 = vector.broadcast %31 : vector<1x96xf32> to vector<8x96xf32>
    %33 = arith.addf %30, %32 : vector<8x96xf32>
    %34 = arith.truncf %33 : vector<8x96xf32> to vector<8x96xbf16>
    %35 = tpu.iota {dimensions = array<i32: 0>} : vector<8x8xi32>
    %36 = tpu.iota {dimensions = array<i32: 1>} : vector<8x8xi32>
    %c0_18 = arith.constant 0 : index
    %c0_19 = arith.constant 0 : index
    %c0_20 = arith.constant 0 : index
    %37 = vector.load %arg3[%c0_18, %c0_19, %c0_20] : memref<1x1x8xf32, #tpu.memory_space<vmem>>, vector<1x1x8xf32>
    %38 = vector.shape_cast %37 : vector<1x1x8xf32> to vector<1x8xf32>
    %cst_21 = arith.constant 5.000000e-01 : f32
    %39 = vector.broadcast %cst_21 : f32 to vector<1x8xf32>
    %40 = arith.cmpf ogt, %38, %39 : vector<1x8xf32>
    %41 = arith.cmpi sge, %35, %36 : vector<8x8xi32>
    %42 = vector.broadcast %40 : vector<1x8xi1> to vector<8x8xi1>
    %43 = arith.andi %42, %41 : vector<8x8xi1>
    %cst_22 = arith.constant 0.000000e+00 : f32
    %cst_23 = arith.constant -1.000000e+09 : f32
    %44 = vector.broadcast %cst_22 : f32 to vector<8x8xf32>
    %45 = vector.broadcast %cst_23 : f32 to vector<8x8xf32>
    %46 = arith.select %43, %44, %45 : vector<8x8xi1>, vector<8x8xf32>
    %47 = vector.extract_strided_slice %34 {offsets = [0, 0], sizes = [8, 8], strides = [1, 1]} : vector<8x96xbf16> to vector<8x8xbf16>
    %48 = vector.extract_strided_slice %34 {offsets = [0, 32], sizes = [8, 8], strides = [1, 1]} : vector<8x96xbf16> to vector<8x8xbf16>
    %cst_24 = arith.constant dense<0.000000e+00> : vector<8x8xf32>
    %49 = tpu.matmul %47, %48, %cst_24 {dimension_numbers = #tpu.dot_dimension_numbers<[1], [1], [0], [0], [0, 0, 1, 0], [], []>} : vector<8x8xbf16>, vector<8x8xbf16>, vector<8x8xf32> -> vector<8x8xf32>
    %50 = arith.addf %49, %46 : vector<8x8xf32>
    %cst_25 = arith.constant dense<0xFF800000> : vector<8xf32>
    %51 = vector.multi_reduction <maximumf>, %50, %cst_25 [1] : vector<8x8xf32> to vector<8xf32>
    %52 = vector.shape_cast %51 : vector<8xf32> to vector<8x1xf32>
    %53 = vector.broadcast %52 : vector<8x1xf32> to vector<8x8xf32>
    %54 = arith.subf %50, %53 : vector<8x8xf32>
    %55 = math.exp %54 : vector<8x8xf32>
    %cst_26 = arith.constant dense<0.000000e+00> : vector<8xf32>
    %56 = vector.multi_reduction <add>, %55, %cst_26 [1] : vector<8x8xf32> to vector<8xf32>
    %57 = vector.shape_cast %56 : vector<8xf32> to vector<8x1xf32>
    %58 = tpu.reciprocal %57 {approx = true} : vector<8x1xf32> -> vector<8x1xf32>
    %59 = vector.broadcast %58 : vector<8x1xf32> to vector<8x8xf32>
    %60 = arith.mulf %55, %59 : vector<8x8xf32>
    %61 = arith.truncf %60 : vector<8x8xf32> to vector<8x8xbf16>
    %62 = vector.extract_strided_slice %34 {offsets = [0, 64], sizes = [8, 8], strides = [1, 1]} : vector<8x96xbf16> to vector<8x8xbf16>
    %cst_27 = arith.constant dense<0.000000e+00> : vector<8x8xf32>
    %63 = tpu.matmul %61, %62, %cst_27 {dimension_numbers = #tpu.dot_dimension_numbers<[1], [0], [0], [1], [0, 0, 1, 1], [], []>} : vector<8x8xbf16>, vector<8x8xbf16>, vector<8x8xf32> -> vector<8x8xf32>
    %64 = vector.extract_strided_slice %34 {offsets = [0, 8], sizes = [8, 8], strides = [1, 1]} : vector<8x96xbf16> to vector<8x8xbf16>
    %65 = vector.extract_strided_slice %34 {offsets = [0, 40], sizes = [8, 8], strides = [1, 1]} : vector<8x96xbf16> to vector<8x8xbf16>
    %cst_28 = arith.constant dense<0.000000e+00> : vector<8x8xf32>
    %66 = tpu.matmul %64, %65, %cst_28 {dimension_numbers = #tpu.dot_dimension_numbers<[1], [1], [0], [0], [0, 0, 1, 0], [], []>} : vector<8x8xbf16>, vector<8x8xbf16>, vector<8x8xf32> -> vector<8x8xf32>
    %67 = arith.addf %66, %46 : vector<8x8xf32>
    %cst_29 = arith.constant dense<0xFF800000> : vector<8xf32>
    %68 = vector.multi_reduction <maximumf>, %67, %cst_29 [1] : vector<8x8xf32> to vector<8xf32>
    %69 = vector.shape_cast %68 : vector<8xf32> to vector<8x1xf32>
    %70 = vector.broadcast %69 : vector<8x1xf32> to vector<8x8xf32>
    %71 = arith.subf %67, %70 : vector<8x8xf32>
    %72 = math.exp %71 : vector<8x8xf32>
    %cst_30 = arith.constant dense<0.000000e+00> : vector<8xf32>
    %73 = vector.multi_reduction <add>, %72, %cst_30 [1] : vector<8x8xf32> to vector<8xf32>
    %74 = vector.shape_cast %73 : vector<8xf32> to vector<8x1xf32>
    %75 = tpu.reciprocal %74 {approx = true} : vector<8x1xf32> -> vector<8x1xf32>
    %76 = vector.broadcast %75 : vector<8x1xf32> to vector<8x8xf32>
    %77 = arith.mulf %72, %76 : vector<8x8xf32>
    %78 = arith.truncf %77 : vector<8x8xf32> to vector<8x8xbf16>
    %79 = vector.extract_strided_slice %34 {offsets = [0, 72], sizes = [8, 8], strides = [1, 1]} : vector<8x96xbf16> to vector<8x8xbf16>
    %cst_31 = arith.constant dense<0.000000e+00> : vector<8x8xf32>
    %80 = tpu.matmul %78, %79, %cst_31 {dimension_numbers = #tpu.dot_dimension_numbers<[1], [0], [0], [1], [0, 0, 1, 1], [], []>} : vector<8x8xbf16>, vector<8x8xbf16>, vector<8x8xf32> -> vector<8x8xf32>
    %81 = vector.extract_strided_slice %34 {offsets = [0, 16], sizes = [8, 8], strides = [1, 1]} : vector<8x96xbf16> to vector<8x8xbf16>
    %82 = vector.extract_strided_slice %34 {offsets = [0, 48], sizes = [8, 8], strides = [1, 1]} : vector<8x96xbf16> to vector<8x8xbf16>
    %cst_32 = arith.constant dense<0.000000e+00> : vector<8x8xf32>
    %83 = tpu.matmul %81, %82, %cst_32 {dimension_numbers = #tpu.dot_dimension_numbers<[1], [1], [0], [0], [0, 0, 1, 0], [], []>} : vector<8x8xbf16>, vector<8x8xbf16>, vector<8x8xf32> -> vector<8x8xf32>
    %84 = arith.addf %83, %46 : vector<8x8xf32>
    %cst_33 = arith.constant dense<0xFF800000> : vector<8xf32>
    %85 = vector.multi_reduction <maximumf>, %84, %cst_33 [1] : vector<8x8xf32> to vector<8xf32>
    %86 = vector.shape_cast %85 : vector<8xf32> to vector<8x1xf32>
    %87 = vector.broadcast %86 : vector<8x1xf32> to vector<8x8xf32>
    %88 = arith.subf %84, %87 : vector<8x8xf32>
    %89 = math.exp %88 : vector<8x8xf32>
    %cst_34 = arith.constant dense<0.000000e+00> : vector<8xf32>
    %90 = vector.multi_reduction <add>, %89, %cst_34 [1] : vector<8x8xf32> to vector<8xf32>
    %91 = vector.shape_cast %90 : vector<8xf32> to vector<8x1xf32>
    %92 = tpu.reciprocal %91 {approx = true} : vector<8x1xf32> -> vector<8x1xf32>
    %93 = vector.broadcast %92 : vector<8x1xf32> to vector<8x8xf32>
    %94 = arith.mulf %89, %93 : vector<8x8xf32>
    %95 = arith.truncf %94 : vector<8x8xf32> to vector<8x8xbf16>
    %96 = vector.extract_strided_slice %34 {offsets = [0, 80], sizes = [8, 8], strides = [1, 1]} : vector<8x96xbf16> to vector<8x8xbf16>
    %cst_35 = arith.constant dense<0.000000e+00> : vector<8x8xf32>
    %97 = tpu.matmul %95, %96, %cst_35 {dimension_numbers = #tpu.dot_dimension_numbers<[1], [0], [0], [1], [0, 0, 1, 1], [], []>} : vector<8x8xbf16>, vector<8x8xbf16>, vector<8x8xf32> -> vector<8x8xf32>
    %98 = vector.extract_strided_slice %34 {offsets = [0, 24], sizes = [8, 8], strides = [1, 1]} : vector<8x96xbf16> to vector<8x8xbf16>
    %99 = vector.extract_strided_slice %34 {offsets = [0, 56], sizes = [8, 8], strides = [1, 1]} : vector<8x96xbf16> to vector<8x8xbf16>
    %cst_36 = arith.constant dense<0.000000e+00> : vector<8x8xf32>
    %100 = tpu.matmul %98, %99, %cst_36 {dimension_numbers = #tpu.dot_dimension_numbers<[1], [1], [0], [0], [0, 0, 1, 0], [], []>} : vector<8x8xbf16>, vector<8x8xbf16>, vector<8x8xf32> -> vector<8x8xf32>
    %101 = arith.addf %100, %46 : vector<8x8xf32>
    %cst_37 = arith.constant dense<0xFF800000> : vector<8xf32>
    %102 = vector.multi_reduction <maximumf>, %101, %cst_37 [1] : vector<8x8xf32> to vector<8xf32>
    %103 = vector.shape_cast %102 : vector<8xf32> to vector<8x1xf32>
    %104 = vector.broadcast %103 : vector<8x1xf32> to vector<8x8xf32>
    %105 = arith.subf %101, %104 : vector<8x8xf32>
    %106 = math.exp %105 : vector<8x8xf32>
    %cst_38 = arith.constant dense<0.000000e+00> : vector<8xf32>
    %107 = vector.multi_reduction <add>, %106, %cst_38 [1] : vector<8x8xf32> to vector<8xf32>
    %108 = vector.shape_cast %107 : vector<8xf32> to vector<8x1xf32>
    %109 = tpu.reciprocal %108 {approx = true} : vector<8x1xf32> -> vector<8x1xf32>
    %110 = vector.broadcast %109 : vector<8x1xf32> to vector<8x8xf32>
    %111 = arith.mulf %106, %110 : vector<8x8xf32>
    %112 = arith.truncf %111 : vector<8x8xf32> to vector<8x8xbf16>
    %113 = vector.extract_strided_slice %34 {offsets = [0, 88], sizes = [8, 8], strides = [1, 1]} : vector<8x96xbf16> to vector<8x8xbf16>
    %cst_39 = arith.constant dense<0.000000e+00> : vector<8x8xf32>
    %114 = tpu.matmul %112, %113, %cst_39 {dimension_numbers = #tpu.dot_dimension_numbers<[1], [0], [0], [1], [0, 0, 1, 1], [], []>} : vector<8x8xbf16>, vector<8x8xbf16>, vector<8x8xf32> -> vector<8x8xf32>
    %115 = tpu.concatenate %63, %80, %97, %114 in 1 : vector<8x8xf32>, vector<8x8xf32>, vector<8x8xf32>, vector<8x8xf32> -> vector<8x32xf32>
    %116 = arith.truncf %115 : vector<8x32xf32> to vector<8x32xbf16>
    %c0_40 = arith.constant 0 : index
    %c0_41 = arith.constant 0 : index
    %117 = vector.load %arg9[%c0_40, %c0_41] : memref<32x32xbf16, #tpu.memory_space<vmem>>, vector<32x32xbf16>
    %cst_42 = arith.constant dense<0.000000e+00> : vector<8x32xf32>
    %118 = tpu.matmul %116, %117, %cst_42 {dimension_numbers = #tpu.dot_dimension_numbers<[1], [0], [0], [1], [0, 0, 1, 1], [], []>} : vector<8x32xbf16>, vector<32x32xbf16>, vector<8x32xf32> -> vector<8x32xf32>
    %c0_43 = arith.constant 0 : index
    %c0_44 = arith.constant 0 : index
    %119 = vector.load %arg10[%c0_43, %c0_44] : memref<1x32xf32, #tpu.memory_space<vmem>>, vector<1x32xf32>
    %120 = vector.broadcast %119 : vector<1x32xf32> to vector<8x32xf32>
    %121 = arith.addf %118, %120 : vector<8x32xf32>
    %122 = arith.addf %1, %121 : vector<8x32xf32>
    %c0_45 = arith.constant 0 : index
    %c0_46 = arith.constant 0 : index
    %123 = vector.load %arg11[%c0_45, %c0_46] : memref<1x32xf32, #tpu.memory_space<vmem>>, vector<1x32xf32>
    %c0_47 = arith.constant 0 : index
    %c0_48 = arith.constant 0 : index
    %124 = vector.load %arg12[%c0_47, %c0_48] : memref<1x32xf32, #tpu.memory_space<vmem>>, vector<1x32xf32>
    %cst_49 = arith.constant dense<0.000000e+00> : vector<8xf32>
    %125 = vector.multi_reduction <add>, %122, %cst_49 [1] : vector<8x32xf32> to vector<8xf32>
    %126 = vector.shape_cast %125 : vector<8xf32> to vector<8x1xf32>
    %cst_50 = arith.constant 3.200000e+01 : f32
    %127 = vector.broadcast %cst_50 : f32 to vector<8x1xf32>
    %128 = arith.divf %126, %127 : vector<8x1xf32>
    %129 = vector.broadcast %128 : vector<8x1xf32> to vector<8x32xf32>
    %130 = arith.subf %122, %129 : vector<8x32xf32>
    %131 = arith.mulf %130, %130 : vector<8x32xf32>
    %cst_51 = arith.constant dense<0.000000e+00> : vector<8xf32>
    %132 = vector.multi_reduction <add>, %131, %cst_51 [1] : vector<8x32xf32> to vector<8xf32>
    %133 = vector.shape_cast %132 : vector<8xf32> to vector<8x1xf32>
    %cst_52 = arith.constant 3.200000e+01 : f32
    %134 = vector.broadcast %cst_52 : f32 to vector<8x1xf32>
    %135 = arith.divf %133, %134 : vector<8x1xf32>
    %136 = vector.broadcast %128 : vector<8x1xf32> to vector<8x32xf32>
    %137 = arith.subf %122, %136 : vector<8x32xf32>
    %cst_53 = arith.constant 9.99999974E-6 : f32
    %138 = vector.broadcast %cst_53 : f32 to vector<8x1xf32>
    %139 = arith.addf %135, %138 : vector<8x1xf32>
    %140 = math.rsqrt %139 : vector<8x1xf32>
    %141 = vector.broadcast %140 : vector<8x1xf32> to vector<8x32xf32>
    %142 = arith.mulf %137, %141 : vector<8x32xf32>
    %143 = vector.broadcast %123 : vector<1x32xf32> to vector<8x32xf32>
    %144 = arith.mulf %142, %143 : vector<8x32xf32>
    %145 = vector.broadcast %124 : vector<1x32xf32> to vector<8x32xf32>
    %146 = arith.addf %144, %145 : vector<8x32xf32>
    %147 = arith.truncf %3 : vector<8x32xf32> to vector<8x32xbf16>
    %c0_54 = arith.constant 0 : index
    %c0_55 = arith.constant 0 : index
    %148 = vector.load %arg13[%c0_54, %c0_55] : memref<32x64xbf16, #tpu.memory_space<vmem>>, vector<32x64xbf16>
    %cst_56 = arith.constant dense<0.000000e+00> : vector<8x64xf32>
    %149 = tpu.matmul %147, %148, %cst_56 {dimension_numbers = #tpu.dot_dimension_numbers<[1], [0], [0], [1], [0, 0, 1, 1], [], []>} : vector<8x32xbf16>, vector<32x64xbf16>, vector<8x64xf32> -> vector<8x64xf32>
    %c0_57 = arith.constant 0 : index
    %c0_58 = arith.constant 0 : index
    %150 = vector.load %arg14[%c0_57, %c0_58] : memref<1x64xf32, #tpu.memory_space<vmem>>, vector<1x64xf32>
    %151 = vector.broadcast %150 : vector<1x64xf32> to vector<8x64xf32>
    %152 = arith.addf %149, %151 : vector<8x64xf32>
    %153 = arith.truncf %152 : vector<8x64xf32> to vector<8x64xbf16>
    %154 = arith.truncf %146 : vector<8x32xf32> to vector<8x32xbf16>
    %c0_59 = arith.constant 0 : index
    %c0_60 = arith.constant 0 : index
    %155 = vector.load %arg15[%c0_59, %c0_60] : memref<32x32xbf16, #tpu.memory_space<vmem>>, vector<32x32xbf16>
    %cst_61 = arith.constant dense<0.000000e+00> : vector<8x32xf32>
    %156 = tpu.matmul %154, %155, %cst_61 {dimension_numbers = #tpu.dot_dimension_numbers<[1], [0], [0], [1], [0, 0, 1, 1], [], []>} : vector<8x32xbf16>, vector<32x32xbf16>, vector<8x32xf32> -> vector<8x32xf32>
    %c0_62 = arith.constant 0 : index
    %c0_63 = arith.constant 0 : index
    %157 = vector.load %arg16[%c0_62, %c0_63] : memref<1x32xf32, #tpu.memory_space<vmem>>, vector<1x32xf32>
    %158 = vector.broadcast %157 : vector<1x32xf32> to vector<8x32xf32>
    %159 = arith.addf %156, %158 : vector<8x32xf32>
    %160 = arith.truncf %159 : vector<8x32xf32> to vector<8x32xbf16>
    %c0_64 = arith.constant 0 : index
    %c0_65 = arith.constant 0 : index
    %c0_66 = arith.constant 0 : index
    %161 = vector.load %arg4[%c0_64, %c0_65, %c0_66] : memref<1x1x8xf32, #tpu.memory_space<vmem>>, vector<1x1x8xf32>
    %162 = vector.shape_cast %161 : vector<1x1x8xf32> to vector<1x8xf32>
    %cst_67 = arith.constant 5.000000e-01 : f32
    %163 = vector.broadcast %cst_67 : f32 to vector<1x8xf32>
    %164 = arith.cmpf ogt, %162, %163 : vector<1x8xf32>
    %cst_68 = arith.constant 0.000000e+00 : f32
    %cst_69 = arith.constant -1.000000e+09 : f32
    %165 = vector.broadcast %cst_68 : f32 to vector<1x8xf32>
    %166 = vector.broadcast %cst_69 : f32 to vector<1x8xf32>
    %167 = arith.select %164, %165, %166 : vector<1x8xi1>, vector<1x8xf32>
    %168 = vector.extract_strided_slice %153 {offsets = [0, 0], sizes = [8, 8], strides = [1, 1]} : vector<8x64xbf16> to vector<8x8xbf16>
    %169 = vector.extract_strided_slice %160 {offsets = [0, 0], sizes = [8, 8], strides = [1, 1]} : vector<8x32xbf16> to vector<8x8xbf16>
    %cst_70 = arith.constant dense<0.000000e+00> : vector<8x8xf32>
    %170 = tpu.matmul %168, %169, %cst_70 {dimension_numbers = #tpu.dot_dimension_numbers<[1], [1], [0], [0], [0, 0, 1, 0], [], []>} : vector<8x8xbf16>, vector<8x8xbf16>, vector<8x8xf32> -> vector<8x8xf32>
    %171 = vector.broadcast %167 : vector<1x8xf32> to vector<8x8xf32>
    %172 = arith.addf %170, %171 : vector<8x8xf32>
    %cst_71 = arith.constant dense<0xFF800000> : vector<8xf32>
    %173 = vector.multi_reduction <maximumf>, %172, %cst_71 [1] : vector<8x8xf32> to vector<8xf32>
    %174 = vector.shape_cast %173 : vector<8xf32> to vector<8x1xf32>
    %175 = vector.broadcast %174 : vector<8x1xf32> to vector<8x8xf32>
    %176 = arith.subf %172, %175 : vector<8x8xf32>
    %177 = math.exp %176 : vector<8x8xf32>
    %cst_72 = arith.constant dense<0.000000e+00> : vector<8xf32>
    %178 = vector.multi_reduction <add>, %177, %cst_72 [1] : vector<8x8xf32> to vector<8xf32>
    %179 = vector.shape_cast %178 : vector<8xf32> to vector<8x1xf32>
    %180 = tpu.reciprocal %179 {approx = true} : vector<8x1xf32> -> vector<8x1xf32>
    %181 = vector.broadcast %180 : vector<8x1xf32> to vector<8x8xf32>
    %182 = arith.mulf %177, %181 : vector<8x8xf32>
    %183 = arith.truncf %182 : vector<8x8xf32> to vector<8x8xbf16>
    %184 = vector.extract_strided_slice %153 {offsets = [0, 32], sizes = [8, 8], strides = [1, 1]} : vector<8x64xbf16> to vector<8x8xbf16>
    %cst_73 = arith.constant dense<0.000000e+00> : vector<8x8xf32>
    %185 = tpu.matmul %183, %184, %cst_73 {dimension_numbers = #tpu.dot_dimension_numbers<[1], [0], [0], [1], [0, 0, 1, 1], [], []>} : vector<8x8xbf16>, vector<8x8xbf16>, vector<8x8xf32> -> vector<8x8xf32>
    %186 = vector.extract_strided_slice %153 {offsets = [0, 8], sizes = [8, 8], strides = [1, 1]} : vector<8x64xbf16> to vector<8x8xbf16>
    %187 = vector.extract_strided_slice %160 {offsets = [0, 8], sizes = [8, 8], strides = [1, 1]} : vector<8x32xbf16> to vector<8x8xbf16>
    %cst_74 = arith.constant dense<0.000000e+00> : vector<8x8xf32>
    %188 = tpu.matmul %186, %187, %cst_74 {dimension_numbers = #tpu.dot_dimension_numbers<[1], [1], [0], [0], [0, 0, 1, 0], [], []>} : vector<8x8xbf16>, vector<8x8xbf16>, vector<8x8xf32> -> vector<8x8xf32>
    %189 = vector.broadcast %167 : vector<1x8xf32> to vector<8x8xf32>
    %190 = arith.addf %188, %189 : vector<8x8xf32>
    %cst_75 = arith.constant dense<0xFF800000> : vector<8xf32>
    %191 = vector.multi_reduction <maximumf>, %190, %cst_75 [1] : vector<8x8xf32> to vector<8xf32>
    %192 = vector.shape_cast %191 : vector<8xf32> to vector<8x1xf32>
    %193 = vector.broadcast %192 : vector<8x1xf32> to vector<8x8xf32>
    %194 = arith.subf %190, %193 : vector<8x8xf32>
    %195 = math.exp %194 : vector<8x8xf32>
    %cst_76 = arith.constant dense<0.000000e+00> : vector<8xf32>
    %196 = vector.multi_reduction <add>, %195, %cst_76 [1] : vector<8x8xf32> to vector<8xf32>
    %197 = vector.shape_cast %196 : vector<8xf32> to vector<8x1xf32>
    %198 = tpu.reciprocal %197 {approx = true} : vector<8x1xf32> -> vector<8x1xf32>
    %199 = vector.broadcast %198 : vector<8x1xf32> to vector<8x8xf32>
    %200 = arith.mulf %195, %199 : vector<8x8xf32>
    %201 = arith.truncf %200 : vector<8x8xf32> to vector<8x8xbf16>
    %202 = vector.extract_strided_slice %153 {offsets = [0, 40], sizes = [8, 8], strides = [1, 1]} : vector<8x64xbf16> to vector<8x8xbf16>
    %cst_77 = arith.constant dense<0.000000e+00> : vector<8x8xf32>
    %203 = tpu.matmul %201, %202, %cst_77 {dimension_numbers = #tpu.dot_dimension_numbers<[1], [0], [0], [1], [0, 0, 1, 1], [], []>} : vector<8x8xbf16>, vector<8x8xbf16>, vector<8x8xf32> -> vector<8x8xf32>
    %204 = vector.extract_strided_slice %153 {offsets = [0, 16], sizes = [8, 8], strides = [1, 1]} : vector<8x64xbf16> to vector<8x8xbf16>
    %205 = vector.extract_strided_slice %160 {offsets = [0, 16], sizes = [8, 8], strides = [1, 1]} : vector<8x32xbf16> to vector<8x8xbf16>
    %cst_78 = arith.constant dense<0.000000e+00> : vector<8x8xf32>
    %206 = tpu.matmul %204, %205, %cst_78 {dimension_numbers = #tpu.dot_dimension_numbers<[1], [1], [0], [0], [0, 0, 1, 0], [], []>} : vector<8x8xbf16>, vector<8x8xbf16>, vector<8x8xf32> -> vector<8x8xf32>
    %207 = vector.broadcast %167 : vector<1x8xf32> to vector<8x8xf32>
    %208 = arith.addf %206, %207 : vector<8x8xf32>
    %cst_79 = arith.constant dense<0xFF800000> : vector<8xf32>
    %209 = vector.multi_reduction <maximumf>, %208, %cst_79 [1] : vector<8x8xf32> to vector<8xf32>
    %210 = vector.shape_cast %209 : vector<8xf32> to vector<8x1xf32>
    %211 = vector.broadcast %210 : vector<8x1xf32> to vector<8x8xf32>
    %212 = arith.subf %208, %211 : vector<8x8xf32>
    %213 = math.exp %212 : vector<8x8xf32>
    %cst_80 = arith.constant dense<0.000000e+00> : vector<8xf32>
    %214 = vector.multi_reduction <add>, %213, %cst_80 [1] : vector<8x8xf32> to vector<8xf32>
    %215 = vector.shape_cast %214 : vector<8xf32> to vector<8x1xf32>
    %216 = tpu.reciprocal %215 {approx = true} : vector<8x1xf32> -> vector<8x1xf32>
    %217 = vector.broadcast %216 : vector<8x1xf32> to vector<8x8xf32>
    %218 = arith.mulf %213, %217 : vector<8x8xf32>
    %219 = arith.truncf %218 : vector<8x8xf32> to vector<8x8xbf16>
    %220 = vector.extract_strided_slice %153 {offsets = [0, 48], sizes = [8, 8], strides = [1, 1]} : vector<8x64xbf16> to vector<8x8xbf16>
    %cst_81 = arith.constant dense<0.000000e+00> : vector<8x8xf32>
    %221 = tpu.matmul %219, %220, %cst_81 {dimension_numbers = #tpu.dot_dimension_numbers<[1], [0], [0], [1], [0, 0, 1, 1], [], []>} : vector<8x8xbf16>, vector<8x8xbf16>, vector<8x8xf32> -> vector<8x8xf32>
    %222 = vector.extract_strided_slice %153 {offsets = [0, 24], sizes = [8, 8], strides = [1, 1]} : vector<8x64xbf16> to vector<8x8xbf16>
    %223 = vector.extract_strided_slice %160 {offsets = [0, 24], sizes = [8, 8], strides = [1, 1]} : vector<8x32xbf16> to vector<8x8xbf16>
    %cst_82 = arith.constant dense<0.000000e+00> : vector<8x8xf32>
    %224 = tpu.matmul %222, %223, %cst_82 {dimension_numbers = #tpu.dot_dimension_numbers<[1], [1], [0], [0], [0, 0, 1, 0], [], []>} : vector<8x8xbf16>, vector<8x8xbf16>, vector<8x8xf32> -> vector<8x8xf32>
    %225 = vector.broadcast %167 : vector<1x8xf32> to vector<8x8xf32>
    %226 = arith.addf %224, %225 : vector<8x8xf32>
    %cst_83 = arith.constant dense<0xFF800000> : vector<8xf32>
    %227 = vector.multi_reduction <maximumf>, %226, %cst_83 [1] : vector<8x8xf32> to vector<8xf32>
    %228 = vector.shape_cast %227 : vector<8xf32> to vector<8x1xf32>
    %229 = vector.broadcast %228 : vector<8x1xf32> to vector<8x8xf32>
    %230 = arith.subf %226, %229 : vector<8x8xf32>
    %231 = math.exp %230 : vector<8x8xf32>
    %cst_84 = arith.constant dense<0.000000e+00> : vector<8xf32>
    %232 = vector.multi_reduction <add>, %231, %cst_84 [1] : vector<8x8xf32> to vector<8xf32>
    %233 = vector.shape_cast %232 : vector<8xf32> to vector<8x1xf32>
    %234 = tpu.reciprocal %233 {approx = true} : vector<8x1xf32> -> vector<8x1xf32>
    %235 = vector.broadcast %234 : vector<8x1xf32> to vector<8x8xf32>
    %236 = arith.mulf %231, %235 : vector<8x8xf32>
    %237 = arith.truncf %236 : vector<8x8xf32> to vector<8x8xbf16>
    %238 = vector.extract_strided_slice %153 {offsets = [0, 56], sizes = [8, 8], strides = [1, 1]} : vector<8x64xbf16> to vector<8x8xbf16>
    %cst_85 = arith.constant dense<0.000000e+00> : vector<8x8xf32>
    %239 = tpu.matmul %237, %238, %cst_85 {dimension_numbers = #tpu.dot_dimension_numbers<[1], [0], [0], [1], [0, 0, 1, 1], [], []>} : vector<8x8xbf16>, vector<8x8xbf16>, vector<8x8xf32> -> vector<8x8xf32>
    %240 = tpu.concatenate %185, %203, %221, %239 in 1 : vector<8x8xf32>, vector<8x8xf32>, vector<8x8xf32>, vector<8x8xf32> -> vector<8x32xf32>
    %241 = arith.truncf %240 : vector<8x32xf32> to vector<8x32xbf16>
    %c0_86 = arith.constant 0 : index
    %c0_87 = arith.constant 0 : index
    %242 = vector.load %arg17[%c0_86, %c0_87] : memref<32x32xbf16, #tpu.memory_space<vmem>>, vector<32x32xbf16>
    %cst_88 = arith.constant dense<0.000000e+00> : vector<8x32xf32>
    %243 = tpu.matmul %241, %242, %cst_88 {dimension_numbers = #tpu.dot_dimension_numbers<[1], [0], [0], [1], [0, 0, 1, 1], [], []>} : vector<8x32xbf16>, vector<32x32xbf16>, vector<8x32xf32> -> vector<8x32xf32>
    %c0_89 = arith.constant 0 : index
    %c0_90 = arith.constant 0 : index
    %244 = vector.load %arg18[%c0_89, %c0_90] : memref<1x32xf32, #tpu.memory_space<vmem>>, vector<1x32xf32>
    %245 = vector.broadcast %244 : vector<1x32xf32> to vector<8x32xf32>
    %246 = arith.addf %243, %245 : vector<8x32xf32>
    %247 = arith.addf %122, %246 : vector<8x32xf32>
    %c0_91 = arith.constant 0 : index
    %c0_92 = arith.constant 0 : index
    %248 = vector.load %arg19[%c0_91, %c0_92] : memref<1x32xf32, #tpu.memory_space<vmem>>, vector<1x32xf32>
    %c0_93 = arith.constant 0 : index
    %c0_94 = arith.constant 0 : index
    %249 = vector.load %arg20[%c0_93, %c0_94] : memref<1x32xf32, #tpu.memory_space<vmem>>, vector<1x32xf32>
    %cst_95 = arith.constant dense<0.000000e+00> : vector<8xf32>
    %250 = vector.multi_reduction <add>, %247, %cst_95 [1] : vector<8x32xf32> to vector<8xf32>
    %251 = vector.shape_cast %250 : vector<8xf32> to vector<8x1xf32>
    %cst_96 = arith.constant 3.200000e+01 : f32
    %252 = vector.broadcast %cst_96 : f32 to vector<8x1xf32>
    %253 = arith.divf %251, %252 : vector<8x1xf32>
    %254 = vector.broadcast %253 : vector<8x1xf32> to vector<8x32xf32>
    %255 = arith.subf %247, %254 : vector<8x32xf32>
    %256 = arith.mulf %255, %255 : vector<8x32xf32>
    %cst_97 = arith.constant dense<0.000000e+00> : vector<8xf32>
    %257 = vector.multi_reduction <add>, %256, %cst_97 [1] : vector<8x32xf32> to vector<8xf32>
    %258 = vector.shape_cast %257 : vector<8xf32> to vector<8x1xf32>
    %cst_98 = arith.constant 3.200000e+01 : f32
    %259 = vector.broadcast %cst_98 : f32 to vector<8x1xf32>
    %260 = arith.divf %258, %259 : vector<8x1xf32>
    %261 = vector.broadcast %253 : vector<8x1xf32> to vector<8x32xf32>
    %262 = arith.subf %247, %261 : vector<8x32xf32>
    %cst_99 = arith.constant 9.99999974E-6 : f32
    %263 = vector.broadcast %cst_99 : f32 to vector<8x1xf32>
    %264 = arith.addf %260, %263 : vector<8x1xf32>
    %265 = math.rsqrt %264 : vector<8x1xf32>
    %266 = vector.broadcast %265 : vector<8x1xf32> to vector<8x32xf32>
    %267 = arith.mulf %262, %266 : vector<8x32xf32>
    %268 = vector.broadcast %248 : vector<1x32xf32> to vector<8x32xf32>
    %269 = arith.mulf %267, %268 : vector<8x32xf32>
    %270 = vector.broadcast %249 : vector<1x32xf32> to vector<8x32xf32>
    %271 = arith.addf %269, %270 : vector<8x32xf32>
    %272 = arith.truncf %271 : vector<8x32xf32> to vector<8x32xbf16>
    %c0_100 = arith.constant 0 : index
    %c0_101 = arith.constant 0 : index
    %273 = vector.load %arg21[%c0_100, %c0_101] : memref<32x64xbf16, #tpu.memory_space<vmem>>, vector<32x64xbf16>
    %cst_102 = arith.constant dense<0.000000e+00> : vector<8x64xf32>
    %274 = tpu.matmul %272, %273, %cst_102 {dimension_numbers = #tpu.dot_dimension_numbers<[1], [0], [0], [1], [0, 0, 1, 1], [], []>} : vector<8x32xbf16>, vector<32x64xbf16>, vector<8x64xf32> -> vector<8x64xf32>
    %c0_103 = arith.constant 0 : index
    %c0_104 = arith.constant 0 : index
    %275 = vector.load %arg22[%c0_103, %c0_104] : memref<1x64xf32, #tpu.memory_space<vmem>>, vector<1x64xf32>
    %276 = vector.broadcast %275 : vector<1x64xf32> to vector<8x64xf32>
    %277 = arith.addf %274, %276 : vector<8x64xf32>
    %cst_105 = arith.constant 0.000000e+00 : f32
    %278 = vector.broadcast %cst_105 : f32 to vector<8x64xf32>
    %279 = arith.maximumf %277, %278 : vector<8x64xf32>
    %280 = arith.truncf %279 : vector<8x64xf32> to vector<8x64xbf16>
    %c0_106 = arith.constant 0 : index
    %c0_107 = arith.constant 0 : index
    %281 = vector.load %arg23[%c0_106, %c0_107] : memref<64x32xbf16, #tpu.memory_space<vmem>>, vector<64x32xbf16>
    %cst_108 = arith.constant dense<0.000000e+00> : vector<8x32xf32>
    %282 = tpu.matmul %280, %281, %cst_108 {dimension_numbers = #tpu.dot_dimension_numbers<[1], [0], [0], [1], [0, 0, 1, 1], [], []>} : vector<8x64xbf16>, vector<64x32xbf16>, vector<8x32xf32> -> vector<8x32xf32>
    %c0_109 = arith.constant 0 : index
    %c0_110 = arith.constant 0 : index
    %283 = vector.load %arg24[%c0_109, %c0_110] : memref<1x32xf32, #tpu.memory_space<vmem>>, vector<1x32xf32>
    %284 = vector.broadcast %283 : vector<1x32xf32> to vector<8x32xf32>
    %285 = arith.addf %282, %284 : vector<8x32xf32>
    %286 = arith.addf %247, %285 : vector<8x32xf32>
    %c0_111 = arith.constant 0 : index
    %c0_112 = arith.constant 0 : index
    %c0_113 = arith.constant 0 : index
    %287 = vector.load %arg25[%c0_111, %c0_112, %c0_113] : memref<1x8x32xf32, #tpu.memory_space<vmem>>, vector<1x8x32xf32>
    %288 = vector.shape_cast %287 : vector<1x8x32xf32> to vector<8x32xf32>
    %289 = vector.shape_cast %286 : vector<8x32xf32> to vector<1x8x32xf32>
    tpu.vector_store %arg25[%c0_111, %c0_112, %c0_113], %289 {strides = array<i32>} : memref<1x8x32xf32, #tpu.memory_space<vmem>>, vector<1x8x32xf32>,
    return
  }
  func.func @transform_0(%arg0: i32) -> (i32, i32, i32) {
    %c0_i32 = arith.constant 0 : i32
    %c0_i32_0 = arith.constant 0 : i32
    %c0_i32_1 = arith.constant 0 : i32
    return %arg0, %c0_i32, %c0_i32_0 : i32, i32, i32
  }
  func.func @transform_1(%arg0: i32) -> (i32, i32, i32) {
    %c0_i32 = arith.constant 0 : i32
    %c0_i32_0 = arith.constant 0 : i32
    %c0_i32_1 = arith.constant 0 : i32
    return %arg0, %c0_i32, %c0_i32_0 : i32, i32, i32
  }
  func.func @transform_2(%arg0: i32) -> (i32, i32, i32) {
    %c0_i32 = arith.constant 0 : i32
    %c0_i32_0 = arith.constant 0 : i32
    %c0_i32_1 = arith.constant 0 : i32
    return %arg0, %c0_i32, %c0_i32_0 : i32, i32, i32
  }
  func.func @transform_3(%arg0: i32) -> (i32, i32, i32) {
    %c0_i32 = arith.constant 0 : i32
    %c0_i32_0 = arith.constant 0 : i32
    %c0_i32_1 = arith.constant 0 : i32
    return %arg0, %c0_i32, %c0_i32_0 : i32, i32, i32
  }
  func.func @transform_4(%arg0: i32) -> (i32, i32) {
    %c0_i32 = arith.constant 0 : i32
    %c0_i32_0 = arith.constant 0 : i32
    %c0_i32_1 = arith.constant 0 : i32
    return %c0_i32, %c0_i32_0 : i32, i32
  }
  func.func @transform_5(%arg0: i32) -> (i32, i32) {
    %c0_i32 = arith.constant 0 : i32
    %c0_i32_0 = arith.constant 0 : i32
    %c0_i32_1 = arith.constant 0 : i32
    return %c0_i32, %c0_i32_0 : i32, i32
  }
  func.func @transform_6(%arg0: i32) -> (i32, i32) {
    %c0_i32 = arith.constant 0 : i32
    %c0_i32_0 = arith.constant 0 : i32
    %c0_i32_1 = arith.constant 0 : i32
    return %c0_i32, %c0_i32_0 : i32, i32
  }
  func.func @transform_7(%arg0: i32) -> (i32, i32) {
    %c0_i32 = arith.constant 0 : i32
    %c0_i32_0 = arith.constant 0 : i32
    %c0_i32_1 = arith.constant 0 : i32
    return %c0_i32, %c0_i32_0 : i32, i32
  }
  func.func @transform_8(%arg0: i32) -> (i32, i32) {
    %c0_i32 = arith.constant 0 : i32
    %c0_i32_0 = arith.constant 0 : i32
    %c0_i32_1 = arith.constant 0 : i32
    return %c0_i32, %c0_i32_0 : i32, i32
  }
  func.func @transform_9(%arg0: i32) -> (i32, i32) {
    %c0_i32 = arith.constant 0 : i32
    %c0_i32_0 = arith.constant 0 : i32
    %c0_i32_1 = arith.constant 0 : i32
    return %c0_i32, %c0_i32_0 : i32, i32
  }
  func.func @transform_10(%arg0: i32) -> (i32, i32) {
    %c0_i32 = arith.constant 0 : i32
    %c0_i32_0 = arith.constant 0 : i32
    %c0_i32_1 = arith.constant 0 : i32
    return %c0_i32, %c0_i32_0 : i32, i32
  }
  func.func @transform_11(%arg0: i32) -> (i32, i32) {
    %c0_i32 = arith.constant 0 : i32
    %c0_i32_0 = arith.constant 0 : i32
    %c0_i32_1 = arith.constant 0 : i32
    return %c0_i32, %c0_i32_0 : i32, i32
  }
  func.func @transform_12(%arg0: i32) -> (i32, i32) {
    %c0_i32 = arith.constant 0 : i32
    %c0_i32_0 = arith.constant 0 : i32
    %c0_i32_1 = arith.constant 0 : i32
    return %c0_i32, %c0_i32_0 : i32, i32
  }
  func.func @transform_13(%arg0: i32) -> (i32, i32) {
    %c0_i32 = arith.constant 0 : i32
    %c0_i32_0 = arith.constant 0 : i32
    %c0_i32_1 = arith.constant 0 : i32
    return %c0_i32, %c0_i32_0 : i32, i32
  }
  func.func @transform_14(%arg0: i32) -> (i32, i32) {
    %c0_i32 = arith.constant 0 : i32
    %c0_i32_0 = arith.constant 0 : i32
    %c0_i32_1 = arith.constant 0 : i32
    return %c0_i32, %c0_i32_0 : i32, i32
  }
  func.func @transform_15(%arg0: i32) -> (i32, i32) {
    %c0_i32 = arith.constant 0 : i32
    %c0_i32_0 = arith.constant 0 : i32
    %c0_i32_1 = arith.constant 0 : i32
    return %c0_i32, %c0_i32_0 : i32, i32
  }
  func.func @transform_16(%arg0: i32) -> (i32, i32) {
    %c0_i32 = arith.constant 0 : i32
    %c0_i32_0 = arith.constant 0 : i32
    %c0_i32_1 = arith.constant 0 : i32
    return %c0_i32, %c0_i32_0 : i32, i32
  }
  func.func @transform_17(%arg0: i32) -> (i32, i32) {
    %c0_i32 = arith.constant 0 : i32
    %c0_i32_0 = arith.constant 0 : i32
    %c0_i32_1 = arith.constant 0 : i32
    return %c0_i32, %c0_i32_0 : i32, i32
  }
  func.func @transform_18(%arg0: i32) -> (i32, i32) {
    %c0_i32 = arith.constant 0 : i32
    %c0_i32_0 = arith.constant 0 : i32
    %c0_i32_1 = arith.constant 0 : i32
    return %c0_i32, %c0_i32_0 : i32, i32
  }
  func.func @transform_19(%arg0: i32) -> (i32, i32) {
    %c0_i32 = arith.constant 0 : i32
    %c0_i32_0 = arith.constant 0 : i32
    %c0_i32_1 = arith.constant 0 : i32
    return %c0_i32, %c0_i32_0 : i32, i32
  }
  func.func @transform_20(%arg0: i32) -> (i32, i32) {
    %c0_i32 = arith.constant 0 : i32
    %c0_i32_0 = arith.constant 0 : i32
    %c0_i32_1 = arith.constant 0 : i32
    return %c0_i32, %c0_i32_0 : i32, i32
  }
  func.func @transform_21(%arg0: i32) -> (i32, i32) {
    %c0_i32 = arith.constant 0 : i32
    %c0_i32_0 = arith.constant 0 : i32
    %c0_i32_1 = arith.constant 0 : i32
    return %c0_i32, %c0_i32_0 : i32, i32
  }
  func.func @transform_22(%arg0: i32) -> (i32, i32) {
    %c0_i32 = arith.constant 0 : i32
    %c0_i32_0 = arith.constant 0 : i32
    %c0_i32_1 = arith.constant 0 : i32
    return %c0_i32, %c0_i32_0 : i32, i32
  }
  func.func @transform_23(%arg0: i32) -> (i32, i32) {
    %c0_i32 = arith.constant 0 : i32
    %c0_i32_0 = arith.constant 0 : i32
    %c0_i32_1 = arith.constant 0 : i32
    return %c0_i32, %c0_i32_0 : i32, i32
  }
  func.func @transform_24(%arg0: i32) -> (i32, i32, i32) {
    %c0_i32 = arith.constant 0 : i32
    %c0_i32_0 = arith.constant 0 : i32
    %c0_i32_1 = arith.constant 0 : i32
    return %arg0, %c0_i32, %c0_i32_0 : i32, i32, i32
  }
}

</mosaic_0001>

<llo_original>
// kernel: decoder_layer_forward.1
$region0: #{decoder_layer_forward.1}
  #allocation0 [shape = 'u32[]', space=smem, size = 0x4, offset = 0x4, fixed_abs, tag = 'smem constant byte address 0x4 - core index']
  #allocation1 [shape = 'u32[144,128]{1,0:T(1,128)}', space=vmem, size = 0x12000, scoped, tag = 'internal scratch']
  %s0 = inlined_call_operand.hbm [shape: f32[2,8,32], index: 0, kind: input, shape index: {}]
  %s1 = inlined_call_operand.hbm [shape: f32[2,8,32], index: 1, kind: input, shape index: {}]
  %s2 = inlined_call_operand.hbm [shape: f32[2,1,8], index: 2, kind: input, shape index: {}]
  %s3 = inlined_call_operand.hbm [shape: f32[2,1,8], index: 3, kind: input, shape index: {}]
  %s4 = inlined_call_operand.hbm [shape: f32[1,32], index: 4, kind: input, shape index: {}]
  %s5 = inlined_call_operand.hbm [shape: f32[1,32], index: 5, kind: input, shape index: {}]
  %s6 = inlined_call_operand.hbm [shape: bf16[32,96], index: 6, kind: input, shape index: {}]
  %s7 = inlined_call_operand.hbm [shape: f32[1,96], index: 7, kind: input, shape index: {}]
  %s8 = inlined_call_operand.hbm [shape: bf16[32,32], index: 8, kind: input, shape index: {}]
  %s9 = inlined_call_operand.hbm [shape: f32[1,32], index: 9, kind: input, shape index: {}]
  %s10 = inlined_call_operand.hbm [shape: f32[1,32], index: 10, kind: input, shape index: {}]
  %s11 = inlined_call_operand.hbm [shape: f32[1,32], index: 11, kind: input, shape index: {}]
  %s12 = inlined_call_operand.hbm [shape: bf16[32,64], index: 12, kind: input, shape index: {}]
  %s13 = inlined_call_operand.hbm [shape: f32[1,64], index: 13, kind: input, shape index: {}]
  %s14 = inlined_call_operand.hbm [shape: bf16[32,32], index: 14, kind: input, shape index: {}]
  %s15 = inlined_call_operand.hbm [shape: f32[1,32], index: 15, kind: input, shape index: {}]
  %s16 = inlined_call_operand.hbm [shape: bf16[32,32], index: 16, kind: input, shape index: {}]
  %s17 = inlined_call_operand.hbm [shape: f32[1,32], index: 17, kind: input, shape index: {}]
  %s18 = inlined_call_operand.hbm [shape: f32[1,32], index: 18, kind: input, shape index: {}]
  %s19 = inlined_call_operand.hbm [shape: f32[1,32], index: 19, kind: input, shape index: {}]
  %s20 = inlined_call_operand.hbm [shape: bf16[32,64], index: 20, kind: input, shape index: {}]
  %s21 = inlined_call_operand.hbm [shape: f32[1,64], index: 21, kind: input, shape index: {}]
  %s22 = inlined_call_operand.hbm [shape: bf16[64,32], index: 22, kind: input, shape index: {}]
  %s23 = inlined_call_operand.hbm [shape: f32[1,32], index: 23, kind: input, shape index: {}]
  %s24 = inlined_call_operand.hbm [shape: f32[2,8,32], index: 24, kind: output, shape index: {}]
  %s25 = sld [smem:[#allocation0]]
  $region225: #{decoder_layer_forward.1} parent=0
    _
  %s27 = ssub.s32 1, %s25
  %s28 = scalar_select 0, %s27, %s25
  $region1: #{decoder_layer_forward.1} parent=0
    #allocation2 [shape = 'u8[8192]{0}', space=vmem, size = 0x2000, scoped, tag = 'input window, operand 0']
    #allocation3 [shape = 's32[2]{0}', space=sflag, size = 0x8, scoped, tag = 'scoped memory for decoder_layer_forward.1']
    #allocation4 [shape = 's32[2]{0}', space=sflag, size = 0x8, scoped, tag = 'scoped memory for decoder_layer_forward.1']
    #allocation5 [shape = 'u8[8192]{0}', space=vmem, size = 0x2000, scoped, tag = 'input window, operand 1']
    #allocation6 [shape = 's32[2]{0}', space=sflag, size = 0x8, scoped, tag = 'scoped memory for decoder_layer_forward.1']
    #allocation7 [shape = 'u8[1024]{0}', space=vmem, size = 0x400, scoped, tag = 'input window, operand 2']
    #allocation8 [shape = 'u8[1024]{0}', space=vmem, size = 0x400, scoped, tag = 'input window, operand 3']
    #allocation9 [shape = 's32[2]{0}', space=sflag, size = 0x8, scoped, tag = 'scoped memory for decoder_layer_forward.1']
    #allocation10 [shape = 'u8[512]{0}', space=vmem, size = 0x400, scoped, tag = 'input window, operand 4, single buffered']
    #allocation11 [shape = 'u8[512]{0}', space=vmem, size = 0x400, scoped, tag = 'input window, operand 5, single buffered']
    #allocation12 [shape = 's32[1]{0}', space=sflag, size = 0x4, scoped, tag = 'scoped memory for decoder_layer_forward.1']
    #allocation13 [shape = 'u8[8192]{0}', space=vmem, size = 0x2000, scoped, tag = 'input window, operand 6, single buffered']
    #allocation14 [shape = 'u8[512]{0}', space=vmem, size = 0x400, scoped, tag = 'input window, operand 7, single buffered']
    #allocation15 [shape = 's32[1]{0}', space=sflag, size = 0x4, scoped, tag = 'scoped memory for decoder_layer_forward.1']
    #allocation16 [shape = 'u8[8192]{0}', space=vmem, size = 0x2000, scoped, tag = 'input window, operand 8, single buffered']
    #allocation17 [shape = 'u8[512]{0}', space=vmem, size = 0x400, scoped, tag = 'input window, operand 9, single buffered']
    #allocation18 [shape = 's32[1]{0}', space=sflag, size = 0x4, scoped, tag = 'scoped memory for decoder_layer_forward.1']
    #allocation19 [shape = 'u8[512]{0}', space=vmem, size = 0x400, scoped, tag = 'input window, operand 10, single buffered']
    #allocation20 [shape = 'u8[512]{0}', space=vmem, size = 0x400, scoped, tag = 'input window, operand 11, single buffered']
    #allocation21 [shape = 's32[1]{0}', space=sflag, size = 0x4, scoped, tag = 'scoped memory for decoder_layer_forward.1']
    #allocation22 [shape = 'u8[8192]{0}', space=vmem, size = 0x2000, scoped, tag = 'input window, operand 12, single buffered']
    #allocation23 [shape = 'u8[512]{0}', space=vmem, size = 0x400, scoped, tag = 'input window, operand 13, single buffered']
    #allocation24 [shape = 's32[1]{0}', space=sflag, size = 0x4, scoped, tag = 'scoped memory for decoder_layer_forward.1']
    #allocation25 [shape = 'u8[8192]{0}', space=vmem, size = 0x2000, scoped, tag = 'input window, operand 14, single buffered']
    #allocation26 [shape = 'u8[512]{0}', space=vmem, size = 0x400, scoped, tag = 'input window, operand 15, single buffered']
    #allocation27 [shape = 's32[1]{0}', space=sflag, size = 0x4, scoped, tag = 'scoped memory for decoder_layer_forward.1']
    #allocation28 [shape = 'u8[8192]{0}', space=vmem, size = 0x2000, scoped, tag = 'input window, operand 16, single buffered']
    #allocation29 [shape = 'u8[512]{0}', space=vmem, size = 0x400, scoped, tag = 'input window, operand 17, single buffered']
    #allocation30 [shape = 's32[1]{0}', space=sflag, size = 0x4, scoped, tag = 'scoped memory for decoder_layer_forward.1']
    #allocation31 [shape = 'u8[512]{0}', space=vmem, size = 0x400, scoped, tag = 'input window, operand 18, single buffered']
    #allocation32 [shape = 'u8[512]{0}', space=vmem, size = 0x400, scoped, tag = 'input window, operand 19, single buffered']
    #allocation33 [shape = 's32[1]{0}', space=sflag, size = 0x4, scoped, tag = 'scoped memory for decoder_layer_forward.1']
    #allocation34 [shape = 'u8[8192]{0}', space=vmem, size = 0x2000, scoped, tag = 'input window, operand 20, single buffered']
    #allocation35 [shape = 'u8[512]{0}', space=vmem, size = 0x400, scoped, tag = 'input window, operand 21, single buffered']
    #allocation36 [shape = 's32[1]{0}', space=sflag, size = 0x4, scoped, tag = 'scoped memory for decoder_layer_forward.1']
    #allocation37 [shape = 'u8[16384]{0}', space=vmem, size = 0x4000, scoped, tag = 'input window, operand 22, single buffered']
    #allocation38 [shape = 'u8[512]{0}', space=vmem, size = 0x400, scoped, tag = 'input window, operand 23, single buffered']
    #allocation39 [shape = 's32[1]{0}', space=sflag, size = 0x4, scoped, tag = 'scoped memory for decoder_layer_forward.1']
    #allocation40 [shape = 'u8[8192]{0}', space=vmem, size = 0x2000, scoped, tag = 'output window, operand 0']
    %29 = vsyncpa [#allocation3], 0
    %s30 = scalar_lea.sflag [#allocation3], 1
    %31 = vsyncpa %s30, 0
    %32 = vsyncpa [#allocation6], 0
    %s33 = scalar_lea.sflag [#allocation6], 1
    %34 = vsyncpa %s33, 0
    %35 = vsyncpa [#allocation9], 0
    %s36 = scalar_lea.sflag [#allocation9], 1
    %37 = vsyncpa %s36, 0
    %38 = vsyncpa [#allocation12], 0
    %39 = vsyncpa [#allocation15], 0
    %40 = vsyncpa [#allocation18], 0
    %41 = vsyncpa [#allocation21], 0
    %42 = vsyncpa [#allocation24], 0
    %43 = vsyncpa [#allocation27], 0
    %44 = vsyncpa [#allocation30], 0
    %45 = vsyncpa [#allocation33], 0
    %46 = vsyncpa [#allocation36], 0
    %47 = vsyncpa [#allocation39], 0
    %48 = vsyncpa [#allocation4], 0
    %s49 = scalar_lea.sflag [#allocation4], 1
    %50 = vsyncpa %s49, 0
    loop: start=0, step=1, limit=4
    $region2: #{decoder_layer_forward.1} parent=1 // loop_pre_header
      _
    $region3: #{decoder_layer_forward.1} parent=1 // loop_header
      %s52 = sphi 0, %s56
      %p53 = scmp.ge.s32.totalorder %s52, 4
      %s62 = sphi 0, %s64
      %s65 = sphi 0, %s62
      %s66 = sphi 0, %s65
      %s82 = sphi 0, %s66
      %s88 = sphi 0, %s90
      %s91 = sphi 0, %s88
      %s92 = sphi 0, %s91
      %s108 = sphi 0, %s92
      %s114 = sphi 0, %s116
      %s117 = sphi 0, %s114
      %s118 = sphi 0, %s117
      %s134 = sphi 0, %s118
      %s140 = sphi 0, %s142
      %s143 = sphi 0, %s140
      %s144 = sphi 0, %s143
      %s160 = sphi 0, %s144
      %s164 = sphi 0, %s164
      %s166 = sphi 0, %s164
      %s167 = sphi 0, %s166
      %s181 = sphi 0, %s167
      %s185 = sphi 0, %s185
      %s187 = sphi 0, %s185
      %s188 = sphi 0, %s187
      %s202 = sphi 0, %s188
      %s206 = sphi 0, %s206
      %s208 = sphi 0, %s206
      %s209 = sphi 0, %s208
      %s223 = sphi 0, %s209
      %s227 = sphi 0, %s227
      %s229 = sphi 0, %s227
      %s230 = sphi 0, %s229
      %s244 = sphi 0, %s230
      %s248 = sphi 0, %s248
      %s250 = sphi 0, %s248
      %s251 = sphi 0, %s250
      %s265 = sphi 0, %s251
      %s269 = sphi 0, %s269
      %s271 = sphi 0, %s269
      %s272 = sphi 0, %s271
      %s286 = sphi 0, %s272
      %s290 = sphi 0, %s290
      %s292 = sphi 0, %s290
      %s293 = sphi 0, %s292
      %s307 = sphi 0, %s293
      %s311 = sphi 0, %s311
      %s313 = sphi 0, %s311
      %s314 = sphi 0, %s313
      %s328 = sphi 0, %s314
      %s332 = sphi 0, %s332
      %s334 = sphi 0, %s332
      %s335 = sphi 0, %s334
      %s349 = sphi 0, %s335
      %s353 = sphi 0, %s353
      %s355 = sphi 0, %s353
      %s356 = sphi 0, %s355
      %s370 = sphi 0, %s356
      %s374 = sphi 0, %s374
      %s376 = sphi 0, %s374
      %s377 = sphi 0, %s376
      %s391 = sphi 0, %s377
      %s395 = sphi 0, %s395
      %s397 = sphi 0, %s395
      %s398 = sphi 0, %s397
      %s412 = sphi 0, %s398
      %s416 = sphi 0, %s416
      %s418 = sphi 0, %s416
      %s419 = sphi 0, %s418
      %s433 = sphi 0, %s419
      %s437 = sphi 0, %s437
      %s439 = sphi 0, %s437
      %s440 = sphi 0, %s439
      %s454 = sphi 0, %s440
      %s458 = sphi 0, %s458
      %s460 = sphi 0, %s458
      %s461 = sphi 0, %s460
      %s475 = sphi 0, %s461
      %s479 = sphi 0, %s479
      %s481 = sphi 0, %s479
      %s482 = sphi 0, %s481
      %s496 = sphi 0, %s482
      %s500 = sphi 0, %s500
      %s502 = sphi 0, %s500
      %s503 = sphi 0, %s502
      %s517 = sphi 0, %s503
      %s521 = sphi 0, %s521
      %s523 = sphi 0, %s521
      %s524 = sphi 0, %s523
      %s538 = sphi 0, %s524
      %s542 = sphi 0, %s542
      %s544 = sphi 0, %s542
      %s545 = sphi 0, %s544
      %s559 = sphi 0, %s545
      %s563 = sphi 0, %s563
      %s565 = sphi 0, %s563
      %s566 = sphi 0, %s565
      %s580 = sphi 0, %s566
      %s586 = sphi 0, %s588
      %s589 = sphi 0, %s586
      %s590 = sphi 0, %s589
      %s606 = sphi 0, %s590
    $region4: #{decoder_layer_forward.1} parent=1 // loop_header_branch
      %55 = sbr.rel (%p53) target = $region8
    $region5: #{decoder_layer_forward.1} parent=1 // loop_body
      %s57 = ssub.s32 %s52, 1
      %s58 = ssub.s32 %s52, 2
      %s59 = sadd.s32 %s52, 1
      %s60 = ssub.s32 %s52, %s59
      %p61 = scmp.eq.s32.totalorder %s60, 0
      %s63 = sadd.s32 %s62, 1
      %s64 = scalar_select %p61, %s62, %s63
      %p67 = pneg %p61
      %p68 = scmp.eq.s32.totalorder %s52, 1
      %p69 = por %p67, %p68
      %p70 = scmp.ne.s32.totalorder %s62, %s65
      %p71 = scmp.eq.s32.totalorder %s52, 0
      %p72 = por %p70, %p71
      %p73 = scmp.ne.s32.totalorder %s62, %s65
      %p74 = scmp.eq.s32.totalorder %s57, 1
      %p75 = por %p73, %p74
      %p76 = scmp.ne.s32.totalorder %s65, %s66
      %p77 = scmp.eq.s32.totalorder %s57, 0
      %p78 = por %p76, %p77
      %p79 = scmp.ne.s32.totalorder %s65, %s66
      %p80 = scmp.eq.s32.totalorder %s58, 1
      %p81 = por %p79, %p80
      %p83 = scmp.ne.s32.totalorder %s66, %s82
      %p84 = scmp.eq.s32.totalorder %s58, 0
      %p85 = por %p83, %p84
      %s86 = ssub.s32 %s52, %s59
      %p87 = scmp.eq.s32.totalorder %s86, 0
      %s89 = sadd.s32 %s88, 1
      %s90 = scalar_select %p87, %s88, %s89
      %p93 = pneg %p87
      %p94 = scmp.eq.s32.totalorder %s52, 1
      %p95 = por %p93, %p94
      %p96 = scmp.ne.s32.totalorder %s88, %s91
      %p97 = scmp.eq.s32.totalorder %s52, 0
      %p98 = por %p96, %p97
      %p99 = scmp.ne.s32.totalorder %s88, %s91
      %p100 = scmp.eq.s32.totalorder %s57, 1
      %p101 = por %p99, %p100
      %p102 = scmp.ne.s32.totalorder %s91, %s92
      %p103 = scmp.eq.s32.totalorder %s57, 0
      %p104 = por %p102, %p103
      %p105 = scmp.ne.s32.totalorder %s91, %s92
      %p106 = scmp.eq.s32.totalorder %s58, 1
      %p107 = por %p105, %p106
      %p109 = scmp.ne.s32.totalorder %s92, %s108
      %p110 = scmp.eq.s32.totalorder %s58, 0
      %p111 = por %p109, %p110
      %s112 = ssub.s32 %s52, %s59
      %p113 = scmp.eq.s32.totalorder %s112, 0
      %s115 = sadd.s32 %s114, 1
      %s116 = scalar_select %p113, %s114, %s115
      %p119 = pneg %p113
      %p120 = scmp.eq.s32.totalorder %s52, 1
      %p121 = por %p119, %p120
      %p122 = scmp.ne.s32.totalorder %s114, %s117
      %p123 = scmp.eq.s32.totalorder %s52, 0
      %p124 = por %p122, %p123
      %p125 = scmp.ne.s32.totalorder %s114, %s117
      %p126 = scmp.eq.s32.totalorder %s57, 1
      %p127 = por %p125, %p126
      %p128 = scmp.ne.s32.totalorder %s117, %s118
      %p129 = scmp.eq.s32.totalorder %s57, 0
      %p130 = por %p128, %p129
      %p131 = scmp.ne.s32.totalorder %s117, %s118
      %p132 = scmp.eq.s32.totalorder %s58, 1
      %p133 = por %p131, %p132
      %p135 = scmp.ne.s32.totalorder %s118, %s134
      %p136 = scmp.eq.s32.totalorder %s58, 0
      %p137 = por %p135, %p136
      %s138 = ssub.s32 %s52, %s59
      %p139 = scmp.eq.s32.totalorder %s138, 0
      %s141 = sadd.s32 %s140, 1
      %s142 = scalar_select %p139, %s140, %s141
      %p145 = pneg %p139
      %p146 = scmp.eq.s32.totalorder %s52, 1
      %p147 = por %p145, %p146
      %p148 = scmp.ne.s32.totalorder %s140, %s143
      %p149 = scmp.eq.s32.totalorder %s52, 0
      %p150 = por %p148, %p149
      %p151 = scmp.ne.s32.totalorder %s140, %s143
      %p152 = scmp.eq.s32.totalorder %s57, 1
      %p153 = por %p151, %p152
      %p154 = scmp.ne.s32.totalorder %s143, %s144
      %p155 = scmp.eq.s32.totalorder %s57, 0
      %p156 = por %p154, %p155
      %p157 = scmp.ne.s32.totalorder %s143, %s144
      %p158 = scmp.eq.s32.totalorder %s58, 1
      %p159 = por %p157, %p158
      %p161 = scmp.ne.s32.totalorder %s144, %s160
      %p162 = scmp.eq.s32.totalorder %s58, 0
      %p163 = por %p161, %p162
      %s165 = sadd.s32 %s164, 1
      %p168 = scmp.eq.s32.totalorder %s52, 1
      %p169 = scmp.ne.s32.totalorder %s164, %s166
      %p170 = scmp.eq.s32.totalorder %s52, 0
      %p171 = por %p169, %p170
      %p172 = scmp.ne.s32.totalorder %s164, %s166
      %p173 = scmp.eq.s32.totalorder %s57, 1
      %p174 = por %p172, %p173
      %p175 = scmp.ne.s32.totalorder %s166, %s167
      %p176 = scmp.eq.s32.totalorder %s57, 0
      %p177 = por %p175, %p176
      %p178 = scmp.ne.s32.totalorder %s166, %s167
      %p179 = scmp.eq.s32.totalorder %s58, 1
      %p180 = por %p178, %p179
      %p182 = scmp.ne.s32.totalorder %s167, %s181
      %p183 = scmp.eq.s32.totalorder %s58, 0
      %p184 = por %p182, %p183
      %s186 = sadd.s32 %s185, 1
      %p189 = scmp.eq.s32.totalorder %s52, 1
      %p190 = scmp.ne.s32.totalorder %s185, %s187
      %p191 = scmp.eq.s32.totalorder %s52, 0
      %p192 = por %p190, %p191
      %p193 = scmp.ne.s32.totalorder %s185, %s187
      %p194 = scmp.eq.s32.totalorder %s57, 1
      %p195 = por %p193, %p194
      %p196 = scmp.ne.s32.totalorder %s187, %s188
      %p197 = scmp.eq.s32.totalorder %s57, 0
      %p198 = por %p196, %p197
      %p199 = scmp.ne.s32.totalorder %s187, %s188
      %p200 = scmp.eq.s32.totalorder %s58, 1
      %p201 = por %p199, %p200
      %p203 = scmp.ne.s32.totalorder %s188, %s202
      %p204 = scmp.eq.s32.totalorder %s58, 0
      %p205 = por %p203, %p204
      %s207 = sadd.s32 %s206, 1
      %p210 = scmp.eq.s32.totalorder %s52, 1
      %p211 = scmp.ne.s32.totalorder %s206, %s208
      %p212 = scmp.eq.s32.totalorder %s52, 0
      %p213 = por %p211, %p212
      %p214 = scmp.ne.s32.totalorder %s206, %s208
      %p215 = scmp.eq.s32.totalorder %s57, 1
      %p216 = por %p214, %p215
      %p217 = scmp.ne.s32.totalorder %s208, %s209
      %p218 = scmp.eq.s32.totalorder %s57, 0
      %p219 = por %p217, %p218
      %p220 = scmp.ne.s32.totalorder %s208, %s209
      %p221 = scmp.eq.s32.totalorder %s58, 1
      %p222 = por %p220, %p221
      %p224 = scmp.ne.s32.totalorder %s209, %s223
      %p225 = scmp.eq.s32.totalorder %s58, 0
      %p226 = por %p224, %p225
      %s228 = sadd.s32 %s227, 1
      %p231 = scmp.eq.s32.totalorder %s52, 1
      %p232 = scmp.ne.s32.totalorder %s227, %s229
      %p233 = scmp.eq.s32.totalorder %s52, 0
      %p234 = por %p232, %p233
      %p235 = scmp.ne.s32.totalorder %s227, %s229
      %p236 = scmp.eq.s32.totalorder %s57, 1
      %p237 = por %p235, %p236
      %p238 = scmp.ne.s32.totalorder %s229, %s230
      %p239 = scmp.eq.s32.totalorder %s57, 0
      %p240 = por %p238, %p239
      %p241 = scmp.ne.s32.totalorder %s229, %s230
      %p242 = scmp.eq.s32.totalorder %s58, 1
      %p243 = por %p241, %p242
      %p245 = scmp.ne.s32.totalorder %s230, %s244
      %p246 = scmp.eq.s32.totalorder %s58, 0
      %p247 = por %p245, %p246
      %s249 = sadd.s32 %s248, 1
      %p252 = scmp.eq.s32.totalorder %s52, 1
      %p253 = scmp.ne.s32.totalorder %s248, %s250
      %p254 = scmp.eq.s32.totalorder %s52, 0
      %p255 = por %p253, %p254
      %p256 = scmp.ne.s32.totalorder %s248, %s250
      %p257 = scmp.eq.s32.totalorder %s57, 1
      %p258 = por %p256, %p257
      %p259 = scmp.ne.s32.totalorder %s250, %s251
      %p260 = scmp.eq.s32.totalorder %s57, 0
      %p261 = por %p259, %p260
      %p262 = scmp.ne.s32.totalorder %s250, %s251
      %p263 = scmp.eq.s32.totalorder %s58, 1
      %p264 = por %p262, %p263
      %p266 = scmp.ne.s32.totalorder %s251, %s265
      %p267 = scmp.eq.s32.totalorder %s58, 0
      %p268 = por %p266, %p267
      %s270 = sadd.s32 %s269, 1
      %p273 = scmp.eq.s32.totalorder %s52, 1
      %p274 = scmp.ne.s32.totalorder %s269, %s271
      %p275 = scmp.eq.s32.totalorder %s52, 0
      %p276 = por %p274, %p275
      %p277 = scmp.ne.s32.totalorder %s269, %s271
      %p278 = scmp.eq.s32.totalorder %s57, 1
      %p279 = por %p277, %p278
      %p280 = scmp.ne.s32.totalorder %s271, %s272
      %p281 = scmp.eq.s32.totalorder %s57, 0
      %p282 = por %p280, %p281
      %p283 = scmp.ne.s32.totalorder %s271, %s272
      %p284 = scmp.eq.s32.totalorder %s58, 1
      %p285 = por %p283, %p284
      %p287 = scmp.ne.s32.totalorder %s272, %s286
      %p288 = scmp.eq.s32.totalorder %s58, 0
      %p289 = por %p287, %p288
      %s291 = sadd.s32 %s290, 1
      %p294 = scmp.eq.s32.totalorder %s52, 1
      %p295 = scmp.ne.s32.totalorder %s290, %s292
      %p296 = scmp.eq.s32.totalorder %s52, 0
      %p297 = por %p295, %p296
      %p298 = scmp.ne.s32.totalorder %s290, %s292
      %p299 = scmp.eq.s32.totalorder %s57, 1
      %p300 = por %p298, %p299
      %p301 = scmp.ne.s32.totalorder %s292, %s293
      %p302 = scmp.eq.s32.totalorder %s57, 0
      %p303 = por %p301, %p302
      %p304 = scmp.ne.s32.totalorder %s292, %s293
      %p305 = scmp.eq.s32.totalorder %s58, 1
      %p306 = por %p304, %p305
      %p308 = scmp.ne.s32.totalorder %s293, %s307
      %p309 = scmp.eq.s32.totalorder %s58, 0
      %p310 = por %p308, %p309
      %s312 = sadd.s32 %s311, 1
      %p315 = scmp.eq.s32.totalorder %s52, 1
      %p316 = scmp.ne.s32.totalorder %s311, %s313
      %p317 = scmp.eq.s32.totalorder %s52, 0
      %p318 = por %p316, %p317
      %p319 = scmp.ne.s32.totalorder %s311, %s313
      %p320 = scmp.eq.s32.totalorder %s57, 1
      %p321 = por %p319, %p320
      %p322 = scmp.ne.s32.totalorder %s313, %s314
      %p323 = scmp.eq.s32.totalorder %s57, 0
      %p324 = por %p322, %p323
      %p325 = scmp.ne.s32.totalorder %s313, %s314
      %p326 = scmp.eq.s32.totalorder %s58, 1
      %p327 = por %p325, %p326
      %p329 = scmp.ne.s32.totalorder %s314, %s328
      %p330 = scmp.eq.s32.totalorder %s58, 0
      %p331 = por %p329, %p330
      %s333 = sadd.s32 %s332, 1
      %p336 = scmp.eq.s32.totalorder %s52, 1
      %p337 = scmp.ne.s32.totalorder %s332, %s334
      %p338 = scmp.eq.s32.totalorder %s52, 0
      %p339 = por %p337, %p338
      %p340 = scmp.ne.s32.totalorder %s332, %s334
      %p341 = scmp.eq.s32.totalorder %s57, 1
      %p342 = por %p340, %p341
      %p343 = scmp.ne.s32.totalorder %s334, %s335
      %p344 = scmp.eq.s32.totalorder %s57, 0
      %p345 = por %p343, %p344
      %p346 = scmp.ne.s32.totalorder %s334, %s335
      %p347 = scmp.eq.s32.totalorder %s58, 1
      %p348 = por %p346, %p347
      %p350 = scmp.ne.s32.totalorder %s335, %s349
      %p351 = scmp.eq.s32.totalorder %s58, 0
      %p352 = por %p350, %p351
      %s354 = sadd.s32 %s353, 1
      %p357 = scmp.eq.s32.totalorder %s52, 1
      %p358 = scmp.ne.s32.totalorder %s353, %s355
      %p359 = scmp.eq.s32.totalorder %s52, 0
      %p360 = por %p358, %p359
      %p361 = scmp.ne.s32.totalorder %s353, %s355
      %p362 = scmp.eq.s32.totalorder %s57, 1
      %p363 = por %p361, %p362
      %p364 = scmp.ne.s32.totalorder %s355, %s356
      %p365 = scmp.eq.s32.totalorder %s57, 0
      %p366 = por %p364, %p365
      %p367 = scmp.ne.s32.totalorder %s355, %s356
      %p368 = scmp.eq.s32.totalorder %s58, 1
      %p369 = por %p367, %p368
      %p371 = scmp.ne.s32.totalorder %s356, %s370
      %p372 = scmp.eq.s32.totalorder %s58, 0
      %p373 = por %p371, %p372
      %s375 = sadd.s32 %s374, 1
      %p378 = scmp.eq.s32.totalorder %s52, 1
      %p379 = scmp.ne.s32.totalorder %s374, %s376
      %p380 = scmp.eq.s32.totalorder %s52, 0
      %p381 = por %p379, %p380
      %p382 = scmp.ne.s32.totalorder %s374, %s376
      %p383 = scmp.eq.s32.totalorder %s57, 1
      %p384 = por %p382, %p383
      %p385 = scmp.ne.s32.totalorder %s376, %s377
      %p386 = scmp.eq.s32.totalorder %s57, 0
      %p387 = por %p385, %p386
      %p388 = scmp.ne.s32.totalorder %s376, %s377
      %p389 = scmp.eq.s32.totalorder %s58, 1
      %p390 = por %p388, %p389
      %p392 = scmp.ne.s32.totalorder %s377, %s391
      %p393 = scmp.eq.s32.totalorder %s58, 0
      %p394 = por %p392, %p393
      %s396 = sadd.s32 %s395, 1
      %p399 = scmp.eq.s32.totalorder %s52, 1
      %p400 = scmp.ne.s32.totalorder %s395, %s397
      %p401 = scmp.eq.s32.totalorder %s52, 0
      %p402 = por %p400, %p401
      %p403 = scmp.ne.s32.totalorder %s395, %s397
      %p404 = scmp.eq.s32.totalorder %s57, 1
      %p405 = por %p403, %p404
      %p406 = scmp.ne.s32.totalorder %s397, %s398
      %p407 = scmp.eq.s32.totalorder %s57, 0
      %p408 = por %p406, %p407
      %p409 = scmp.ne.s32.totalorder %s397, %s398
      %p410 = scmp.eq.s32.totalorder %s58, 1
      %p411 = por %p409, %p410
      %p413 = scmp.ne.s32.totalorder %s398, %s412
      %p414 = scmp.eq.s32.totalorder %s58, 0
      %p415 = por %p413, %p414
      %s417 = sadd.s32 %s416, 1
      %p420 = scmp.eq.s32.totalorder %s52, 1
      %p421 = scmp.ne.s32.totalorder %s416, %s418
      %p422 = scmp.eq.s32.totalorder %s52, 0
      %p423 = por %p421, %p422
      %p424 = scmp.ne.s32.totalorder %s416, %s418
      %p425 = scmp.eq.s32.totalorder %s57, 1
      %p426 = por %p424, %p425
      %p427 = scmp.ne.s32.totalorder %s418, %s419
      %p428 = scmp.eq.s32.totalorder %s57, 0
      %p429 = por %p427, %p428
      %p430 = scmp.ne.s32.totalorder %s418, %s419
      %p431 = scmp.eq.s32.totalorder %s58, 1
      %p432 = por %p430, %p431
      %p434 = scmp.ne.s32.totalorder %s419, %s433
      %p435 = scmp.eq.s32.totalorder %s58, 0
      %p436 = por %p434, %p435
      %s438 = sadd.s32 %s437, 1
      %p441 = scmp.eq.s32.totalorder %s52, 1
      %p442 = scmp.ne.s32.totalorder %s437, %s439
      %p443 = scmp.eq.s32.totalorder %s52, 0
      %p444 = por %p442, %p443
      %p445 = scmp.ne.s32.totalorder %s437, %s439
      %p446 = scmp.eq.s32.totalorder %s57, 1
      %p447 = por %p445, %p446
      %p448 = scmp.ne.s32.totalorder %s439, %s440
      %p449 = scmp.eq.s32.totalorder %s57, 0
      %p450 = por %p448, %p449
      %p451 = scmp.ne.s32.totalorder %s439, %s440
      %p452 = scmp.eq.s32.totalorder %s58, 1
      %p453 = por %p451, %p452
      %p455 = scmp.ne.s32.totalorder %s440, %s454
      %p456 = scmp.eq.s32.totalorder %s58, 0
      %p457 = por %p455, %p456
      %s459 = sadd.s32 %s458, 1
      %p462 = scmp.eq.s32.totalorder %s52, 1
      %p463 = scmp.ne.s32.totalorder %s458, %s460
      %p464 = scmp.eq.s32.totalorder %s52, 0
      %p465 = por %p463, %p464
      %p466 = scmp.ne.s32.totalorder %s458, %s460
      %p467 = scmp.eq.s32.totalorder %s57, 1
      %p468 = por %p466, %p467
      %p469 = scmp.ne.s32.totalorder %s460, %s461
      %p470 = scmp.eq.s32.totalorder %s57, 0
      %p471 = por %p469, %p470
      %p472 = scmp.ne.s32.totalorder %s460, %s461
      %p473 = scmp.eq.s32.totalorder %s58, 1
      %p474 = por %p472, %p473
      %p476 = scmp.ne.s32.totalorder %s461, %s475
      %p477 = scmp.eq.s32.totalorder %s58, 0
      %p478 = por %p476, %p477
      %s480 = sadd.s32 %s479, 1
      %p483 = scmp.eq.s32.totalorder %s52, 1
      %p484 = scmp.ne.s32.totalorder %s479, %s481
      %p485 = scmp.eq.s32.totalorder %s52, 0
      %p486 = por %p484, %p485
      %p487 = scmp.ne.s32.totalorder %s479, %s481
      %p488 = scmp.eq.s32.totalorder %s57, 1
      %p489 = por %p487, %p488
      %p490 = scmp.ne.s32.totalorder %s481, %s482
      %p491 = scmp.eq.s32.totalorder %s57, 0
      %p492 = por %p490, %p491
      %p493 = scmp.ne.s32.totalorder %s481, %s482
      %p494 = scmp.eq.s32.totalorder %s58, 1
      %p495 = por %p493, %p494
      %p497 = scmp.ne.s32.totalorder %s482, %s496
      %p498 = scmp.eq.s32.totalorder %s58, 0
      %p499 = por %p497, %p498
      %s501 = sadd.s32 %s500, 1
      %p504 = scmp.eq.s32.totalorder %s52, 1
      %p505 = scmp.ne.s32.totalorder %s500, %s502
      %p506 = scmp.eq.s32.totalorder %s52, 0
      %p507 = por %p505, %p506
      %p508 = scmp.ne.s32.totalorder %s500, %s502
      %p509 = scmp.eq.s32.totalorder %s57, 1
      %p510 = por %p508, %p509
      %p511 = scmp.ne.s32.totalorder %s502, %s503
      %p512 = scmp.eq.s32.totalorder %s57, 0
      %p513 = por %p511, %p512
      %p514 = scmp.ne.s32.totalorder %s502, %s503
      %p515 = scmp.eq.s32.totalorder %s58, 1
      %p516 = por %p514, %p515
      %p518 = scmp.ne.s32.totalorder %s503, %s517
      %p519 = scmp.eq.s32.totalorder %s58, 0
      %p520 = por %p518, %p519
      %s522 = sadd.s32 %s521, 1
      %p525 = scmp.eq.s32.totalorder %s52, 1
      %p526 = scmp.ne.s32.totalorder %s521, %s523
      %p527 = scmp.eq.s32.totalorder %s52, 0
      %p528 = por %p526, %p527
      %p529 = scmp.ne.s32.totalorder %s521, %s523
      %p530 = scmp.eq.s32.totalorder %s57, 1
      %p531 = por %p529, %p530
      %p532 = scmp.ne.s32.totalorder %s523, %s524
      %p533 = scmp.eq.s32.totalorder %s57, 0
      %p534 = por %p532, %p533
      %p535 = scmp.ne.s32.totalorder %s523, %s524
      %p536 = scmp.eq.s32.totalorder %s58, 1
      %p537 = por %p535, %p536
      %p539 = scmp.ne.s32.totalorder %s524, %s538
      %p540 = scmp.eq.s32.totalorder %s58, 0
      %p541 = por %p539, %p540
      %s543 = sadd.s32 %s542, 1
      %p546 = scmp.eq.s32.totalorder %s52, 1
      %p547 = scmp.ne.s32.totalorder %s542, %s544
      %p548 = scmp.eq.s32.totalorder %s52, 0
      %p549 = por %p547, %p548
      %p550 = scmp.ne.s32.totalorder %s542, %s544
      %p551 = scmp.eq.s32.totalorder %s57, 1
      %p552 = por %p550, %p551
      %p553 = scmp.ne.s32.totalorder %s544, %s545
      %p554 = scmp.eq.s32.totalorder %s57, 0
      %p555 = por %p553, %p554
      %p556 = scmp.ne.s32.totalorder %s544, %s545
      %p557 = scmp.eq.s32.totalorder %s58, 1
      %p558 = por %p556, %p557
      %p560 = scmp.ne.s32.totalorder %s545, %s559
      %p561 = scmp.eq.s32.totalorder %s58, 0
      %p562 = por %p560, %p561
      %s564 = sadd.s32 %s563, 1
      %p567 = scmp.eq.s32.totalorder %s52, 1
      %p568 = scmp.ne.s32.totalorder %s563, %s565
      %p569 = scmp.eq.s32.totalorder %s52, 0
      %p570 = por %p568, %p569
      %p571 = scmp.ne.s32.totalorder %s563, %s565
      %p572 = scmp.eq.s32.totalorder %s57, 1
      %p573 = por %p571, %p572
      %p574 = scmp.ne.s32.totalorder %s565, %s566
      %p575 = scmp.eq.s32.totalorder %s57, 0
      %p576 = por %p574, %p575
      %p577 = scmp.ne.s32.totalorder %s565, %s566
      %p578 = scmp.eq.s32.totalorder %s58, 1
      %p579 = por %p577, %p578
      %p581 = scmp.ne.s32.totalorder %s566, %s580
      %p582 = scmp.eq.s32.totalorder %s58, 0
      %p583 = por %p581, %p582
      %s584 = ssub.s32 %s52, %s59
      %p585 = scmp.eq.s32.totalorder %s584, 0
      %s587 = sadd.s32 %s586, 1
      %s588 = scalar_select %p585, %s586, %s587
      %p591 = pneg %p585
      %p592 = scmp.eq.s32.totalorder %s52, 1
      %p593 = por %p591, %p592
      %p594 = scmp.ne.s32.totalorder %s586, %s589
      %p595 = scmp.eq.s32.totalorder %s52, 0
      %p596 = por %p594, %p595
      %p597 = scmp.ne.s32.totalorder %s586, %s589
      %p598 = scmp.eq.s32.totalorder %s57, 1
      %p599 = por %p597, %p598
      %p600 = scmp.ne.s32.totalorder %s589, %s590
      %p601 = scmp.eq.s32.totalorder %s57, 0
      %p602 = por %p600, %p601
      %p603 = scmp.ne.s32.totalorder %s589, %s590
      %p604 = scmp.eq.s32.totalorder %s58, 1
      %p605 = por %p603, %p604
      %p607 = scmp.ne.s32.totalorder %s590, %s606
      %p608 = scmp.eq.s32.totalorder %s58, 0
      %p609 = por %p607, %p608
      %p610 = scmp.le.s32.totalorder 1, %s52
      %p611 = scmp.lt.s32.totalorder %s52, 3
      %p612 = pnand %p610, %p611
      %p613 = pneg %p612
      // Predicated region
      $region9: #{decoder_layer_forward.1} parent=5 // pred_check
        _
      $region10: #{decoder_layer_forward.1} parent=5 // pred_check_branch
        %615 = sbr.rel (%p612) target = $region12
      $region11: #{decoder_layer_forward.1} parent=5 // pred_region
        %s616 = ssub.s32 %s52, 1
        // Predicated region
        $region13: #{decoder_layer_forward.1} parent=11 // pred_check
          %p617 = pneg %p177
        $region14: #{decoder_layer_forward.1} parent=11 // pred_check_branch
          %619 = sbr.rel (%p617) target = $region16
        $region15: #{decoder_layer_forward.1} parent=11 // pred_region
          %s621 = ssub.s32 16, 16
          %622 = vsyncadd [#allocation9], %s621
          %s624 = sshll.u32 [#allocation10], 4
          %s625 = int_to_ptr.vmem [resolvable:$true] %s624
          %627 = dma.hbm_to_vmem [thread:$0]  %s4, 16, %s625, [#allocation9]
        $region16: #{decoder_layer_forward.1} parent=11 // pred_fallthru
          _
        // Predicated region
        $region17: #{decoder_layer_forward.1} parent=11 // pred_check
          %p628 = pneg %p198
        $region18: #{decoder_layer_forward.1} parent=11 // pred_check_branch
          %630 = sbr.rel (%p628) target = $region20
        $region19: #{decoder_layer_forward.1} parent=11 // pred_region
          %s632 = ssub.s32 16, 16
          %633 = vsyncadd [#allocation12], %s632
          %s635 = sshll.u32 [#allocation11], 4
          %s636 = int_to_ptr.vmem [resolvable:$true] %s635
          %638 = dma.hbm_to_vmem [thread:$0]  %s5, 16, %s636, [#allocation12]
        $region20: #{decoder_layer_forward.1} parent=11 // pred_fallthru
          _
        // Predicated region
        $region21: #{decoder_layer_forward.1} parent=11 // pred_check
          %p639 = pneg %p219
        $region22: #{decoder_layer_forward.1} parent=11 // pred_check_branch
          %641 = sbr.rel (%p639) target = $region24
        $region23: #{decoder_layer_forward.1} parent=11 // pred_region
          %s643 = ssub.s32 256, 256
          %644 = vsyncadd [#allocation12], %s643
          %s645 = sshll.u32 [#allocation13], 4
          %s646 = int_to_ptr.vmem [resolvable:$true] %s645
          %651 = dma.hbm_to_vmem [thread:$0]  %s6, 256, %s646, [#allocation12], 64, 64, 4
        $region24: #{decoder_layer_forward.1} parent=11 // pred_fallthru
          _
        // Predicated region
        $region25: #{decoder_layer_forward.1} parent=11 // pred_check
          %p652 = pneg %p240
        $region26: #{decoder_layer_forward.1} parent=11 // pred_check_branch
          %654 = sbr.rel (%p652) target = $region28
        $region27: #{decoder_layer_forward.1} parent=11 // pred_region
          %s656 = ssub.s32 16, 16
          %657 = vsyncadd [#allocation15], %s656
          %s659 = sshll.u32 [#allocation14], 4
          %s660 = int_to_ptr.vmem [resolvable:$true] %s659
          %662 = dma.hbm_to_vmem [thread:$0]  %s7, 16, %s660, [#allocation15]
        $region28: #{decoder_layer_forward.1} parent=11 // pred_fallthru
          _
        // Predicated region
        $region29: #{decoder_layer_forward.1} parent=11 // pred_check
          %p663 = pneg %p261
        $region30: #{decoder_layer_forward.1} parent=11 // pred_check_branch
          %665 = sbr.rel (%p663) target = $region32
        $region31: #{decoder_layer_forward.1} parent=11 // pred_region
          %s667 = ssub.s32 256, 256
          %668 = vsyncadd [#allocation15], %s667
          %s669 = sshll.u32 [#allocation16], 4
          %s670 = int_to_ptr.vmem [resolvable:$true] %s669
          %675 = dma.hbm_to_vmem [thread:$0]  %s8, 256, %s670, [#allocation15], 64, 64, 4
        $region32: #{decoder_layer_forward.1} parent=11 // pred_fallthru
          _
        // Predicated region
        $region33: #{decoder_layer_forward.1} parent=11 // pred_check
          %p676 = pneg %p282
        $region34: #{decoder_layer_forward.1} parent=11 // pred_check_branch
          %678 = sbr.rel (%p676) target = $region36
        $region35: #{decoder_layer_forward.1} parent=11 // pred_region
          %s680 = ssub.s32 16, 16
          %681 = vsyncadd [#allocation18], %s680
          %s683 = sshll.u32 [#allocation17], 4
          %s684 = int_to_ptr.vmem [resolvable:$true] %s683
          %686 = dma.hbm_to_vmem [thread:$0]  %s9, 16, %s684, [#allocation18]
        $region36: #{decoder_layer_forward.1} parent=11 // pred_fallthru
          _
        // Predicated region
        $region37: #{decoder_layer_forward.1} parent=11 // pred_check
          %p687 = pneg %p303
        $region38: #{decoder_layer_forward.1} parent=11 // pred_check_branch
          %689 = sbr.rel (%p687) target = $region40
        $region39: #{decoder_layer_forward.1} parent=11 // pred_region
          %s691 = ssub.s32 16, 16
          %692 = vsyncadd [#allocation18], %s691
          %s694 = sshll.u32 [#allocation19], 4
          %s695 = int_to_ptr.vmem [resolvable:$true] %s694
          %697 = dma.hbm_to_vmem [thread:$0]  %s10, 16, %s695, [#allocation18]
        $region40: #{decoder_layer_forward.1} parent=11 // pred_fallthru
          _
        // Predicated region
        $region41: #{decoder_layer_forward.1} parent=11 // pred_check
          %p698 = pneg %p324
        $region42: #{decoder_layer_forward.1} parent=11 // pred_check_branch
          %700 = sbr.rel (%p698) target = $region44
        $region43: #{decoder_layer_forward.1} parent=11 // pred_region
          %s702 = ssub.s32 16, 16
          %703 = vsyncadd [#allocation21], %s702
          %s705 = sshll.u32 [#allocation20], 4
          %s706 = int_to_ptr.vmem [resolvable:$true] %s705
          %708 = dma.hbm_to_vmem [thread:$0]  %s11, 16, %s706, [#allocation21]
        $region44: #{decoder_layer_forward.1} parent=11 // pred_fallthru
          _
        // Predicated region
        $region45: #{decoder_layer_forward.1} parent=11 // pred_check
          %p709 = pneg %p345
        $region46: #{decoder_layer_forward.1} parent=11 // pred_check_branch
          %711 = sbr.rel (%p709) target = $region48
        $region47: #{decoder_layer_forward.1} parent=11 // pred_region
          %s713 = ssub.s32 256, 256
          %714 = vsyncadd [#allocation21], %s713
          %s715 = sshll.u32 [#allocation22], 4
          %s716 = int_to_ptr.vmem [resolvable:$true] %s715
          %721 = dma.hbm_to_vmem [thread:$0]  %s12, 256, %s716, [#allocation21], 64, 64, 4
        $region48: #{decoder_layer_forward.1} parent=11 // pred_fallthru
          _
        // Predicated region
        $region49: #{decoder_layer_forward.1} parent=11 // pred_check
          %p722 = pneg %p366
        $region50: #{decoder_layer_forward.1} parent=11 // pred_check_branch
          %724 = sbr.rel (%p722) target = $region52
        $region51: #{decoder_layer_forward.1} parent=11 // pred_region
          %s726 = ssub.s32 16, 16
          %727 = vsyncadd [#allocation24], %s726
          %s729 = sshll.u32 [#allocation23], 4
          %s730 = int_to_ptr.vmem [resolvable:$true] %s729
          %732 = dma.hbm_to_vmem [thread:$0]  %s13, 16, %s730, [#allocation24]
        $region52: #{decoder_layer_forward.1} parent=11 // pred_fallthru
          _
        // Predicated region
        $region53: #{decoder_layer_forward.1} parent=11 // pred_check
          %p733 = pneg %p387
        $region54: #{decoder_layer_forward.1} parent=11 // pred_check_branch
          %735 = sbr.rel (%p733) target = $region56
        $region55: #{decoder_layer_forward.1} parent=11 // pred_region
          %s737 = ssub.s32 256, 256
          %738 = vsyncadd [#allocation24], %s737
          %s739 = sshll.u32 [#allocation25], 4
          %s740 = int_to_ptr.vmem [resolvable:$true] %s739
          %745 = dma.hbm_to_vmem [thread:$0]  %s14, 256, %s740, [#allocation24], 64, 64, 4
        $region56: #{decoder_layer_forward.1} parent=11 // pred_fallthru
          _
        // Predicated region
        $region57: #{decoder_layer_forward.1} parent=11 // pred_check
          %p746 = pneg %p408
        $region58: #{decoder_layer_forward.1} parent=11 // pred_check_branch
          %748 = sbr.rel (%p746) target = $region60
        $region59: #{decoder_layer_forward.1} parent=11 // pred_region
          %s750 = ssub.s32 16, 16
          %751 = vsyncadd [#allocation27], %s750
          %s753 = sshll.u32 [#allocation26], 4
          %s754 = int_to_ptr.vmem [resolvable:$true] %s753
          %756 = dma.hbm_to_vmem [thread:$0]  %s15, 16, %s754, [#allocation27]
        $region60: #{decoder_layer_forward.1} parent=11 // pred_fallthru
          _
        // Predicated region
        $region61: #{decoder_layer_forward.1} parent=11 // pred_check
          %p757 = pneg %p429
        $region62: #{decoder_layer_forward.1} parent=11 // pred_check_branch
          %759 = sbr.rel (%p757) target = $region64
        $region63: #{decoder_layer_forward.1} parent=11 // pred_region
          %s761 = ssub.s32 256, 256
          %762 = vsyncadd [#allocation27], %s761
          %s763 = sshll.u32 [#allocation28], 4
          %s764 = int_to_ptr.vmem [resolvable:$true] %s763
          %769 = dma.hbm_to_vmem [thread:$0]  %s16, 256, %s764, [#allocation27], 64, 64, 4
        $region64: #{decoder_layer_forward.1} parent=11 // pred_fallthru
          _
        // Predicated region
        $region65: #{decoder_layer_forward.1} parent=11 // pred_check
          %p770 = pneg %p450
        $region66: #{decoder_layer_forward.1} parent=11 // pred_check_branch
          %772 = sbr.rel (%p770) target = $region68
        $region67: #{decoder_layer_forward.1} parent=11 // pred_region
          %s774 = ssub.s32 16, 16
          %775 = vsyncadd [#allocation30], %s774
          %s777 = sshll.u32 [#allocation29], 4
          %s778 = int_to_ptr.vmem [resolvable:$true] %s777
          %780 = dma.hbm_to_vmem [thread:$0]  %s17, 16, %s778, [#allocation30]
        $region68: #{decoder_layer_forward.1} parent=11 // pred_fallthru
          _
        // Predicated region
        $region69: #{decoder_layer_forward.1} parent=11 // pred_check
          %p781 = pneg %p471
        $region70: #{decoder_layer_forward.1} parent=11 // pred_check_branch
          %783 = sbr.rel (%p781) target = $region72
        $region71: #{decoder_layer_forward.1} parent=11 // pred_region
          %s785 = ssub.s32 16, 16
          %786 = vsyncadd [#allocation30], %s785
          %s788 = sshll.u32 [#allocation31], 4
          %s789 = int_to_ptr.vmem [resolvable:$true] %s788
          %791 = dma.hbm_to_vmem [thread:$0]  %s18, 16, %s789, [#allocation30]
        $region72: #{decoder_layer_forward.1} parent=11 // pred_fallthru
          _
        // Predicated region
        $region73: #{decoder_layer_forward.1} parent=11 // pred_check
          %p792 = pneg %p492
        $region74: #{decoder_layer_forward.1} parent=11 // pred_check_branch
          %794 = sbr.rel (%p792) target = $region76
        $region75: #{decoder_layer_forward.1} parent=11 // pred_region
          %s796 = ssub.s32 16, 16
          %797 = vsyncadd [#allocation33], %s796
          %s799 = sshll.u32 [#allocation32], 4
          %s800 = int_to_ptr.vmem [resolvable:$true] %s799
          %802 = dma.hbm_to_vmem [thread:$0]  %s19, 16, %s800, [#allocation33]
        $region76: #{decoder_layer_forward.1} parent=11 // pred_fallthru
          _
        // Predicated region
        $region77: #{decoder_layer_forward.1} parent=11 // pred_check
          %p803 = pneg %p513
        $region78: #{decoder_layer_forward.1} parent=11 // pred_check_branch
          %805 = sbr.rel (%p803) target = $region80
        $region79: #{decoder_layer_forward.1} parent=11 // pred_region
          %s807 = ssub.s32 256, 256
          %808 = vsyncadd [#allocation33], %s807
          %s809 = sshll.u32 [#allocation34], 4
          %s810 = int_to_ptr.vmem [resolvable:$true] %s809
          %815 = dma.hbm_to_vmem [thread:$0]  %s20, 256, %s810, [#allocation33], 64, 64, 4
        $region80: #{decoder_layer_forward.1} parent=11 // pred_fallthru
          _
        // Predicated region
        $region81: #{decoder_layer_forward.1} parent=11 // pred_check
          %p816 = pneg %p534
        $region82: #{decoder_layer_forward.1} parent=11 // pred_check_branch
          %818 = sbr.rel (%p816) target = $region84
        $region83: #{decoder_layer_forward.1} parent=11 // pred_region
          %s820 = ssub.s32 16, 16
          %821 = vsyncadd [#allocation36], %s820
          %s823 = sshll.u32 [#allocation35], 4
          %s824 = int_to_ptr.vmem [resolvable:$true] %s823
          %826 = dma.hbm_to_vmem [thread:$0]  %s21, 16, %s824, [#allocation36]
        $region84: #{decoder_layer_forward.1} parent=11 // pred_fallthru
          _
        // Predicated region
        $region85: #{decoder_layer_forward.1} parent=11 // pred_check
          %p827 = pneg %p555
        $region86: #{decoder_layer_forward.1} parent=11 // pred_check_branch
          %829 = sbr.rel (%p827) target = $region88
        $region87: #{decoder_layer_forward.1} parent=11 // pred_region
          %s831 = ssub.s32 512, 512
          %832 = vsyncadd [#allocation36], %s831
          %s833 = sshll.u32 [#allocation37], 4
          %s834 = int_to_ptr.vmem [resolvable:$true] %s833
          %839 = dma.hbm_to_vmem [thread:$0]  %s22, 512, %s834, [#allocation36], 64, 64, 4
        $region88: #{decoder_layer_forward.1} parent=11 // pred_fallthru
          _
        // Predicated region
        $region89: #{decoder_layer_forward.1} parent=11 // pred_check
          %p840 = pneg %p576
        $region90: #{decoder_layer_forward.1} parent=11 // pred_check_branch
          %842 = sbr.rel (%p840) target = $region92
        $region91: #{decoder_layer_forward.1} parent=11 // pred_region
          %s844 = ssub.s32 16, 16
          %845 = vsyncadd [#allocation39], %s844
          %s847 = sshll.u32 [#allocation38], 4
          %s848 = int_to_ptr.vmem [resolvable:$true] %s847
          %850 = dma.hbm_to_vmem [thread:$0]  %s23, 16, %s848, [#allocation39]
        $region92: #{decoder_layer_forward.1} parent=11 // pred_fallthru
          _
      $region12: #{decoder_layer_forward.1} parent=5 // pred_fallthru
        _
      %p851 = scmp.lt.s32.totalorder %s52, 2
      // Predicated region
      $region93: #{decoder_layer_forward.1} parent=5 // pred_check
        %p852 = pneg %p851
      $region94: #{decoder_layer_forward.1} parent=5 // pred_check_branch
        %854 = sbr.rel (%p852) target = $region96
      $region95: #{decoder_layer_forward.1} parent=5 // pred_region
        // Predicated region
        $region97: #{decoder_layer_forward.1} parent=95 // pred_check
          %p855 = pneg %p72
        $region98: #{decoder_layer_forward.1} parent=95 // pred_check_branch
          %857 = sbr.rel (%p855) target = $region100
        $region99: #{decoder_layer_forward.1} parent=95 // pred_region
          %s858 = sand.u32 %s62, 1
          %s859 = scalar_lea.sflag [#allocation3], %s858
          %s860 = sand.u32 %s62, 1
          %s861 = smul.addr %s860, 8
          %s862 = scalar_lea.vmem [#allocation2], %s861
          %s864 = ssub.s32 128, 128
          %865 = vsyncadd %s859, %s864
          %s866 = smul.addr %s52, 128
          %s867 = scalar_lea.hbm %s0, %s866
          %s869 = sshll.u32 %s862, 4
          %s870 = int_to_ptr.vmem [resolvable:$true] %s869
          %872 = dma.hbm_to_vmem [thread:$0]  %s867, 128, %s870, %s859
        $region100: #{decoder_layer_forward.1} parent=95 // pred_fallthru
          _
        // Predicated region
        $region101: #{decoder_layer_forward.1} parent=95 // pred_check
          %p873 = pneg %p98
        $region102: #{decoder_layer_forward.1} parent=95 // pred_check_branch
          %875 = sbr.rel (%p873) target = $region104
        $region103: #{decoder_layer_forward.1} parent=95 // pred_region
          %s876 = sand.u32 %s52, 1
          %s877 = scalar_lea.sflag [#allocation6], %s876
          %s878 = sand.u32 %s88, 1
          %s879 = smul.addr %s878, 8
          %s880 = scalar_lea.vmem [#allocation5], %s879
          %s882 = ssub.s32 128, 128
          %883 = vsyncadd %s877, %s882
          %s884 = smul.addr %s52, 128
          %s885 = scalar_lea.hbm %s1, %s884
          %s887 = sshll.u32 %s880, 4
          %s888 = int_to_ptr.vmem [resolvable:$true] %s887
          %890 = dma.hbm_to_vmem [thread:$0]  %s885, 128, %s888, %s877
        $region104: #{decoder_layer_forward.1} parent=95 // pred_fallthru
          _
        // Predicated region
        $region105: #{decoder_layer_forward.1} parent=95 // pred_check
          %p891 = pneg %p124
        $region106: #{decoder_layer_forward.1} parent=95 // pred_check_branch
          %893 = sbr.rel (%p891) target = $region108
        $region107: #{decoder_layer_forward.1} parent=95 // pred_region
          %s894 = sand.u32 %s52, 1
          %s895 = scalar_lea.sflag [#allocation6], %s894
          %s896 = sand.u32 %s114, 1
          %s897 = scalar_lea.vmem [#allocation7], %s896
          %s899 = ssub.s32 16, 16
          %900 = vsyncadd %s895, %s899
          %s901 = smul.addr %s52, 16
          %s902 = scalar_lea.hbm %s2, %s901
          %s904 = sshll.u32 %s897, 4
          %s905 = int_to_ptr.vmem [resolvable:$true] %s904
          %907 = dma.hbm_to_vmem [thread:$0]  %s902, 16, %s905, %s895
        $region108: #{decoder_layer_forward.1} parent=95 // pred_fallthru
          _
        // Predicated region
        $region109: #{decoder_layer_forward.1} parent=95 // pred_check
          %p908 = pneg %p150
        $region110: #{decoder_layer_forward.1} parent=95 // pred_check_branch
          %910 = sbr.rel (%p908) target = $region112
        $region111: #{decoder_layer_forward.1} parent=95 // pred_region
          %s911 = sand.u32 %s52, 1
          %s912 = scalar_lea.sflag [#allocation9], %s911
          %s913 = sand.u32 %s140, 1
          %s914 = scalar_lea.vmem [#allocation8], %s913
          %s916 = ssub.s32 16, 16
          %917 = vsyncadd %s912, %s916
          %s918 = smul.addr %s52, 16
          %s919 = scalar_lea.hbm %s3, %s918
          %s921 = sshll.u32 %s914, 4
          %s922 = int_to_ptr.vmem [resolvable:$true] %s921
          %924 = dma.hbm_to_vmem [thread:$0]  %s919, 16, %s922, %s912
        $region112: #{decoder_layer_forward.1} parent=95 // pred_fallthru
          _
      $region96: #{decoder_layer_forward.1} parent=5 // pred_fallthru
        _
      %p925 = scmp.le.s32.totalorder 1, %s52
      %p926 = scmp.lt.s32.totalorder %s52, 3
      %p927 = pnand %p925, %p926
      %p928 = pneg %p927
      // Predicated region
      $region113: #{decoder_layer_forward.1} parent=5 // pred_check
        _
      $region114: #{decoder_layer_forward.1} parent=5 // pred_check_branch
        %930 = sbr.rel (%p927) target = $region116
      $region115: #{decoder_layer_forward.1} parent=5 // pred_region
        %s931 = ssub.s32 %s52, 1
        %s932 = sand.u32 %s65, 1
        %s933 = scalar_lea.sflag [#allocation3], %s932
        %s934 = sand.u32 %s65, 1
        %s935 = smul.addr %s934, 8
        %s936 = scalar_lea.vmem [#allocation2], %s935
        // Predicated region
        $region117: #{decoder_layer_forward.1} parent=115 // pred_check
          %p937 = pneg %p78
        $region118: #{decoder_layer_forward.1} parent=115 // pred_check_branch
          %939 = sbr.rel (%p937) target = $region120
        $region119: #{decoder_layer_forward.1} parent=115 // pred_region
          %940 = dma.done %s933, 128
        $region120: #{decoder_layer_forward.1} parent=115 // pred_fallthru
          _
        %s941 = sand.u32 %s57, 1
        %s942 = scalar_lea.sflag [#allocation6], %s941
        %s943 = sand.u32 %s91, 1
        %s944 = smul.addr %s943, 8
        %s945 = scalar_lea.vmem [#allocation5], %s944
        // Predicated region
        $region121: #{decoder_layer_forward.1} parent=115 // pred_check
          %p946 = pneg %p104
        $region122: #{decoder_layer_forward.1} parent=115 // pred_check_branch
          %948 = sbr.rel (%p946) target = $region124
        $region123: #{decoder_layer_forward.1} parent=115 // pred_region
          %949 = dma.done %s942, 128
        $region124: #{decoder_layer_forward.1} parent=115 // pred_fallthru
          _
        %s950 = sand.u32 %s57, 1
        %s951 = scalar_lea.sflag [#allocation6], %s950
        %s952 = sand.u32 %s117, 1
        %s953 = scalar_lea.vmem [#allocation7], %s952
        // Predicated region
        $region125: #{decoder_layer_forward.1} parent=115 // pred_check
          %p954 = pneg %p130
        $region126: #{decoder_layer_forward.1} parent=115 // pred_check_branch
          %956 = sbr.rel (%p954) target = $region128
        $region127: #{decoder_layer_forward.1} parent=115 // pred_region
          %957 = dma.done %s951, 16
        $region128: #{decoder_layer_forward.1} parent=115 // pred_fallthru
          _
        %s958 = sand.u32 %s57, 1
        %s959 = scalar_lea.sflag [#allocation9], %s958
        %s960 = sand.u32 %s143, 1
        %s961 = scalar_lea.vmem [#allocation8], %s960
        // Predicated region
        $region129: #{decoder_layer_forward.1} parent=115 // pred_check
          %p962 = pneg %p156
        $region130: #{decoder_layer_forward.1} parent=115 // pred_check_branch
          %964 = sbr.rel (%p962) target = $region132
        $region131: #{decoder_layer_forward.1} parent=115 // pred_region
          %965 = dma.done %s959, 16
        $region132: #{decoder_layer_forward.1} parent=115 // pred_fallthru
          _
        // Predicated region
        $region133: #{decoder_layer_forward.1} parent=115 // pred_check
          %p966 = pneg %p177
        $region134: #{decoder_layer_forward.1} parent=115 // pred_check_branch
          %968 = sbr.rel (%p966) target = $region136
        $region135: #{decoder_layer_forward.1} parent=115 // pred_region
          %969 = dma.done [#allocation9], 16
        $region136: #{decoder_layer_forward.1} parent=115 // pred_fallthru
          _
        // Predicated region
        $region137: #{decoder_layer_forward.1} parent=115 // pred_check
          %p970 = pneg %p198
        $region138: #{decoder_layer_forward.1} parent=115 // pred_check_branch
          %972 = sbr.rel (%p970) target = $region140
        $region139: #{decoder_layer_forward.1} parent=115 // pred_region
          %973 = dma.done [#allocation12], 16
        $region140: #{decoder_layer_forward.1} parent=115 // pred_fallthru
          _
        // Predicated region
        $region141: #{decoder_layer_forward.1} parent=115 // pred_check
          %p974 = pneg %p219
        $region142: #{decoder_layer_forward.1} parent=115 // pred_check_branch
          %976 = sbr.rel (%p974) target = $region144
        $region143: #{decoder_layer_forward.1} parent=115 // pred_region
          %977 = dma.done [#allocation12], 256
        $region144: #{decoder_layer_forward.1} parent=115 // pred_fallthru
          _
        // Predicated region
        $region145: #{decoder_layer_forward.1} parent=115 // pred_check
          %p978 = pneg %p240
        $region146: #{decoder_layer_forward.1} parent=115 // pred_check_branch
          %980 = sbr.rel (%p978) target = $region148
        $region147: #{decoder_layer_forward.1} parent=115 // pred_region
          %981 = dma.done [#allocation15], 16
        $region148: #{decoder_layer_forward.1} parent=115 // pred_fallthru
          _
        // Predicated region
        $region149: #{decoder_layer_forward.1} parent=115 // pred_check
          %p982 = pneg %p261
        $region150: #{decoder_layer_forward.1} parent=115 // pred_check_branch
          %984 = sbr.rel (%p982) target = $region152
        $region151: #{decoder_layer_forward.1} parent=115 // pred_region
          %985 = dma.done [#allocation15], 256
        $region152: #{decoder_layer_forward.1} parent=115 // pred_fallthru
          _
        // Predicated region
        $region153: #{decoder_layer_forward.1} parent=115 // pred_check
          %p986 = pneg %p282
        $region154: #{decoder_layer_forward.1} parent=115 // pred_check_branch
          %988 = sbr.rel (%p986) target = $region156
        $region155: #{decoder_layer_forward.1} parent=115 // pred_region
          %989 = dma.done [#allocation18], 16
        $region156: #{decoder_layer_forward.1} parent=115 // pred_fallthru
          _
        // Predicated region
        $region157: #{decoder_layer_forward.1} parent=115 // pred_check
          %p990 = pneg %p303
        $region158: #{decoder_layer_forward.1} parent=115 // pred_check_branch
          %992 = sbr.rel (%p990) target = $region160
        $region159: #{decoder_layer_forward.1} parent=115 // pred_region
          %993 = dma.done [#allocation18], 16
        $region160: #{decoder_layer_forward.1} parent=115 // pred_fallthru
          _
        // Predicated region
        $region161: #{decoder_layer_forward.1} parent=115 // pred_check
          %p994 = pneg %p324
        $region162: #{decoder_layer_forward.1} parent=115 // pred_check_branch
          %996 = sbr.rel (%p994) target = $region164
        $region163: #{decoder_layer_forward.1} parent=115 // pred_region
          %997 = dma.done [#allocation21], 16
        $region164: #{decoder_layer_forward.1} parent=115 // pred_fallthru
          _
        // Predicated region
        $region165: #{decoder_layer_forward.1} parent=115 // pred_check
          %p998 = pneg %p345
        $region166: #{decoder_layer_forward.1} parent=115 // pred_check_branch
          %1000 = sbr.rel (%p998) target = $region168
        $region167: #{decoder_layer_forward.1} parent=115 // pred_region
          %1001 = dma.done [#allocation21], 256
        $region168: #{decoder_layer_forward.1} parent=115 // pred_fallthru
          _
        // Predicated region
        $region169: #{decoder_layer_forward.1} parent=115 // pred_check
          %p1002 = pneg %p366
        $region170: #{decoder_layer_forward.1} parent=115 // pred_check_branch
          %1004 = sbr.rel (%p1002) target = $region172
        $region171: #{decoder_layer_forward.1} parent=115 // pred_region
          %1005 = dma.done [#allocation24], 16
        $region172: #{decoder_layer_forward.1} parent=115 // pred_fallthru
          _
        // Predicated region
        $region173: #{decoder_layer_forward.1} parent=115 // pred_check
          %p1006 = pneg %p387
        $region174: #{decoder_layer_forward.1} parent=115 // pred_check_branch
          %1008 = sbr.rel (%p1006) target = $region176
        $region175: #{decoder_layer_forward.1} parent=115 // pred_region
          %1009 = dma.done [#allocation24], 256
        $region176: #{decoder_layer_forward.1} parent=115 // pred_fallthru
          _
        // Predicated region
        $region177: #{decoder_layer_forward.1} parent=115 // pred_check
          %p1010 = pneg %p408
        $region178: #{decoder_layer_forward.1} parent=115 // pred_check_branch
          %1012 = sbr.rel (%p1010) target = $region180
        $region179: #{decoder_layer_forward.1} parent=115 // pred_region
          %1013 = dma.done [#allocation27], 16
        $region180: #{decoder_layer_forward.1} parent=115 // pred_fallthru
          _
        // Predicated region
        $region181: #{decoder_layer_forward.1} parent=115 // pred_check
          %p1014 = pneg %p429
        $region182: #{decoder_layer_forward.1} parent=115 // pred_check_branch
          %1016 = sbr.rel (%p1014) target = $region184
        $region183: #{decoder_layer_forward.1} parent=115 // pred_region
          %1017 = dma.done [#allocation27], 256
        $region184: #{decoder_layer_forward.1} parent=115 // pred_fallthru
          _
        // Predicated region
        $region185: #{decoder_layer_forward.1} parent=115 // pred_check
          %p1018 = pneg %p450
        $region186: #{decoder_layer_forward.1} parent=115 // pred_check_branch
          %1020 = sbr.rel (%p1018) target = $region188
        $region187: #{decoder_layer_forward.1} parent=115 // pred_region
          %1021 = dma.done [#allocation30], 16
        $region188: #{decoder_layer_forward.1} parent=115 // pred_fallthru
          _
        // Predicated region
        $region189: #{decoder_layer_forward.1} parent=115 // pred_check
          %p1022 = pneg %p471
        $region190: #{decoder_layer_forward.1} parent=115 // pred_check_branch
          %1024 = sbr.rel (%p1022) target = $region192
        $region191: #{decoder_layer_forward.1} parent=115 // pred_region
          %1025 = dma.done [#allocation30], 16
        $region192: #{decoder_layer_forward.1} parent=115 // pred_fallthru
          _
        // Predicated region
        $region193: #{decoder_layer_forward.1} parent=115 // pred_check
          %p1026 = pneg %p492
        $region194: #{decoder_layer_forward.1} parent=115 // pred_check_branch
          %1028 = sbr.rel (%p1026) target = $region196
        $region195: #{decoder_layer_forward.1} parent=115 // pred_region
          %1029 = dma.done [#allocation33], 16
        $region196: #{decoder_layer_forward.1} parent=115 // pred_fallthru
          _
        // Predicated region
        $region197: #{decoder_layer_forward.1} parent=115 // pred_check
          %p1030 = pneg %p513
        $region198: #{decoder_layer_forward.1} parent=115 // pred_check_branch
          %1032 = sbr.rel (%p1030) target = $region200
        $region199: #{decoder_layer_forward.1} parent=115 // pred_region
          %1033 = dma.done [#allocation33], 256
        $region200: #{decoder_layer_forward.1} parent=115 // pred_fallthru
          _
        // Predicated region
        $region201: #{decoder_layer_forward.1} parent=115 // pred_check
          %p1034 = pneg %p534
        $region202: #{decoder_layer_forward.1} parent=115 // pred_check_branch
          %1036 = sbr.rel (%p1034) target = $region204
        $region203: #{decoder_layer_forward.1} parent=115 // pred_region
          %1037 = dma.done [#allocation36], 16
        $region204: #{decoder_layer_forward.1} parent=115 // pred_fallthru
          _
        // Predicated region
        $region205: #{decoder_layer_forward.1} parent=115 // pred_check
          %p1038 = pneg %p555
        $region206: #{decoder_layer_forward.1} parent=115 // pred_check_branch
          %1040 = sbr.rel (%p1038) target = $region208
        $region207: #{decoder_layer_forward.1} parent=115 // pred_region
          %1041 = dma.done [#allocation36], 512
        $region208: #{decoder_layer_forward.1} parent=115 // pred_fallthru
          _
        // Predicated region
        $region209: #{decoder_layer_forward.1} parent=115 // pred_check
          %p1042 = pneg %p576
        $region210: #{decoder_layer_forward.1} parent=115 // pred_check_branch
          %1044 = sbr.rel (%p1042) target = $region212
        $region211: #{decoder_layer_forward.1} parent=115 // pred_region
          %1045 = dma.done [#allocation39], 16
        $region212: #{decoder_layer_forward.1} parent=115 // pred_fallthru
          _
        %s1046 = sand.u32 %s65, 1
        %s1047 = scalar_lea.sflag [#allocation3], %s1046
        %s1048 = sand.u32 %s65, 1
        %s1049 = smul.addr %s1048, 8
        %s1050 = scalar_lea.vmem [#allocation2], %s1049
        %p1051 = pneg %p78
        %p1052 = pneg %p75
        %s1053 = sand.u32 %s57, 1
        %s1054 = scalar_lea.sflag [#allocation6], %s1053
        %s1055 = sand.u32 %s91, 1
        %s1056 = smul.addr %s1055, 8
        %s1057 = scalar_lea.vmem [#allocation5], %s1056
        %p1058 = pneg %p104
        %p1059 = pneg %p101
        %s1060 = sand.u32 %s57, 1
        %s1061 = scalar_lea.sflag [#allocation6], %s1060
        %s1062 = sand.u32 %s117, 1
        %s1063 = scalar_lea.vmem [#allocation7], %s1062
        %p1064 = pneg %p130
        %p1065 = pneg %p127
        %s1066 = sand.u32 %s57, 1
        %s1067 = scalar_lea.sflag [#allocation9], %s1066
        %s1068 = sand.u32 %s143, 1
        %s1069 = scalar_lea.vmem [#allocation8], %s1068
        %p1070 = pneg %p156
        %p1071 = pneg %p153
        %p1072 = pneg %p177
        %p1073 = pneg %p174
        %p1074 = pneg %p198
        %p1075 = pneg %p195
        %p1076 = pneg %p219
        %p1077 = pneg %p216
        %p1078 = pneg %p240
        %p1079 = pneg %p237
        %p1080 = pneg %p261
        %p1081 = pneg %p258
        %p1082 = pneg %p282
        %p1083 = pneg %p279
        %p1084 = pneg %p303
        %p1085 = pneg %p300
        %p1086 = pneg %p324
        %p1087 = pneg %p321
        %p1088 = pneg %p345
        %p1089 = pneg %p342
        %p1090 = pneg %p366
        %p1091 = pneg %p363
        %p1092 = pneg %p387
        %p1093 = pneg %p384
        %p1094 = pneg %p408
        %p1095 = pneg %p405
        %p1096 = pneg %p429
        %p1097 = pneg %p426
        %p1098 = pneg %p450
        %p1099 = pneg %p447
        %p1100 = pneg %p471
        %p1101 = pneg %p468
        %p1102 = pneg %p492
        %p1103 = pneg %p489
        %p1104 = pneg %p513
        %p1105 = pneg %p510
        %p1106 = pneg %p534
        %p1107 = pneg %p531
        %p1108 = pneg %p555
        %p1109 = pneg %p552
        %p1110 = pneg %p576
        %p1111 = pneg %p573
        %p1112 = pneg %p602
        %p1113 = pneg %p599
        %s1114 = sand.u32 %s589, 1
        %s1115 = scalar_lea.sflag [#allocation4], %s1114
        %s1116 = sand.u32 %s589, 1
        %s1117 = smul.addr %s1116, 8
        %s1118 = scalar_lea.vmem [#allocation40], %s1117
        %v1120 = vld [vmem:[%s936] sm:$0xff]
        %v1121 = vld [vmem:[%s945] sm:$0xff]
        %v1122 = vld [vmem:[#allocation10] sm:$0x1]
        %v1123 = vld [vmem:[#allocation11] sm:$0x1]
        %vm1124 = vcmask 261120
        %v1125 = vsel %vm1124, %v1120, 0.0
        %1126 = vadd.xlane.f32.xlu0 %v1125
        %v1127 = vpop.xlane.xlu0 %1126
        %v1128 = vrcp.pop 32.0
        %v1129 = vmul.f32 %v1127, %v1128
        %v1130 = vsub.f32 %v1120, %v1129
        %v1131 = vmul.f32 %v1130, %v1130
        %v1132 = vsel %vm1124, %v1131, 0.0
        %1133 = vadd.xlane.f32.xlu0 %v1132
        %v1134 = vpop.xlane.xlu0 %1133
        %v1135 = vmul.f32 %v1134, %v1128
        %v1136 = vadd.f32 %v1135, 1e-05
        %v1137 = vrsqrt.pop %v1136
        %v1138 = vmul.f32 %v1130, %v1137
        %v1140 = vlaneseq
        %v1141 = vshrl.u32 %v1140, 7
        %v1142 = vsub.s32 0, %v1141
        %v1143 = vrot.slane %v1122, %v1142
        %v1145 = vmul.f32 %v1138, %v1143
        %v1147 = vlaneseq
        %v1148 = vshrl.u32 %v1147, 7
        %v1149 = vsub.s32 0, %v1148
        %v1150 = vrot.slane %v1123, %v1149
        %v1152 = vadd.f32 %v1145, %v1150
        %v1153 = vpack.c.bf16 %v1152, %v1152
        %v1154 = vld [vmem:[#allocation13] sm:$0xf]
        %v1155 = vld [vmem:[#allocation13 + $0x4] sm:$0xf]
        %v1156 = vld [vmem:[#allocation13 + $0x8] sm:$0xf]
        %v1157 = vld [vmem:[#allocation13 + $0xc] sm:$0xf]
        %v1158 = vld [vmem:[#allocation14] sm:$0x1]
        %v1160 = vlaneseq
        %v1161 = vshrl.u32 %v1160, 7
        %v1162 = vsub.s32 0, %v1161
        %v1163 = vrot.slane %v1158, %v1162
        %v1169 = vunpack.c.l.b16 %v1154
        %v1170 = vunpack.c.l.b16 %v1155
        %v1171 = vunpack.c.l.b16 %v1156
        %v1172 = vunpack.c.l.b16 %v1157
        %v1173 = vpack.c.b16 %v1170, %v1169
        %v1174 = vpack.c.b16 %v1172, %v1171
        %v1178 = vsel %vm1124, %v1153, 0
        %1180 = vmatprep.subr.bf16.mxu0 0
        %1181 = vmatpush1.bf16.msra.mxu0 %v1173
        %1182 = vmatprep.subr.bf16.mxu0 0
        %1183 = vmatpush1.bf16.msra.mxu0 %v1174
        %1184 = vmatprep.subr.bf16.mxu0 0
        %1185 = vmatpush1.bf16.msra.mxu0 0
        %1186 = vmatprep.subr.bf16.mxu0 0
        %1187 = vmatpush1.bf16.msra.mxu0 0
        %1188 = vmatprep.subr.bf16.mxu0 0
        %1189 = vmatpush1.bf16.msra.mxu0 0
        %1190 = vmatprep.subr.bf16.mxu0 0
        %1191 = vmatpush1.bf16.msra.mxu0 0
        %1192 = vmatprep.subr.bf16.mxu0 0
        %1193 = vmatpush1.bf16.msra.mxu0 0
        %1194 = vmatprep.subr.bf16.mxu0 0
        %1195 = vmatpush1.bf16.msra.mxu0 0
        %1196 = vmatprep.subr.bf16.mxu0 0
        %1197 = vmatpush1.bf16.msra.mxu0 0
        %1198 = vmatprep.subr.bf16.mxu0 0
        %1199 = vmatpush1.bf16.msra.mxu0 0
        %1200 = vmatprep.subr.bf16.mxu0 0
        %1201 = vmatpush1.bf16.msra.mxu0 0
        %1202 = vmatprep.subr.bf16.mxu0 0
        %1203 = vmatpush1.bf16.msra.mxu0 0
        %1204 = vmatprep.subr.bf16.mxu0 0
        %1205 = vmatpush1.bf16.msra.mxu0 0
        %1206 = vmatprep.subr.bf16.mxu0 0
        %1207 = vmatpush1.bf16.msra.mxu0 0
        %1208 = vmatprep.subr.bf16.mxu0 0
        %1209 = vmatpush1.bf16.msra.mxu0 0
        %1210 = vmatprep.subr.bf16.mxu0 0
        %1211 = vmatpush1.bf16.msra.mxu0 0
        %1212 = vmatprep.mubr.bf16.mxu0 0
        %1213 = vmatmul.mubr.bf16.gmra.mrb[0].mxu0 %v1178
        %v1214 = vpop.f32.mrb[0].mxu0
        %v1215 = vadd.f32 %v1163, %v1214
        %v1216 = vpop.f32.mrb[0].mxu0
        %v1217 = vpop.f32.mrb[0].mxu0
        %v1218 = vpop.f32.mrb[0].mxu0
        %1219 = vdwg.mxu0
        %v1220 = vpack.c.bf16 %v1215, %v1215
        %v1221 = vlaneseq
        %v1222 = vshrl.u32 %v1221, 7
        %v1223 = vlaneseq
        %v1224 = vand.u32 %v1223, 127
        %v1225 = vld [vmem:[%s953] sm:$0x1]
        %vm1226 = vcmp.gt.f32.partialorder %v1225, 0.5
        %vm1227 = vcmp.ge.s32.totalorder %v1222, %v1224
        %v1228 = vsel %vm1226, 1, 0
        %v1229 = vlaneseq
        %v1230 = vshrl.u32 %v1229, 7
        %v1231 = vsub.s32 0, %v1230
        %v1232 = vrot.slane %v1228, %v1231
        %vm1233 = vcmp.eq.s32.totalorder %v1232, 1
        %vm1234 = vmand %vm1233, %vm1227
        %v1235 = vsel %vm1234, 0.0, -1e+09
        %1237 = vrot.lane.b32.xlu0 %v1220, 96
        %v1238 = vpop.permute.xlu0 %1237
        %vm1239 = vcmask 64512
        %v1241 = vsel %vm1239, %v1220, 0
        %v1244 = vsel %vm1239, %v1238, 0
        %1246 = vmatprep.subr.bf16.mxu0 0
        %1247 = vmatpush1.bf16.xpose.msra.mxu0 %v1244
        %1248 = vmatprep.subr.bf16.mxu0 0
        %1249 = vmatpush1.bf16.xpose.msra.mxu0 0
        %1250 = vmatprep.subr.bf16.mxu0 0
        %1251 = vmatpush1.bf16.xpose.msra.mxu0 0
        %1252 = vmatprep.subr.bf16.mxu0 0
        %1253 = vmatpush1.bf16.xpose.msra.mxu0 0
        %1254 = vmatprep.subr.bf16.mxu0 0
        %1255 = vmatpush1.bf16.xpose.msra.mxu0 0
        %1256 = vmatprep.subr.bf16.mxu0 0
        %1257 = vmatpush1.bf16.xpose.msra.mxu0 0
        %1258 = vmatprep.subr.bf16.mxu0 0
        %1259 = vmatpush1.bf16.xpose.msra.mxu0 0
        %1260 = vmatprep.subr.bf16.mxu0 0
        %1261 = vmatpush1.bf16.xpose.msra.mxu0 0
        %1262 = vmatprep.subr.bf16.mxu0 0
        %1263 = vmatpush1.bf16.xpose.msra.mxu0 0
        %1264 = vmatprep.subr.bf16.mxu0 0
        %1265 = vmatpush1.bf16.xpose.msra.mxu0 0
        %1266 = vmatprep.subr.bf16.mxu0 0
        %1267 = vmatpush1.bf16.xpose.msra.mxu0 0
        %1268 = vmatprep.subr.bf16.mxu0 0
        %1269 = vmatpush1.bf16.xpose.msra.mxu0 0
        %1270 = vmatprep.subr.bf16.mxu0 0
        %1271 = vmatpush1.bf16.xpose.msra.mxu0 0
        %1272 = vmatprep.subr.bf16.mxu0 0
        %1273 = vmatpush1.bf16.xpose.msra.mxu0 0
        %1274 = vmatprep.subr.bf16.mxu0 0
        %1275 = vmatpush1.bf16.xpose.msra.mxu0 0
        %1276 = vmatprep.subr.bf16.mxu0 0
        %1277 = vmatpush1.bf16.xpose.msra.mxu0 0
        %1278 = vmatprep.mubr.bf16.mxu0 0
        %1279 = vmatmul.mubr.bf16.gmra.mrb[0].mxu0 %v1241
        %v1280 = vpop.f32.mrb[0].mxu0
        %v1281 = vadd.f32 %v1235, %v1280
        %v1282 = vpop.f32.mrb[0].mxu0
        %v1283 = vpop.f32.mrb[0].mxu0
        %v1284 = vpop.f32.mrb[0].mxu0
        %1285 = vdwg.mxu0
        %v1286 = vsel %vm1239, %v1281, -inf
        %1287 = vmax.xlane.f32.xlu0 %v1286
        %v1288 = vpop.xlane.xlu0 %1287
        %v1289 = vsub.f32 %v1281, %v1288
        %v1290 = vmul.f32 %v1289, 1.442695
        %v1291 = vpow.pop %v1290
        %v1292 = vsel %vm1239, %v1291, 0.0
        %1293 = vadd.xlane.f32.xlu0 %v1292
        %v1294 = vpop.xlane.xlu0 %1293
        %v1295 = vrcp.pop %v1294
        %v1296 = vmul.f32 %v1291, %v1295
        %v1297 = vpack.c.bf16 %v1296, %v1296
        %1298 = vrot.lane.b32.xlu0 %v1220, 64
        %v1299 = vpop.permute.xlu0 %1298
        %v1301 = vsel %vm1239, %v1297, 0
        %vm1303 = vcmask 1043456
        %v1305 = vsel %vm1303, %v1299, 0
        %1307 = vmatprep.subr.bf16.mxu0 0
        %1308 = vmatpush1.bf16.msra.mxu0 %v1305
        %1309 = vmatprep.subr.bf16.mxu0 0
        %1310 = vmatpush1.bf16.msra.mxu0 0
        %1311 = vmatprep.subr.bf16.mxu0 0
        %1312 = vmatpush1.bf16.msra.mxu0 0
        %1313 = vmatprep.subr.bf16.mxu0 0
        %1314 = vmatpush1.bf16.msra.mxu0 0
        %1315 = vmatprep.subr.bf16.mxu0 0
        %1316 = vmatpush1.bf16.msra.mxu0 0
        %1317 = vmatprep.subr.bf16.mxu0 0
        %1318 = vmatpush1.bf16.msra.mxu0 0
        %1319 = vmatprep.subr.bf16.mxu0 0
        %1320 = vmatpush1.bf16.msra.mxu0 0
        %1321 = vmatprep.subr.bf16.mxu0 0
        %1322 = vmatpush1.bf16.msra.mxu0 0
        %1323 = vmatprep.subr.bf16.mxu0 0
        %1324 = vmatpush1.bf16.msra.mxu0 0
        %1325 = vmatprep.subr.bf16.mxu0 0
        %1326 = vmatpush1.bf16.msra.mxu0 0
        %1327 = vmatprep.subr.bf16.mxu0 0
        %1328 = vmatpush1.bf16.msra.mxu0 0
        %1329 = vmatprep.subr.bf16.mxu0 0
        %1330 = vmatpush1.bf16.msra.mxu0 0
        %1331 = vmatprep.subr.bf16.mxu0 0
        %1332 = vmatpush1.bf16.msra.mxu0 0
        %1333 = vmatprep.subr.bf16.mxu0 0
        %1334 = vmatpush1.bf16.msra.mxu0 0
        %1335 = vmatprep.subr.bf16.mxu0 0
        %1336 = vmatpush1.bf16.msra.mxu0 0
        %1337 = vmatprep.subr.bf16.mxu0 0
        %1338 = vmatpush1.bf16.msra.mxu0 0
        %1339 = vmatprep.mubr.bf16.mxu0 0
        %1340 = vmatmul.mubr.bf16.gmra.mrb[0].mxu0 %v1301
        %v1341 = vpop.f32.mrb[0].mxu0
        %v1342 = vadd.f32 0.0, %v1341
        %v1343 = vpop.f32.mrb[0].mxu0
        %v1344 = vpop.f32.mrb[0].mxu0
        %v1345 = vpop.f32.mrb[0].mxu0
        %1346 = vdwg.mxu0
        %1347 = vrot.lane.b32.xlu0 %v1220, 120
        %v1348 = vpop.permute.xlu0 %1347
        %1349 = vrot.lane.b32.xlu0 %v1220, 88
        %v1350 = vpop.permute.xlu0 %1349
        %v1352 = vsel %vm1239, %v1348, 0
        %v1355 = vsel %vm1239, %v1350, 0
        %1357 = vmatprep.subr.bf16.mxu0 0
        %1358 = vmatpush1.bf16.xpose.msra.mxu0 %v1355
        %1359 = vmatprep.subr.bf16.mxu0 0
        %1360 = vmatpush1.bf16.xpose.msra.mxu0 0
        %1361 = vmatprep.subr.bf16.mxu0 0
        %1362 = vmatpush1.bf16.xpose.msra.mxu0 0
        %1363 = vmatprep.subr.bf16.mxu0 0
        %1364 = vmatpush1.bf16.xpose.msra.mxu0 0
        %1365 = vmatprep.subr.bf16.mxu0 0
        %1366 = vmatpush1.bf16.xpose.msra.mxu0 0
        %1367 = vmatprep.subr.bf16.mxu0 0
        %1368 = vmatpush1.bf16.xpose.msra.mxu0 0
        %1369 = vmatprep.subr.bf16.mxu0 0
        %1370 = vmatpush1.bf16.xpose.msra.mxu0 0
        %1371 = vmatprep.subr.bf16.mxu0 0
        %1372 = vmatpush1.bf16.xpose.msra.mxu0 0
        %1373 = vmatprep.subr.bf16.mxu0 0
        %1374 = vmatpush1.bf16.xpose.msra.mxu0 0
        %1375 = vmatprep.subr.bf16.mxu0 0
        %1376 = vmatpush1.bf16.xpose.msra.mxu0 0
        %1377 = vmatprep.subr.bf16.mxu0 0
        %1378 = vmatpush1.bf16.xpose.msra.mxu0 0
        %1379 = vmatprep.subr.bf16.mxu0 0
        %1380 = vmatpush1.bf16.xpose.msra.mxu0 0
        %1381 = vmatprep.subr.bf16.mxu0 0
        %1382 = vmatpush1.bf16.xpose.msra.mxu0 0
        %1383 = vmatprep.subr.bf16.mxu0 0
        %1384 = vmatpush1.bf16.xpose.msra.mxu0 0
        %1385 = vmatprep.subr.bf16.mxu0 0
        %1386 = vmatpush1.bf16.xpose.msra.mxu0 0
        %1387 = vmatprep.subr.bf16.mxu0 0
        %1388 = vmatpush1.bf16.xpose.msra.mxu0 0
        %1389 = vmatprep.mubr.bf16.mxu0 0
        %1390 = vmatmul.mubr.bf16.gmra.mrb[0].mxu0 %v1352
        %v1391 = vpop.f32.mrb[0].mxu0
        %v1392 = vadd.f32 %v1235, %v1391
        %v1393 = vpop.f32.mrb[0].mxu0
        %v1394 = vpop.f32.mrb[0].mxu0
        %v1395 = vpop.f32.mrb[0].mxu0
        %1396 = vdwg.mxu0
        %v1397 = vsel %vm1239, %v1392, -inf
        %1398 = vmax.xlane.f32.xlu0 %v1397
        %v1399 = vpop.xlane.xlu0 %1398
        %v1400 = vsub.f32 %v1392, %v1399
        %v1401 = vmul.f32 %v1400, 1.442695
        %v1402 = vpow.pop %v1401
        %v1403 = vsel %vm1239, %v1402, 0.0
        %1404 = vadd.xlane.f32.xlu0 %v1403
        %v1405 = vpop.xlane.xlu0 %1404
        %v1406 = vrcp.pop %v1405
        %v1407 = vmul.f32 %v1402, %v1406
        %v1408 = vpack.c.bf16 %v1407, %v1407
        %1409 = vrot.lane.b32.xlu0 %v1220, 56
        %v1410 = vpop.permute.xlu0 %1409
        %v1412 = vsel %vm1239, %v1408, 0
        %v1415 = vsel %vm1303, %v1410, 0
        %1417 = vmatprep.subr.bf16.mxu0 0
        %1418 = vmatpush1.bf16.msra.mxu0 %v1415
        %1419 = vmatprep.subr.bf16.mxu0 0
        %1420 = vmatpush1.bf16.msra.mxu0 0
        %1421 = vmatprep.subr.bf16.mxu0 0
        %1422 = vmatpush1.bf16.msra.mxu0 0
        %1423 = vmatprep.subr.bf16.mxu0 0
        %1424 = vmatpush1.bf16.msra.mxu0 0
        %1425 = vmatprep.subr.bf16.mxu0 0
        %1426 = vmatpush1.bf16.msra.mxu0 0
        %1427 = vmatprep.subr.bf16.mxu0 0
        %1428 = vmatpush1.bf16.msra.mxu0 0
        %1429 = vmatprep.subr.bf16.mxu0 0
        %1430 = vmatpush1.bf16.msra.mxu0 0
        %1431 = vmatprep.subr.bf16.mxu0 0
        %1432 = vmatpush1.bf16.msra.mxu0 0
        %1433 = vmatprep.subr.bf16.mxu0 0
        %1434 = vmatpush1.bf16.msra.mxu0 0
        %1435 = vmatprep.subr.bf16.mxu0 0
        %1436 = vmatpush1.bf16.msra.mxu0 0
        %1437 = vmatprep.subr.bf16.mxu0 0
        %1438 = vmatpush1.bf16.msra.mxu0 0
        %1439 = vmatprep.subr.bf16.mxu0 0
        %1440 = vmatpush1.bf16.msra.mxu0 0
        %1441 = vmatprep.subr.bf16.mxu0 0
        %1442 = vmatpush1.bf16.msra.mxu0 0
        %1443 = vmatprep.subr.bf16.mxu0 0
        %1444 = vmatpush1.bf16.msra.mxu0 0
        %1445 = vmatprep.subr.bf16.mxu0 0
        %1446 = vmatpush1.bf16.msra.mxu0 0
        %1447 = vmatprep.subr.bf16.mxu0 0
        %1448 = vmatpush1.bf16.msra.mxu0 0
        %1449 = vmatprep.mubr.bf16.mxu0 0
        %1450 = vmatmul.mubr.bf16.gmra.mrb[0].mxu0 %v1412
        %v1451 = vpop.f32.mrb[0].mxu0
        %v1452 = vadd.f32 0.0, %v1451
        %v1453 = vpop.f32.mrb[0].mxu0
        %v1454 = vpop.f32.mrb[0].mxu0
        %v1455 = vpop.f32.mrb[0].mxu0
        %1456 = vdwg.mxu0
        %1457 = vrot.lane.b32.xlu0 %v1220, 112
        %v1458 = vpop.permute.xlu0 %1457
        %1459 = vrot.lane.b32.xlu0 %v1220, 80
        %v1460 = vpop.permute.xlu0 %1459
        %v1462 = vsel %vm1239, %v1458, 0
        %v1465 = vsel %vm1239, %v1460, 0
        %1467 = vmatprep.subr.bf16.mxu0 0
        %1468 = vmatpush1.bf16.xpose.msra.mxu0 %v1465
        %1469 = vmatprep.subr.bf16.mxu0 0
        %1470 = vmatpush1.bf16.xpose.msra.mxu0 0
        %1471 = vmatprep.subr.bf16.mxu0 0
        %1472 = vmatpush1.bf16.xpose.msra.mxu0 0
        %1473 = vmatprep.subr.bf16.mxu0 0
        %1474 = vmatpush1.bf16.xpose.msra.mxu0 0
        %1475 = vmatprep.subr.bf16.mxu0 0
        %1476 = vmatpush1.bf16.xpose.msra.mxu0 0
        %1477 = vmatprep.subr.bf16.mxu0 0
        %1478 = vmatpush1.bf16.xpose.msra.mxu0 0
        %1479 = vmatprep.subr.bf16.mxu0 0
        %1480 = vmatpush1.bf16.xpose.msra.mxu0 0
        %1481 = vmatprep.subr.bf16.mxu0 0
        %1482 = vmatpush1.bf16.xpose.msra.mxu0 0
        %1483 = vmatprep.subr.bf16.mxu0 0
        %1484 = vmatpush1.bf16.xpose.msra.mxu0 0
        %1485 = vmatprep.subr.bf16.mxu0 0
        %1486 = vmatpush1.bf16.xpose.msra.mxu0 0
        %1487 = vmatprep.subr.bf16.mxu0 0
        %1488 = vmatpush1.bf16.xpose.msra.mxu0 0
        %1489 = vmatprep.subr.bf16.mxu0 0
        %1490 = vmatpush1.bf16.xpose.msra.mxu0 0
        %1491 = vmatprep.subr.bf16.mxu0 0
        %1492 = vmatpush1.bf16.xpose.msra.mxu0 0
        %1493 = vmatprep.subr.bf16.mxu0 0
        %1494 = vmatpush1.bf16.xpose.msra.mxu0 0
        %1495 = vmatprep.subr.bf16.mxu0 0
        %1496 = vmatpush1.bf16.xpose.msra.mxu0 0
        %1497 = vmatprep.subr.bf16.mxu0 0
        %1498 = vmatpush1.bf16.xpose.msra.mxu0 0
        %1499 = vmatprep.mubr.bf16.mxu0 0
        %1500 = vmatmul.mubr.bf16.gmra.mrb[0].mxu0 %v1462
        %v1501 = vpop.f32.mrb[0].mxu0
        %v1502 = vadd.f32 %v1235, %v1501
        %v1503 = vpop.f32.mrb[0].mxu0
        %v1504 = vpop.f32.mrb[0].mxu0
        %v1505 = vpop.f32.mrb[0].mxu0
        %1506 = vdwg.mxu0
        %v1507 = vsel %vm1239, %v1502, -inf
        %1508 = vmax.xlane.f32.xlu0 %v1507
        %v1509 = vpop.xlane.xlu0 %1508
        %v1510 = vsub.f32 %v1502, %v1509
        %v1511 = vmul.f32 %v1510, 1.442695
        %v1512 = vpow.pop %v1511
        %v1513 = vsel %vm1239, %v1512, 0.0
        %1514 = vadd.xlane.f32.xlu0 %v1513
        %v1515 = vpop.xlane.xlu0 %1514
        %v1516 = vrcp.pop %v1515
        %v1517 = vmul.f32 %v1512, %v1516
        %v1518 = vpack.c.bf16 %v1517, %v1517
        %1519 = vrot.lane.b32.xlu0 %v1220, 48
        %v1520 = vpop.permute.xlu0 %1519
        %v1522 = vsel %vm1239, %v1518, 0
        %v1525 = vsel %vm1303, %v1520, 0
        %1527 = vmatprep.subr.bf16.mxu0 0
        %1528 = vmatpush1.bf16.msra.mxu0 %v1525
        %1529 = vmatprep.subr.bf16.mxu0 0
        %1530 = vmatpush1.bf16.msra.mxu0 0
        %1531 = vmatprep.subr.bf16.mxu0 0
        %1532 = vmatpush1.bf16.msra.mxu0 0
        %1533 = vmatprep.subr.bf16.mxu0 0
        %1534 = vmatpush1.bf16.msra.mxu0 0
        %1535 = vmatprep.subr.bf16.mxu0 0
        %1536 = vmatpush1.bf16.msra.mxu0 0
        %1537 = vmatprep.subr.bf16.mxu0 0
        %1538 = vmatpush1.bf16.msra.mxu0 0
        %1539 = vmatprep.subr.bf16.mxu0 0
        %1540 = vmatpush1.bf16.msra.mxu0 0
        %1541 = vmatprep.subr.bf16.mxu0 0
        %1542 = vmatpush1.bf16.msra.mxu0 0
        %1543 = vmatprep.subr.bf16.mxu0 0
        %1544 = vmatpush1.bf16.msra.mxu0 0
        %1545 = vmatprep.subr.bf16.mxu0 0
        %1546 = vmatpush1.bf16.msra.mxu0 0
        %1547 = vmatprep.subr.bf16.mxu0 0
        %1548 = vmatpush1.bf16.msra.mxu0 0
        %1549 = vmatprep.subr.bf16.mxu0 0
        %1550 = vmatpush1.bf16.msra.mxu0 0
        %1551 = vmatprep.subr.bf16.mxu0 0
        %1552 = vmatpush1.bf16.msra.mxu0 0
        %1553 = vmatprep.subr.bf16.mxu0 0
        %1554 = vmatpush1.bf16.msra.mxu0 0
        %1555 = vmatprep.subr.bf16.mxu0 0
        %1556 = vmatpush1.bf16.msra.mxu0 0
        %1557 = vmatprep.subr.bf16.mxu0 0
        %1558 = vmatpush1.bf16.msra.mxu0 0
        %1559 = vmatprep.mubr.bf16.mxu0 0
        %1560 = vmatmul.mubr.bf16.gmra.mrb[0].mxu0 %v1522
        %v1561 = vpop.f32.mrb[0].mxu0
        %v1562 = vadd.f32 0.0, %v1561
        %v1563 = vpop.f32.mrb[0].mxu0
        %v1564 = vpop.f32.mrb[0].mxu0
        %v1565 = vpop.f32.mrb[0].mxu0
        %1566 = vdwg.mxu0
        %1567 = vrot.lane.b32.xlu0 %v1220, 104
        %v1568 = vpop.permute.xlu0 %1567
        %1569 = vrot.lane.b32.xlu0 %v1220, 72
        %v1570 = vpop.permute.xlu0 %1569
        %v1572 = vsel %vm1239, %v1568, 0
        %v1575 = vsel %vm1239, %v1570, 0
        %1577 = vmatprep.subr.bf16.mxu0 0
        %1578 = vmatpush1.bf16.xpose.msra.mxu0 %v1575
        %1579 = vmatprep.subr.bf16.mxu0 0
        %1580 = vmatpush1.bf16.xpose.msra.mxu0 0
        %1581 = vmatprep.subr.bf16.mxu0 0
        %1582 = vmatpush1.bf16.xpose.msra.mxu0 0
        %1583 = vmatprep.subr.bf16.mxu0 0
        %1584 = vmatpush1.bf16.xpose.msra.mxu0 0
        %1585 = vmatprep.subr.bf16.mxu0 0
        %1586 = vmatpush1.bf16.xpose.msra.mxu0 0
        %1587 = vmatprep.subr.bf16.mxu0 0
        %1588 = vmatpush1.bf16.xpose.msra.mxu0 0
        %1589 = vmatprep.subr.bf16.mxu0 0
        %1590 = vmatpush1.bf16.xpose.msra.mxu0 0
        %1591 = vmatprep.subr.bf16.mxu0 0
        %1592 = vmatpush1.bf16.xpose.msra.mxu0 0
        %1593 = vmatprep.subr.bf16.mxu0 0
        %1594 = vmatpush1.bf16.xpose.msra.mxu0 0
        %1595 = vmatprep.subr.bf16.mxu0 0
        %1596 = vmatpush1.bf16.xpose.msra.mxu0 0
        %1597 = vmatprep.subr.bf16.mxu0 0
        %1598 = vmatpush1.bf16.xpose.msra.mxu0 0
        %1599 = vmatprep.subr.bf16.mxu0 0
        %1600 = vmatpush1.bf16.xpose.msra.mxu0 0
        %1601 = vmatprep.subr.bf16.mxu0 0
        %1602 = vmatpush1.bf16.xpose.msra.mxu0 0
        %1603 = vmatprep.subr.bf16.mxu0 0
        %1604 = vmatpush1.bf16.xpose.msra.mxu0 0
        %1605 = vmatprep.subr.bf16.mxu0 0
        %1606 = vmatpush1.bf16.xpose.msra.mxu0 0
        %1607 = vmatprep.subr.bf16.mxu0 0
        %1608 = vmatpush1.bf16.xpose.msra.mxu0 0
        %1609 = vmatprep.mubr.bf16.mxu0 0
        %1610 = vmatmul.mubr.bf16.gmra.mrb[0].mxu0 %v1572
        %v1611 = vpop.f32.mrb[0].mxu0
        %v1612 = vadd.f32 %v1235, %v1611
        %v1613 = vpop.f32.mrb[0].mxu0
        %v1614 = vpop.f32.mrb[0].mxu0
        %v1615 = vpop.f32.mrb[0].mxu0
        %1616 = vdwg.mxu0
        %v1617 = vsel %vm1239, %v1612, -inf
        %1618 = vmax.xlane.f32.xlu0 %v1617
        %v1619 = vpop.xlane.xlu0 %1618
        %v1620 = vsub.f32 %v1612, %v1619
        %v1621 = vmul.f32 %v1620, 1.442695
        %v1622 = vpow.pop %v1621
        %v1623 = vsel %vm1239, %v1622, 0.0
        %1624 = vadd.xlane.f32.xlu0 %v1623
        %v1625 = vpop.xlane.xlu0 %1624
        %v1626 = vrcp.pop %v1625
        %v1627 = vmul.f32 %v1622, %v1626
        %v1628 = vpack.c.bf16 %v1627, %v1627
        %1629 = vrot.lane.b32.xlu0 %v1220, 40
        %v1630 = vpop.permute.xlu0 %1629
        %v1632 = vsel %vm1239, %v1628, 0
        %v1635 = vsel %vm1303, %v1630, 0
        %1637 = vmatprep.subr.bf16.mxu0 0
        %1638 = vmatpush1.bf16.msra.mxu0 %v1635
        %1639 = vmatprep.subr.bf16.mxu0 0
        %1640 = vmatpush1.bf16.msra.mxu0 0
        %1641 = vmatprep.subr.bf16.mxu0 0
        %1642 = vmatpush1.bf16.msra.mxu0 0
        %1643 = vmatprep.subr.bf16.mxu0 0
        %1644 = vmatpush1.bf16.msra.mxu0 0
        %1645 = vmatprep.subr.bf16.mxu0 0
        %1646 = vmatpush1.bf16.msra.mxu0 0
        %1647 = vmatprep.subr.bf16.mxu0 0
        %1648 = vmatpush1.bf16.msra.mxu0 0
        %1649 = vmatprep.subr.bf16.mxu0 0
        %1650 = vmatpush1.bf16.msra.mxu0 0
        %1651 = vmatprep.subr.bf16.mxu0 0
        %1652 = vmatpush1.bf16.msra.mxu0 0
        %1653 = vmatprep.subr.bf16.mxu0 0
        %1654 = vmatpush1.bf16.msra.mxu0 0
        %1655 = vmatprep.subr.bf16.mxu0 0
        %1656 = vmatpush1.bf16.msra.mxu0 0
        %1657 = vmatprep.subr.bf16.mxu0 0
        %1658 = vmatpush1.bf16.msra.mxu0 0
        %1659 = vmatprep.subr.bf16.mxu0 0
        %1660 = vmatpush1.bf16.msra.mxu0 0
        %1661 = vmatprep.subr.bf16.mxu0 0
        %1662 = vmatpush1.bf16.msra.mxu0 0
        %1663 = vmatprep.subr.bf16.mxu0 0
        %1664 = vmatpush1.bf16.msra.mxu0 0
        %1665 = vmatprep.subr.bf16.mxu0 0
        %1666 = vmatpush1.bf16.msra.mxu0 0
        %1667 = vmatprep.subr.bf16.mxu0 0
        %1668 = vmatpush1.bf16.msra.mxu0 0
        %1669 = vmatprep.mubr.bf16.mxu0 0
        %1670 = vmatmul.mubr.bf16.gmra.mrb[0].mxu0 %v1632
        %v1671 = vpop.f32.mrb[0].mxu0
        %v1672 = vadd.f32 0.0, %v1671
        %v1673 = vpop.f32.mrb[0].mxu0
        %v1674 = vpop.f32.mrb[0].mxu0
        %v1675 = vpop.f32.mrb[0].mxu0
        %1676 = vdwg.mxu0
        %1678 = vrot.lane.b32.xlu0 %v1452, 8
        %v1679 = vpop.permute.xlu0 %1678
        %1682 = vrot.lane.b32.xlu0 %v1562, 16
        %v1683 = vpop.permute.xlu0 %1682
        %1686 = vrot.lane.b32.xlu0 %v1672, 24
        %v1687 = vpop.permute.xlu0 %1686
        %v1689 = vsel %vm1239, %v1342, %v1679
        %vm1690 = vcmask 130048
        %v1691 = vsel %vm1690, %v1689, %v1683
        %vm1692 = vcmask 195584
        %v1693 = vsel %vm1692, %v1691, %v1687
        %v1694 = vpack.c.bf16 %v1693, %v1693
        %v1695 = vld [vmem:[#allocation16] sm:$0xf]
        %v1696 = vld [vmem:[#allocation16 + $0x4] sm:$0xf]
        %v1697 = vld [vmem:[#allocation16 + $0x8] sm:$0xf]
        %v1698 = vld [vmem:[#allocation16 + $0xc] sm:$0xf]
        %v1699 = vld [vmem:[#allocation17] sm:$0x1]
        %v1701 = vlaneseq
        %v1702 = vshrl.u32 %v1701, 7
        %v1703 = vsub.s32 0, %v1702
        %v1704 = vrot.slane %v1699, %v1703
        %v1710 = vunpack.c.l.b16 %v1695
        %v1711 = vunpack.c.l.b16 %v1696
        %v1712 = vunpack.c.l.b16 %v1697
        %v1713 = vunpack.c.l.b16 %v1698
        %v1714 = vpack.c.b16 %v1711, %v1710
        %v1715 = vpack.c.b16 %v1713, %v1712
        %v1719 = vsel %vm1124, %v1694, 0
        %1721 = vmatprep.subr.bf16.mxu0 0
        %1722 = vmatpush1.bf16.msra.mxu0 %v1714
        %1723 = vmatprep.subr.bf16.mxu0 0
        %1724 = vmatpush1.bf16.msra.mxu0 %v1715
        %1725 = vmatprep.subr.bf16.mxu0 0
        %1726 = vmatpush1.bf16.msra.mxu0 0
        %1727 = vmatprep.subr.bf16.mxu0 0
        %1728 = vmatpush1.bf16.msra.mxu0 0
        %1729 = vmatprep.subr.bf16.mxu0 0
        %1730 = vmatpush1.bf16.msra.mxu0 0
        %1731 = vmatprep.subr.bf16.mxu0 0
        %1732 = vmatpush1.bf16.msra.mxu0 0
        %1733 = vmatprep.subr.bf16.mxu0 0
        %1734 = vmatpush1.bf16.msra.mxu0 0
        %1735 = vmatprep.subr.bf16.mxu0 0
        %1736 = vmatpush1.bf16.msra.mxu0 0
        %1737 = vmatprep.subr.bf16.mxu0 0
        %1738 = vmatpush1.bf16.msra.mxu0 0
        %1739 = vmatprep.subr.bf16.mxu0 0
        %1740 = vmatpush1.bf16.msra.mxu0 0
        %1741 = vmatprep.subr.bf16.mxu0 0
        %1742 = vmatpush1.bf16.msra.mxu0 0
        %1743 = vmatprep.subr.bf16.mxu0 0
        %1744 = vmatpush1.bf16.msra.mxu0 0
        %1745 = vmatprep.subr.bf16.mxu0 0
        %1746 = vmatpush1.bf16.msra.mxu0 0
        %1747 = vmatprep.subr.bf16.mxu0 0
        %1748 = vmatpush1.bf16.msra.mxu0 0
        %1749 = vmatprep.subr.bf16.mxu0 0
        %1750 = vmatpush1.bf16.msra.mxu0 0
        %1751 = vmatprep.subr.bf16.mxu0 0
        %1752 = vmatpush1.bf16.msra.mxu0 0
        %1753 = vmatprep.mubr.bf16.mxu0 0
        %1754 = vmatmul.mubr.bf16.gmra.mrb[0].mxu0 %v1719
        %v1755 = vpop.f32.mrb[0].mxu0
        %v1756 = vadd.f32 %v1704, %v1755
        %v1757 = vpop.f32.mrb[0].mxu0
        %v1758 = vpop.f32.mrb[0].mxu0
        %v1759 = vpop.f32.mrb[0].mxu0
        %1760 = vdwg.mxu0
        %v1761 = vadd.f32 %v1120, %v1756
        %v1762 = vld [vmem:[#allocation19] sm:$0x1]
        %v1763 = vld [vmem:[#allocation20] sm:$0x1]
        %v1764 = vsel %vm1124, %v1761, 0.0
        %1765 = vadd.xlane.f32.xlu0 %v1764
        %v1766 = vpop.xlane.xlu0 %1765
        %v1767 = vmul.f32 %v1766, %v1128
        %v1768 = vsub.f32 %v1761, %v1767
        %v1769 = vmul.f32 %v1768, %v1768
        %v1770 = vsel %vm1124, %v1769, 0.0
        %1771 = vadd.xlane.f32.xlu0 %v1770
        %v1772 = vpop.xlane.xlu0 %1771
        %v1773 = vmul.f32 %v1772, %v1128
        %v1774 = vadd.f32 %v1773, 1e-05
        %v1775 = vrsqrt.pop %v1774
        %v1776 = vmul.f32 %v1768, %v1775
        %v1778 = vlaneseq
        %v1779 = vshrl.u32 %v1778, 7
        %v1780 = vsub.s32 0, %v1779
        %v1781 = vrot.slane %v1762, %v1780
        %v1783 = vmul.f32 %v1776, %v1781
        %v1785 = vlaneseq
        %v1786 = vshrl.u32 %v1785, 7
        %v1787 = vsub.s32 0, %v1786
        %v1788 = vrot.slane %v1763, %v1787
        %v1790 = vadd.f32 %v1783, %v1788
        %v1791 = vpack.c.bf16 %v1121, %v1121
        %v1792 = vld [vmem:[#allocation22] sm:$0xf]
        %v1793 = vld [vmem:[#allocation22 + $0x4] sm:$0xf]
        %v1794 = vld [vmem:[#allocation22 + $0x8] sm:$0xf]
        %v1795 = vld [vmem:[#allocation22 + $0xc] sm:$0xf]
        %v1796 = vld [vmem:[#allocation23] sm:$0x1]
        %v1798 = vlaneseq
        %v1799 = vshrl.u32 %v1798, 7
        %v1800 = vsub.s32 0, %v1799
        %v1801 = vrot.slane %v1796, %v1800
        %v1807 = vunpack.c.l.b16 %v1792
        %v1808 = vunpack.c.l.b16 %v1793
        %v1809 = vunpack.c.l.b16 %v1794
        %v1810 = vunpack.c.l.b16 %v1795
        %v1811 = vpack.c.b16 %v1808, %v1807
        %v1812 = vpack.c.b16 %v1810, %v1809
        %v1816 = vsel %vm1124, %v1791, 0
        %1818 = vmatprep.subr.bf16.mxu0 0
        %1819 = vmatpush1.bf16.msra.mxu0 %v1811
        %1820 = vmatprep.subr.bf16.mxu0 0
        %1821 = vmatpush1.bf16.msra.mxu0 %v1812
        %1822 = vmatprep.subr.bf16.mxu0 0
        %1823 = vmatpush1.bf16.msra.mxu0 0
        %1824 = vmatprep.subr.bf16.mxu0 0
        %1825 = vmatpush1.bf16.msra.mxu0 0
        %1826 = vmatprep.subr.bf16.mxu0 0
        %1827 = vmatpush1.bf16.msra.mxu0 0
        %1828 = vmatprep.subr.bf16.mxu0 0
        %1829 = vmatpush1.bf16.msra.mxu0 0
        %1830 = vmatprep.subr.bf16.mxu0 0
        %1831 = vmatpush1.bf16.msra.mxu0 0
        %1832 = vmatprep.subr.bf16.mxu0 0
        %1833 = vmatpush1.bf16.msra.mxu0 0
        %1834 = vmatprep.subr.bf16.mxu0 0
        %1835 = vmatpush1.bf16.msra.mxu0 0
        %1836 = vmatprep.subr.bf16.mxu0 0
        %1837 = vmatpush1.bf16.msra.mxu0 0
        %1838 = vmatprep.subr.bf16.mxu0 0
        %1839 = vmatpush1.bf16.msra.mxu0 0
        %1840 = vmatprep.subr.bf16.mxu0 0
        %1841 = vmatpush1.bf16.msra.mxu0 0
        %1842 = vmatprep.subr.bf16.mxu0 0
        %1843 = vmatpush1.bf16.msra.mxu0 0
        %1844 = vmatprep.subr.bf16.mxu0 0
        %1845 = vmatpush1.bf16.msra.mxu0 0
        %1846 = vmatprep.subr.bf16.mxu0 0
        %1847 = vmatpush1.bf16.msra.mxu0 0
        %1848 = vmatprep.subr.bf16.mxu0 0
        %1849 = vmatpush1.bf16.msra.mxu0 0
        %1850 = vmatprep.mubr.bf16.mxu0 0
        %1851 = vmatmul.mubr.bf16.gmra.mrb[0].mxu0 %v1816
        %v1852 = vpop.f32.mrb[0].mxu0
        %v1853 = vadd.f32 %v1801, %v1852
        %v1854 = vpop.f32.mrb[0].mxu0
        %v1855 = vpop.f32.mrb[0].mxu0
        %v1856 = vpop.f32.mrb[0].mxu0
        %1857 = vdwg.mxu0
        %v1858 = vpack.c.bf16 %v1853, %v1853
        %v1859 = vpack.c.bf16 %v1790, %v1790
        %v1860 = vld [vmem:[#allocation25] sm:$0xf]
        %v1861 = vld [vmem:[#allocation25 + $0x4] sm:$0xf]
        %v1862 = vld [vmem:[#allocation25 + $0x8] sm:$0xf]
        %v1863 = vld [vmem:[#allocation25 + $0xc] sm:$0xf]
        %v1864 = vld [vmem:[#allocation26] sm:$0x1]
        %v1866 = vlaneseq
        %v1867 = vshrl.u32 %v1866, 7
        %v1868 = vsub.s32 0, %v1867
        %v1869 = vrot.slane %v1864, %v1868
        %v1875 = vunpack.c.l.b16 %v1860
        %v1876 = vunpack.c.l.b16 %v1861
        %v1877 = vunpack.c.l.b16 %v1862
        %v1878 = vunpack.c.l.b16 %v1863
        %v1879 = vpack.c.b16 %v1876, %v1875
        %v1880 = vpack.c.b16 %v1878, %v1877
        %v1884 = vsel %vm1124, %v1859, 0
        %1886 = vmatprep.subr.bf16.mxu0 0
        %1887 = vmatpush1.bf16.msra.mxu0 %v1879
        %1888 = vmatprep.subr.bf16.mxu0 0
        %1889 = vmatpush1.bf16.msra.mxu0 %v1880
        %1890 = vmatprep.subr.bf16.mxu0 0
        %1891 = vmatpush1.bf16.msra.mxu0 0
        %1892 = vmatprep.subr.bf16.mxu0 0
        %1893 = vmatpush1.bf16.msra.mxu0 0
        %1894 = vmatprep.subr.bf16.mxu0 0
        %1895 = vmatpush1.bf16.msra.mxu0 0
        %1896 = vmatprep.subr.bf16.mxu0 0
        %1897 = vmatpush1.bf16.msra.mxu0 0
        %1898 = vmatprep.subr.bf16.mxu0 0
        %1899 = vmatpush1.bf16.msra.mxu0 0
        %1900 = vmatprep.subr.bf16.mxu0 0
        %1901 = vmatpush1.bf16.msra.mxu0 0
        %1902 = vmatprep.subr.bf16.mxu0 0
        %1903 = vmatpush1.bf16.msra.mxu0 0
        %1904 = vmatprep.subr.bf16.mxu0 0
        %1905 = vmatpush1.bf16.msra.mxu0 0
        %1906 = vmatprep.subr.bf16.mxu0 0
        %1907 = vmatpush1.bf16.msra.mxu0 0
        %1908 = vmatprep.subr.bf16.mxu0 0
        %1909 = vmatpush1.bf16.msra.mxu0 0
        %1910 = vmatprep.subr.bf16.mxu0 0
        %1911 = vmatpush1.bf16.msra.mxu0 0
        %1912 = vmatprep.subr.bf16.mxu0 0
        %1913 = vmatpush1.bf16.msra.mxu0 0
        %1914 = vmatprep.subr.bf16.mxu0 0
        %1915 = vmatpush1.bf16.msra.mxu0 0
        %1916 = vmatprep.subr.bf16.mxu0 0
        %1917 = vmatpush1.bf16.msra.mxu0 0
        %1918 = vmatprep.mubr.bf16.mxu0 0
        %1919 = vmatmul.mubr.bf16.gmra.mrb[0].mxu0 %v1884
        %v1920 = vpop.f32.mrb[0].mxu0
        %v1921 = vadd.f32 %v1869, %v1920
        %v1922 = vpop.f32.mrb[0].mxu0
        %v1923 = vpop.f32.mrb[0].mxu0
        %v1924 = vpop.f32.mrb[0].mxu0
        %1925 = vdwg.mxu0
        %v1926 = vpack.c.bf16 %v1921, %v1921
        %v1927 = vld [vmem:[%s961] sm:$0x1]
        %vm1928 = vcmp.gt.f32.partialorder %v1927, 0.5
        %v1929 = vsel %vm1928, 0.0, -1e+09
        %v1931 = vlaneseq
        %v1932 = vshrl.u32 %v1931, 7
        %v1933 = vsub.s32 0, %v1932
        %v1934 = vrot.slane %v1929, %v1933
        %v1937 = vsel %vm1239, %v1858, 0
        %v1940 = vsel %vm1239, %v1926, 0
        %1942 = vmatprep.subr.bf16.mxu0 0
        %1943 = vmatpush1.bf16.xpose.msra.mxu0 %v1940
        %1944 = vmatprep.subr.bf16.mxu0 0
        %1945 = vmatpush1.bf16.xpose.msra.mxu0 0
        %1946 = vmatprep.subr.bf16.mxu0 0
        %1947 = vmatpush1.bf16.xpose.msra.mxu0 0
        %1948 = vmatprep.subr.bf16.mxu0 0
        %1949 = vmatpush1.bf16.xpose.msra.mxu0 0
        %1950 = vmatprep.subr.bf16.mxu0 0
        %1951 = vmatpush1.bf16.xpose.msra.mxu0 0
        %1952 = vmatprep.subr.bf16.mxu0 0
        %1953 = vmatpush1.bf16.xpose.msra.mxu0 0
        %1954 = vmatprep.subr.bf16.mxu0 0
        %1955 = vmatpush1.bf16.xpose.msra.mxu0 0
        %1956 = vmatprep.subr.bf16.mxu0 0
        %1957 = vmatpush1.bf16.xpose.msra.mxu0 0
        %1958 = vmatprep.subr.bf16.mxu0 0
        %1959 = vmatpush1.bf16.xpose.msra.mxu0 0
        %1960 = vmatprep.subr.bf16.mxu0 0
        %1961 = vmatpush1.bf16.xpose.msra.mxu0 0
        %1962 = vmatprep.subr.bf16.mxu0 0
        %1963 = vmatpush1.bf16.xpose.msra.mxu0 0
        %1964 = vmatprep.subr.bf16.mxu0 0
        %1965 = vmatpush1.bf16.xpose.msra.mxu0 0
        %1966 = vmatprep.subr.bf16.mxu0 0
        %1967 = vmatpush1.bf16.xpose.msra.mxu0 0
        %1968 = vmatprep.subr.bf16.mxu0 0
        %1969 = vmatpush1.bf16.xpose.msra.mxu0 0
        %1970 = vmatprep.subr.bf16.mxu0 0
        %1971 = vmatpush1.bf16.xpose.msra.mxu0 0
        %1972 = vmatprep.subr.bf16.mxu0 0
        %1973 = vmatpush1.bf16.xpose.msra.mxu0 0
        %1974 = vmatprep.mubr.bf16.mxu0 0
        %1975 = vmatmul.mubr.bf16.gmra.mrb[0].mxu0 %v1937
        %v1976 = vpop.f32.mrb[0].mxu0
        %v1977 = vadd.f32 %v1934, %v1976
        %v1978 = vpop.f32.mrb[0].mxu0
        %v1979 = vpop.f32.mrb[0].mxu0
        %v1980 = vpop.f32.mrb[0].mxu0
        %1981 = vdwg.mxu0
        %v1982 = vsel %vm1239, %v1977, -inf
        %1983 = vmax.xlane.f32.xlu0 %v1982
        %v1984 = vpop.xlane.xlu0 %1983
        %v1985 = vsub.f32 %v1977, %v1984
        %v1986 = vmul.f32 %v1985, 1.442695
        %v1987 = vpow.pop %v1986
        %v1988 = vsel %vm1239, %v1987, 0.0
        %1989 = vadd.xlane.f32.xlu0 %v1988
        %v1990 = vpop.xlane.xlu0 %1989
        %v1991 = vrcp.pop %v1990
        %v1992 = vmul.f32 %v1987, %v1991
        %v1993 = vpack.c.bf16 %v1992, %v1992
        %1995 = vrot.lane.b32.xlu0 %v1858, 96
        %v1996 = vpop.permute.xlu0 %1995
        %v1998 = vsel %vm1239, %v1993, 0
        %v2001 = vsel %vm1303, %v1996, 0
        %2003 = vmatprep.subr.bf16.mxu0 0
        %2004 = vmatpush1.bf16.msra.mxu0 %v2001
        %2005 = vmatprep.subr.bf16.mxu0 0
        %2006 = vmatpush1.bf16.msra.mxu0 0
        %2007 = vmatprep.subr.bf16.mxu0 0
        %2008 = vmatpush1.bf16.msra.mxu0 0
        %2009 = vmatprep.subr.bf16.mxu0 0
        %2010 = vmatpush1.bf16.msra.mxu0 0
        %2011 = vmatprep.subr.bf16.mxu0 0
        %2012 = vmatpush1.bf16.msra.mxu0 0
        %2013 = vmatprep.subr.bf16.mxu0 0
        %2014 = vmatpush1.bf16.msra.mxu0 0
        %2015 = vmatprep.subr.bf16.mxu0 0
        %2016 = vmatpush1.bf16.msra.mxu0 0
        %2017 = vmatprep.subr.bf16.mxu0 0
        %2018 = vmatpush1.bf16.msra.mxu0 0
        %2019 = vmatprep.subr.bf16.mxu0 0
        %2020 = vmatpush1.bf16.msra.mxu0 0
        %2021 = vmatprep.subr.bf16.mxu0 0
        %2022 = vmatpush1.bf16.msra.mxu0 0
        %2023 = vmatprep.subr.bf16.mxu0 0
        %2024 = vmatpush1.bf16.msra.mxu0 0
        %2025 = vmatprep.subr.bf16.mxu0 0
        %2026 = vmatpush1.bf16.msra.mxu0 0
        %2027 = vmatprep.subr.bf16.mxu0 0
        %2028 = vmatpush1.bf16.msra.mxu0 0
        %2029 = vmatprep.subr.bf16.mxu0 0
        %2030 = vmatpush1.bf16.msra.mxu0 0
        %2031 = vmatprep.subr.bf16.mxu0 0
        %2032 = vmatpush1.bf16.msra.mxu0 0
        %2033 = vmatprep.subr.bf16.mxu0 0
        %2034 = vmatpush1.bf16.msra.mxu0 0
        %2035 = vmatprep.mubr.bf16.mxu0 0
        %2036 = vmatmul.mubr.bf16.gmra.mrb[0].mxu0 %v1998
        %v2037 = vpop.f32.mrb[0].mxu0
        %v2038 = vadd.f32 0.0, %v2037
        %v2039 = vpop.f32.mrb[0].mxu0
        %v2040 = vpop.f32.mrb[0].mxu0
        %v2041 = vpop.f32.mrb[0].mxu0
        %2042 = vdwg.mxu0
        %2043 = vrot.lane.b32.xlu0 %v1858, 120
        %v2044 = vpop.permute.xlu0 %2043
        %2046 = vrot.lane.b32.xlu0 %v1926, 120
        %v2047 = vpop.permute.xlu0 %2046
        %v2049 = vsel %vm1239, %v2044, 0
        %v2052 = vsel %vm1239, %v2047, 0
        %2054 = vmatprep.subr.bf16.mxu0 0
        %2055 = vmatpush1.bf16.xpose.msra.mxu0 %v2052
        %2056 = vmatprep.subr.bf16.mxu0 0
        %2057 = vmatpush1.bf16.xpose.msra.mxu0 0
        %2058 = vmatprep.subr.bf16.mxu0 0
        %2059 = vmatpush1.bf16.xpose.msra.mxu0 0
        %2060 = vmatprep.subr.bf16.mxu0 0
        %2061 = vmatpush1.bf16.xpose.msra.mxu0 0
        %2062 = vmatprep.subr.bf16.mxu0 0
        %2063 = vmatpush1.bf16.xpose.msra.mxu0 0
        %2064 = vmatprep.subr.bf16.mxu0 0
        %2065 = vmatpush1.bf16.xpose.msra.mxu0 0
        %2066 = vmatprep.subr.bf16.mxu0 0
        %2067 = vmatpush1.bf16.xpose.msra.mxu0 0
        %2068 = vmatprep.subr.bf16.mxu0 0
        %2069 = vmatpush1.bf16.xpose.msra.mxu0 0
        %2070 = vmatprep.subr.bf16.mxu0 0
        %2071 = vmatpush1.bf16.xpose.msra.mxu0 0
        %2072 = vmatprep.subr.bf16.mxu0 0
        %2073 = vmatpush1.bf16.xpose.msra.mxu0 0
        %2074 = vmatprep.subr.bf16.mxu0 0
        %2075 = vmatpush1.bf16.xpose.msra.mxu0 0
        %2076 = vmatprep.subr.bf16.mxu0 0
        %2077 = vmatpush1.bf16.xpose.msra.mxu0 0
        %2078 = vmatprep.subr.bf16.mxu0 0
        %2079 = vmatpush1.bf16.xpose.msra.mxu0 0
        %2080 = vmatprep.subr.bf16.mxu0 0
        %2081 = vmatpush1.bf16.xpose.msra.mxu0 0
        %2082 = vmatprep.subr.bf16.mxu0 0
        %2083 = vmatpush1.bf16.xpose.msra.mxu0 0
        %2084 = vmatprep.subr.bf16.mxu0 0
        %2085 = vmatpush1.bf16.xpose.msra.mxu0 0
        %2086 = vmatprep.mubr.bf16.mxu0 0
        %2087 = vmatmul.mubr.bf16.gmra.mrb[0].mxu0 %v2049
        %v2088 = vpop.f32.mrb[0].mxu0
        %v2089 = vadd.f32 %v1934, %v2088
        %v2090 = vpop.f32.mrb[0].mxu0
        %v2091 = vpop.f32.mrb[0].mxu0
        %v2092 = vpop.f32.mrb[0].mxu0
        %2093 = vdwg.mxu0
        %v2094 = vsel %vm1239, %v2089, -inf
        %2095 = vmax.xlane.f32.xlu0 %v2094
        %v2096 = vpop.xlane.xlu0 %2095
        %v2097 = vsub.f32 %v2089, %v2096
        %v2098 = vmul.f32 %v2097, 1.442695
        %v2099 = vpow.pop %v2098
        %v2100 = vsel %vm1239, %v2099, 0.0
        %2101 = vadd.xlane.f32.xlu0 %v2100
        %v2102 = vpop.xlane.xlu0 %2101
        %v2103 = vrcp.pop %v2102
        %v2104 = vmul.f32 %v2099, %v2103
        %v2105 = vpack.c.bf16 %v2104, %v2104
        %2106 = vrot.lane.b32.xlu0 %v1858, 88
        %v2107 = vpop.permute.xlu0 %2106
        %v2109 = vsel %vm1239, %v2105, 0
        %v2112 = vsel %vm1303, %v2107, 0
        %2114 = vmatprep.subr.bf16.mxu0 0
        %2115 = vmatpush1.bf16.msra.mxu0 %v2112
        %2116 = vmatprep.subr.bf16.mxu0 0
        %2117 = vmatpush1.bf16.msra.mxu0 0
        %2118 = vmatprep.subr.bf16.mxu0 0
        %2119 = vmatpush1.bf16.msra.mxu0 0
        %2120 = vmatprep.subr.bf16.mxu0 0
        %2121 = vmatpush1.bf16.msra.mxu0 0
        %2122 = vmatprep.subr.bf16.mxu0 0
        %2123 = vmatpush1.bf16.msra.mxu0 0
        %2124 = vmatprep.subr.bf16.mxu0 0
        %2125 = vmatpush1.bf16.msra.mxu0 0
        %2126 = vmatprep.subr.bf16.mxu0 0
        %2127 = vmatpush1.bf16.msra.mxu0 0
        %2128 = vmatprep.subr.bf16.mxu0 0
        %2129 = vmatpush1.bf16.msra.mxu0 0
        %2130 = vmatprep.subr.bf16.mxu0 0
        %2131 = vmatpush1.bf16.msra.mxu0 0
        %2132 = vmatprep.subr.bf16.mxu0 0
        %2133 = vmatpush1.bf16.msra.mxu0 0
        %2134 = vmatprep.subr.bf16.mxu0 0
        %2135 = vmatpush1.bf16.msra.mxu0 0
        %2136 = vmatprep.subr.bf16.mxu0 0
        %2137 = vmatpush1.bf16.msra.mxu0 0
        %2138 = vmatprep.subr.bf16.mxu0 0
        %2139 = vmatpush1.bf16.msra.mxu0 0
        %2140 = vmatprep.subr.bf16.mxu0 0
        %2141 = vmatpush1.bf16.msra.mxu0 0
        %2142 = vmatprep.subr.bf16.mxu0 0
        %2143 = vmatpush1.bf16.msra.mxu0 0
        %2144 = vmatprep.subr.bf16.mxu0 0
        %2145 = vmatpush1.bf16.msra.mxu0 0
        %2146 = vmatprep.mubr.bf16.mxu0 0
        %2147 = vmatmul.mubr.bf16.gmra.mrb[0].mxu0 %v2109
        %v2148 = vpop.f32.mrb[0].mxu0
        %v2149 = vadd.f32 0.0, %v2148
        %v2150 = vpop.f32.mrb[0].mxu0
        %v2151 = vpop.f32.mrb[0].mxu0
        %v2152 = vpop.f32.mrb[0].mxu0
        %2153 = vdwg.mxu0
        %2154 = vrot.lane.b32.xlu0 %v1858, 112
        %v2155 = vpop.permute.xlu0 %2154
        %2156 = vrot.lane.b32.xlu0 %v1926, 112
        %v2157 = vpop.permute.xlu0 %2156
        %v2159 = vsel %vm1239, %v2155, 0
        %v2162 = vsel %vm1239, %v2157, 0
        %2164 = vmatprep.subr.bf16.mxu0 0
        %2165 = vmatpush1.bf16.xpose.msra.mxu0 %v2162
        %2166 = vmatprep.subr.bf16.mxu0 0
        %2167 = vmatpush1.bf16.xpose.msra.mxu0 0
        %2168 = vmatprep.subr.bf16.mxu0 0
        %2169 = vmatpush1.bf16.xpose.msra.mxu0 0
        %2170 = vmatprep.subr.bf16.mxu0 0
        %2171 = vmatpush1.bf16.xpose.msra.mxu0 0
        %2172 = vmatprep.subr.bf16.mxu0 0
        %2173 = vmatpush1.bf16.xpose.msra.mxu0 0
        %2174 = vmatprep.subr.bf16.mxu0 0
        %2175 = vmatpush1.bf16.xpose.msra.mxu0 0
        %2176 = vmatprep.subr.bf16.mxu0 0
        %2177 = vmatpush1.bf16.xpose.msra.mxu0 0
        %2178 = vmatprep.subr.bf16.mxu0 0
        %2179 = vmatpush1.bf16.xpose.msra.mxu0 0
        %2180 = vmatprep.subr.bf16.mxu0 0
        %2181 = vmatpush1.bf16.xpose.msra.mxu0 0
        %2182 = vmatprep.subr.bf16.mxu0 0
        %2183 = vmatpush1.bf16.xpose.msra.mxu0 0
        %2184 = vmatprep.subr.bf16.mxu0 0
        %2185 = vmatpush1.bf16.xpose.msra.mxu0 0
        %2186 = vmatprep.subr.bf16.mxu0 0
        %2187 = vmatpush1.bf16.xpose.msra.mxu0 0
        %2188 = vmatprep.subr.bf16.mxu0 0
        %2189 = vmatpush1.bf16.xpose.msra.mxu0 0
        %2190 = vmatprep.subr.bf16.mxu0 0
        %2191 = vmatpush1.bf16.xpose.msra.mxu0 0
        %2192 = vmatprep.subr.bf16.mxu0 0
        %2193 = vmatpush1.bf16.xpose.msra.mxu0 0
        %2194 = vmatprep.subr.bf16.mxu0 0
        %2195 = vmatpush1.bf16.xpose.msra.mxu0 0
        %2196 = vmatprep.mubr.bf16.mxu0 0
        %2197 = vmatmul.mubr.bf16.gmra.mrb[0].mxu0 %v2159
        %v2198 = vpop.f32.mrb[0].mxu0
        %v2199 = vadd.f32 %v1934, %v2198
        %v2200 = vpop.f32.mrb[0].mxu0
        %v2201 = vpop.f32.mrb[0].mxu0
        %v2202 = vpop.f32.mrb[0].mxu0
        %2203 = vdwg.mxu0
        %v2204 = vsel %vm1239, %v2199, -inf
        %2205 = vmax.xlane.f32.xlu0 %v2204
        %v2206 = vpop.xlane.xlu0 %2205
        %v2207 = vsub.f32 %v2199, %v2206
        %v2208 = vmul.f32 %v2207, 1.442695
        %v2209 = vpow.pop %v2208
        %v2210 = vsel %vm1239, %v2209, 0.0
        %2211 = vadd.xlane.f32.xlu0 %v2210
        %v2212 = vpop.xlane.xlu0 %2211
        %v2213 = vrcp.pop %v2212
        %v2214 = vmul.f32 %v2209, %v2213
        %v2215 = vpack.c.bf16 %v2214, %v2214
        %2216 = vrot.lane.b32.xlu0 %v1858, 80
        %v2217 = vpop.permute.xlu0 %2216
        %v2219 = vsel %vm1239, %v2215, 0
        %v2222 = vsel %vm1303, %v2217, 0
        %2224 = vmatprep.subr.bf16.mxu0 0
        %2225 = vmatpush1.bf16.msra.mxu0 %v2222
        %2226 = vmatprep.subr.bf16.mxu0 0
        %2227 = vmatpush1.bf16.msra.mxu0 0
        %2228 = vmatprep.subr.bf16.mxu0 0
        %2229 = vmatpush1.bf16.msra.mxu0 0
        %2230 = vmatprep.subr.bf16.mxu0 0
        %2231 = vmatpush1.bf16.msra.mxu0 0
        %2232 = vmatprep.subr.bf16.mxu0 0
        %2233 = vmatpush1.bf16.msra.mxu0 0
        %2234 = vmatprep.subr.bf16.mxu0 0
        %2235 = vmatpush1.bf16.msra.mxu0 0
        %2236 = vmatprep.subr.bf16.mxu0 0
        %2237 = vmatpush1.bf16.msra.mxu0 0
        %2238 = vmatprep.subr.bf16.mxu0 0
        %2239 = vmatpush1.bf16.msra.mxu0 0
        %2240 = vmatprep.subr.bf16.mxu0 0
        %2241 = vmatpush1.bf16.msra.mxu0 0
        %2242 = vmatprep.subr.bf16.mxu0 0
        %2243 = vmatpush1.bf16.msra.mxu0 0
        %2244 = vmatprep.subr.bf16.mxu0 0
        %2245 = vmatpush1.bf16.msra.mxu0 0
        %2246 = vmatprep.subr.bf16.mxu0 0
        %2247 = vmatpush1.bf16.msra.mxu0 0
        %2248 = vmatprep.subr.bf16.mxu0 0
        %2249 = vmatpush1.bf16.msra.mxu0 0
        %2250 = vmatprep.subr.bf16.mxu0 0
        %2251 = vmatpush1.bf16.msra.mxu0 0
        %2252 = vmatprep.subr.bf16.mxu0 0
        %2253 = vmatpush1.bf16.msra.mxu0 0
        %2254 = vmatprep.subr.bf16.mxu0 0
        %2255 = vmatpush1.bf16.msra.mxu0 0
        %2256 = vmatprep.mubr.bf16.mxu0 0
        %2257 = vmatmul.mubr.bf16.gmra.mrb[0].mxu0 %v2219
        %v2258 = vpop.f32.mrb[0].mxu0
        %v2259 = vadd.f32 0.0, %v2258
        %v2260 = vpop.f32.mrb[0].mxu0
        %v2261 = vpop.f32.mrb[0].mxu0
        %v2262 = vpop.f32.mrb[0].mxu0
        %2263 = vdwg.mxu0
        %2264 = vrot.lane.b32.xlu0 %v1858, 104
        %v2265 = vpop.permute.xlu0 %2264
        %2266 = vrot.lane.b32.xlu0 %v1926, 104
        %v2267 = vpop.permute.xlu0 %2266
        %v2269 = vsel %vm1239, %v2265, 0
        %v2272 = vsel %vm1239, %v2267, 0
        %2274 = vmatprep.subr.bf16.mxu0 0
        %2275 = vmatpush1.bf16.xpose.msra.mxu0 %v2272
        %2276 = vmatprep.subr.bf16.mxu0 0
        %2277 = vmatpush1.bf16.xpose.msra.mxu0 0
        %2278 = vmatprep.subr.bf16.mxu0 0
        %2279 = vmatpush1.bf16.xpose.msra.mxu0 0
        %2280 = vmatprep.subr.bf16.mxu0 0
        %2281 = vmatpush1.bf16.xpose.msra.mxu0 0
        %2282 = vmatprep.subr.bf16.mxu0 0
        %2283 = vmatpush1.bf16.xpose.msra.mxu0 0
        %2284 = vmatprep.subr.bf16.mxu0 0
        %2285 = vmatpush1.bf16.xpose.msra.mxu0 0
        %2286 = vmatprep.subr.bf16.mxu0 0
        %2287 = vmatpush1.bf16.xpose.msra.mxu0 0
        %2288 = vmatprep.subr.bf16.mxu0 0
        %2289 = vmatpush1.bf16.xpose.msra.mxu0 0
        %2290 = vmatprep.subr.bf16.mxu0 0
        %2291 = vmatpush1.bf16.xpose.msra.mxu0 0
        %2292 = vmatprep.subr.bf16.mxu0 0
        %2293 = vmatpush1.bf16.xpose.msra.mxu0 0
        %2294 = vmatprep.subr.bf16.mxu0 0
        %2295 = vmatpush1.bf16.xpose.msra.mxu0 0
        %2296 = vmatprep.subr.bf16.mxu0 0
        %2297 = vmatpush1.bf16.xpose.msra.mxu0 0
        %2298 = vmatprep.subr.bf16.mxu0 0
        %2299 = vmatpush1.bf16.xpose.msra.mxu0 0
        %2300 = vmatprep.subr.bf16.mxu0 0
        %2301 = vmatpush1.bf16.xpose.msra.mxu0 0
        %2302 = vmatprep.subr.bf16.mxu0 0
        %2303 = vmatpush1.bf16.xpose.msra.mxu0 0
        %2304 = vmatprep.subr.bf16.mxu0 0
        %2305 = vmatpush1.bf16.xpose.msra.mxu0 0
        %2306 = vmatprep.mubr.bf16.mxu0 0
        %2307 = vmatmul.mubr.bf16.gmra.mrb[0].mxu0 %v2269
        %v2308 = vpop.f32.mrb[0].mxu0
        %v2309 = vadd.f32 %v1934, %v2308
        %v2310 = vpop.f32.mrb[0].mxu0
        %v2311 = vpop.f32.mrb[0].mxu0
        %v2312 = vpop.f32.mrb[0].mxu0
        %2313 = vdwg.mxu0
        %v2314 = vsel %vm1239, %v2309, -inf
        %2315 = vmax.xlane.f32.xlu0 %v2314
        %v2316 = vpop.xlane.xlu0 %2315
        %v2317 = vsub.f32 %v2309, %v2316
        %v2318 = vmul.f32 %v2317, 1.442695
        %v2319 = vpow.pop %v2318
        %v2320 = vsel %vm1239, %v2319, 0.0
        %2321 = vadd.xlane.f32.xlu0 %v2320
        %v2322 = vpop.xlane.xlu0 %2321
        %v2323 = vrcp.pop %v2322
        %v2324 = vmul.f32 %v2319, %v2323
        %v2325 = vpack.c.bf16 %v2324, %v2324
        %2326 = vrot.lane.b32.xlu0 %v1858, 72
        %v2327 = vpop.permute.xlu0 %2326
        %v2329 = vsel %vm1239, %v2325, 0
        %v2332 = vsel %vm1303, %v2327, 0
        %2334 = vmatprep.subr.bf16.mxu0 0
        %2335 = vmatpush1.bf16.msra.mxu0 %v2332
        %2336 = vmatprep.subr.bf16.mxu0 0
        %2337 = vmatpush1.bf16.msra.mxu0 0
        %2338 = vmatprep.subr.bf16.mxu0 0
        %2339 = vmatpush1.bf16.msra.mxu0 0
        %2340 = vmatprep.subr.bf16.mxu0 0
        %2341 = vmatpush1.bf16.msra.mxu0 0
        %2342 = vmatprep.subr.bf16.mxu0 0
        %2343 = vmatpush1.bf16.msra.mxu0 0
        %2344 = vmatprep.subr.bf16.mxu0 0
        %2345 = vmatpush1.bf16.msra.mxu0 0
        %2346 = vmatprep.subr.bf16.mxu0 0
        %2347 = vmatpush1.bf16.msra.mxu0 0
        %2348 = vmatprep.subr.bf16.mxu0 0
        %2349 = vmatpush1.bf16.msra.mxu0 0
        %2350 = vmatprep.subr.bf16.mxu0 0
        %2351 = vmatpush1.bf16.msra.mxu0 0
        %2352 = vmatprep.subr.bf16.mxu0 0
        %2353 = vmatpush1.bf16.msra.mxu0 0
        %2354 = vmatprep.subr.bf16.mxu0 0
        %2355 = vmatpush1.bf16.msra.mxu0 0
        %2356 = vmatprep.subr.bf16.mxu0 0
        %2357 = vmatpush1.bf16.msra.mxu0 0
        %2358 = vmatprep.subr.bf16.mxu0 0
        %2359 = vmatpush1.bf16.msra.mxu0 0
        %2360 = vmatprep.subr.bf16.mxu0 0
        %2361 = vmatpush1.bf16.msra.mxu0 0
        %2362 = vmatprep.subr.bf16.mxu0 0
        %2363 = vmatpush1.bf16.msra.mxu0 0
        %2364 = vmatprep.subr.bf16.mxu0 0
        %2365 = vmatpush1.bf16.msra.mxu0 0
        %2366 = vmatprep.mubr.bf16.mxu0 0
        %2367 = vmatmul.mubr.bf16.gmra.mrb[0].mxu0 %v2329
        %v2368 = vpop.f32.mrb[0].mxu0
        %v2369 = vadd.f32 0.0, %v2368
        %v2370 = vpop.f32.mrb[0].mxu0
        %v2371 = vpop.f32.mrb[0].mxu0
        %v2372 = vpop.f32.mrb[0].mxu0
        %2373 = vdwg.mxu0
        %2375 = vrot.lane.b32.xlu0 %v2149, 8
        %v2376 = vpop.permute.xlu0 %2375
        %2379 = vrot.lane.b32.xlu0 %v2259, 16
        %v2380 = vpop.permute.xlu0 %2379
        %2383 = vrot.lane.b32.xlu0 %v2369, 24
        %v2384 = vpop.permute.xlu0 %2383
        %v2386 = vsel %vm1239, %v2038, %v2376
        %v2387 = vsel %vm1690, %v2386, %v2380
        %v2388 = vsel %vm1692, %v2387, %v2384
        %v2389 = vpack.c.bf16 %v2388, %v2388
        %v2390 = vld [vmem:[#allocation28] sm:$0xf]
        %v2391 = vld [vmem:[#allocation28 + $0x4] sm:$0xf]
        %v2392 = vld [vmem:[#allocation28 + $0x8] sm:$0xf]
        %v2393 = vld [vmem:[#allocation28 + $0xc] sm:$0xf]
        %v2394 = vld [vmem:[#allocation29] sm:$0x1]
        %v2396 = vlaneseq
        %v2397 = vshrl.u32 %v2396, 7
        %v2398 = vsub.s32 0, %v2397
        %v2399 = vrot.slane %v2394, %v2398
        %v2405 = vunpack.c.l.b16 %v2390
        %v2406 = vunpack.c.l.b16 %v2391
        %v2407 = vunpack.c.l.b16 %v2392
        %v2408 = vunpack.c.l.b16 %v2393
        %v2409 = vpack.c.b16 %v2406, %v2405
        %v2410 = vpack.c.b16 %v2408, %v2407
        %v2414 = vsel %vm1124, %v2389, 0
        %2416 = vmatprep.subr.bf16.mxu0 0
        %2417 = vmatpush1.bf16.msra.mxu0 %v2409
        %2418 = vmatprep.subr.bf16.mxu0 0
        %2419 = vmatpush1.bf16.msra.mxu0 %v2410
        %2420 = vmatprep.subr.bf16.mxu0 0
        %2421 = vmatpush1.bf16.msra.mxu0 0
        %2422 = vmatprep.subr.bf16.mxu0 0
        %2423 = vmatpush1.bf16.msra.mxu0 0
        %2424 = vmatprep.subr.bf16.mxu0 0
        %2425 = vmatpush1.bf16.msra.mxu0 0
        %2426 = vmatprep.subr.bf16.mxu0 0
        %2427 = vmatpush1.bf16.msra.mxu0 0
        %2428 = vmatprep.subr.bf16.mxu0 0
        %2429 = vmatpush1.bf16.msra.mxu0 0
        %2430 = vmatprep.subr.bf16.mxu0 0
        %2431 = vmatpush1.bf16.msra.mxu0 0
        %2432 = vmatprep.subr.bf16.mxu0 0
        %2433 = vmatpush1.bf16.msra.mxu0 0
        %2434 = vmatprep.subr.bf16.mxu0 0
        %2435 = vmatpush1.bf16.msra.mxu0 0
        %2436 = vmatprep.subr.bf16.mxu0 0
        %2437 = vmatpush1.bf16.msra.mxu0 0
        %2438 = vmatprep.subr.bf16.mxu0 0
        %2439 = vmatpush1.bf16.msra.mxu0 0
        %2440 = vmatprep.subr.bf16.mxu0 0
        %2441 = vmatpush1.bf16.msra.mxu0 0
        %2442 = vmatprep.subr.bf16.mxu0 0
        %2443 = vmatpush1.bf16.msra.mxu0 0
        %2444 = vmatprep.subr.bf16.mxu0 0
        %2445 = vmatpush1.bf16.msra.mxu0 0
        %2446 = vmatprep.subr.bf16.mxu0 0
        %2447 = vmatpush1.bf16.msra.mxu0 0
        %2448 = vmatprep.mubr.bf16.mxu0 0
        %2449 = vmatmul.mubr.bf16.gmra.mrb[0].mxu0 %v2414
        %v2450 = vpop.f32.mrb[0].mxu0
        %v2451 = vadd.f32 %v2399, %v2450
        %v2452 = vpop.f32.mrb[0].mxu0
        %v2453 = vpop.f32.mrb[0].mxu0
        %v2454 = vpop.f32.mrb[0].mxu0
        %2455 = vdwg.mxu0
        %v2456 = vadd.f32 %v1761, %v2451
        %v2457 = vld [vmem:[#allocation31] sm:$0x1]
        %v2458 = vld [vmem:[#allocation32] sm:$0x1]
        %v2459 = vsel %vm1124, %v2456, 0.0
        %2460 = vadd.xlane.f32.xlu0 %v2459
        %v2461 = vpop.xlane.xlu0 %2460
        %v2462 = vmul.f32 %v2461, %v1128
        %v2463 = vsub.f32 %v2456, %v2462
        %v2464 = vmul.f32 %v2463, %v2463
        %v2465 = vsel %vm1124, %v2464, 0.0
        %2466 = vadd.xlane.f32.xlu0 %v2465
        %v2467 = vpop.xlane.xlu0 %2466
        %v2468 = vmul.f32 %v2467, %v1128
        %v2469 = vadd.f32 %v2468, 1e-05
        %v2470 = vrsqrt.pop %v2469
        %v2471 = vmul.f32 %v2463, %v2470
        %v2473 = vlaneseq
        %v2474 = vshrl.u32 %v2473, 7
        %v2475 = vsub.s32 0, %v2474
        %v2476 = vrot.slane %v2457, %v2475
        %v2478 = vmul.f32 %v2471, %v2476
        %v2480 = vlaneseq
        %v2481 = vshrl.u32 %v2480, 7
        %v2482 = vsub.s32 0, %v2481
        %v2483 = vrot.slane %v2458, %v2482
        %v2485 = vadd.f32 %v2478, %v2483
        %v2486 = vpack.c.bf16 %v2485, %v2485
        %v2487 = vld [vmem:[#allocation34] sm:$0xf]
        %v2488 = vld [vmem:[#allocation34 + $0x4] sm:$0xf]
        %v2489 = vld [vmem:[#allocation34 + $0x8] sm:$0xf]
        %v2490 = vld [vmem:[#allocation34 + $0xc] sm:$0xf]
        %v2491 = vld [vmem:[#allocation35] sm:$0x1]
        %v2493 = vlaneseq
        %v2494 = vshrl.u32 %v2493, 7
        %v2495 = vsub.s32 0, %v2494
        %v2496 = vrot.slane %v2491, %v2495
        %v2502 = vunpack.c.l.b16 %v2487
        %v2503 = vunpack.c.l.b16 %v2488
        %v2504 = vunpack.c.l.b16 %v2489
        %v2505 = vunpack.c.l.b16 %v2490
        %v2506 = vpack.c.b16 %v2503, %v2502
        %v2507 = vpack.c.b16 %v2505, %v2504
        %v2511 = vsel %vm1124, %v2486, 0
        %2513 = vmatprep.subr.bf16.mxu0 0
        %2514 = vmatpush1.bf16.msra.mxu0 %v2506
        %2515 = vmatprep.subr.bf16.mxu0 0
        %2516 = vmatpush1.bf16.msra.mxu0 %v2507
        %2517 = vmatprep.subr.bf16.mxu0 0
        %2518 = vmatpush1.bf16.msra.mxu0 0
        %2519 = vmatprep.subr.bf16.mxu0 0
        %2520 = vmatpush1.bf16.msra.mxu0 0
        %2521 = vmatprep.subr.bf16.mxu0 0
        %2522 = vmatpush1.bf16.msra.mxu0 0
        %2523 = vmatprep.subr.bf16.mxu0 0
        %2524 = vmatpush1.bf16.msra.mxu0 0
        %2525 = vmatprep.subr.bf16.mxu0 0
        %2526 = vmatpush1.bf16.msra.mxu0 0
        %2527 = vmatprep.subr.bf16.mxu0 0
        %2528 = vmatpush1.bf16.msra.mxu0 0
        %2529 = vmatprep.subr.bf16.mxu0 0
        %2530 = vmatpush1.bf16.msra.mxu0 0
        %2531 = vmatprep.subr.bf16.mxu0 0
        %2532 = vmatpush1.bf16.msra.mxu0 0
        %2533 = vmatprep.subr.bf16.mxu0 0
        %2534 = vmatpush1.bf16.msra.mxu0 0
        %2535 = vmatprep.subr.bf16.mxu0 0
        %2536 = vmatpush1.bf16.msra.mxu0 0
        %2537 = vmatprep.subr.bf16.mxu0 0
        %2538 = vmatpush1.bf16.msra.mxu0 0
        %2539 = vmatprep.subr.bf16.mxu0 0
        %2540 = vmatpush1.bf16.msra.mxu0 0
        %2541 = vmatprep.subr.bf16.mxu0 0
        %2542 = vmatpush1.bf16.msra.mxu0 0
        %2543 = vmatprep.subr.bf16.mxu0 0
        %2544 = vmatpush1.bf16.msra.mxu0 0
        %2545 = vmatprep.mubr.bf16.mxu0 0
        %2546 = vmatmul.mubr.bf16.gmra.mrb[0].mxu0 %v2511
        %v2547 = vpop.f32.mrb[0].mxu0
        %v2548 = vadd.f32 %v2496, %v2547
        %v2549 = vpop.f32.mrb[0].mxu0
        %v2550 = vpop.f32.mrb[0].mxu0
        %v2551 = vpop.f32.mrb[0].mxu0
        %2552 = vdwg.mxu0
        %v2553 = vmax.f32 %v2548, 0.0
        %v2554 = vpack.c.bf16 %v2553, %v2553
        %v2555 = vld [vmem:[#allocation37] sm:$0xf]
        %v2556 = vld [vmem:[#allocation37 + $0x4] sm:$0xf]
        %v2557 = vld [vmem:[#allocation37 + $0x8] sm:$0xf]
        %v2558 = vld [vmem:[#allocation37 + $0xc] sm:$0xf]
        %v2559 = vld [vmem:[#allocation37 + $0x10] sm:$0xf]
        %v2560 = vld [vmem:[#allocation37 + $0x14] sm:$0xf]
        %v2561 = vld [vmem:[#allocation37 + $0x18] sm:$0xf]
        %v2562 = vld [vmem:[#allocation37 + $0x1c] sm:$0xf]
        %v2563 = vld [vmem:[#allocation38] sm:$0x1]
        %v2565 = vlaneseq
        %v2566 = vshrl.u32 %v2565, 7
        %v2567 = vsub.s32 0, %v2566
        %v2568 = vrot.slane %v2563, %v2567
        %v2578 = vunpack.c.l.b16 %v2555
        %v2579 = vunpack.c.l.b16 %v2556
        %v2580 = vunpack.c.l.b16 %v2557
        %v2581 = vunpack.c.l.b16 %v2558
        %v2582 = vunpack.c.l.b16 %v2559
        %v2583 = vunpack.c.l.b16 %v2560
        %v2584 = vunpack.c.l.b16 %v2561
        %v2585 = vunpack.c.l.b16 %v2562
        %v2586 = vpack.c.b16 %v2579, %v2578
        %v2587 = vpack.c.b16 %v2581, %v2580
        %v2588 = vpack.c.b16 %v2583, %v2582
        %v2589 = vpack.c.b16 %v2585, %v2584
        %vm2594 = vcmask 523264
        %v2596 = vsel %vm2594, %v2554, 0
        %2598 = vmatprep.subr.bf16.mxu0 0
        %2599 = vmatpush1.bf16.msra.mxu0 %v2586
        %2600 = vmatprep.subr.bf16.mxu0 0
        %2601 = vmatpush1.bf16.msra.mxu0 %v2587
        %2602 = vmatprep.subr.bf16.mxu0 0
        %2603 = vmatpush1.bf16.msra.mxu0 %v2588
        %2604 = vmatprep.subr.bf16.mxu0 0
        %2605 = vmatpush1.bf16.msra.mxu0 %v2589
        %2606 = vmatprep.subr.bf16.mxu0 0
        %2607 = vmatpush1.bf16.msra.mxu0 0
        %2608 = vmatprep.subr.bf16.mxu0 0
        %2609 = vmatpush1.bf16.msra.mxu0 0
        %2610 = vmatprep.subr.bf16.mxu0 0
        %2611 = vmatpush1.bf16.msra.mxu0 0
        %2612 = vmatprep.subr.bf16.mxu0 0
        %2613 = vmatpush1.bf16.msra.mxu0 0
        %2614 = vmatprep.subr.bf16.mxu0 0
        %2615 = vmatpush1.bf16.msra.mxu0 0
        %2616 = vmatprep.subr.bf16.mxu0 0
        %2617 = vmatpush1.bf16.msra.mxu0 0
        %2618 = vmatprep.subr.bf16.mxu0 0
        %2619 = vmatpush1.bf16.msra.mxu0 0
        %2620 = vmatprep.subr.bf16.mxu0 0
        %2621 = vmatpush1.bf16.msra.mxu0 0
        %2622 = vmatprep.subr.bf16.mxu0 0
        %2623 = vmatpush1.bf16.msra.mxu0 0
        %2624 = vmatprep.subr.bf16.mxu0 0
        %2625 = vmatpush1.bf16.msra.mxu0 0
        %2626 = vmatprep.subr.bf16.mxu0 0
        %2627 = vmatpush1.bf16.msra.mxu0 0
        %2628 = vmatprep.subr.bf16.mxu0 0
        %2629 = vmatpush1.bf16.msra.mxu0 0
        %2630 = vmatprep.mubr.bf16.mxu0 0
        %2631 = vmatmul.mubr.bf16.gmra.mrb[0].mxu0 %v2596
        %v2632 = vpop.f32.mrb[0].mxu0
        %v2633 = vadd.f32 %v2568, %v2632
        %v2634 = vpop.f32.mrb[0].mxu0
        %v2635 = vpop.f32.mrb[0].mxu0
        %v2636 = vpop.f32.mrb[0].mxu0
        %2637 = vdwg.mxu0
        %v2638 = vadd.f32 %v2456, %v2633
        %2639 = vst.msk [vmem:[%s1118] sm:$0xff] %vm1124, %v2638
        %s2640 = sand.u32 %s589, 1
        %s2641 = scalar_lea.sflag [#allocation4], %s2640
        %s2642 = sand.u32 %s589, 1
        %s2643 = smul.addr %s2642, 8
        %s2644 = scalar_lea.vmem [#allocation40], %s2643
        // Predicated region
        $region213: #{decoder_layer_forward.1} parent=115 // pred_check
          %p2645 = pneg %p599
        $region214: #{decoder_layer_forward.1} parent=115 // pred_check_branch
          %2647 = sbr.rel (%p2645) target = $region216
        $region215: #{decoder_layer_forward.1} parent=115 // pred_region
          %s2649 = ssub.s32 128, 128
          %2650 = vsyncadd %s2641, %s2649
          %s2651 = smul.addr %s57, 128
          %s2652 = scalar_lea.hbm %s24, %s2651
          %s2654 = sshll.u32 %s2644, 4
          %s2655 = int_to_ptr.vmem [resolvable:$true] %s2654
          %2657 = dma.vmem_to_hbm [thread:$0]  %s2655, 128, %s2652, %s2641
        $region216: #{decoder_layer_forward.1} parent=115 // pred_fallthru
          _
      $region116: #{decoder_layer_forward.1} parent=5 // pred_fallthru
        _
      %p2658 = scmp.le.s32.totalorder 2, %s52
      // Predicated region
      $region217: #{decoder_layer_forward.1} parent=5 // pred_check
        %p2659 = pneg %p2658
      $region218: #{decoder_layer_forward.1} parent=5 // pred_check_branch
        %2661 = sbr.rel (%p2659) target = $region220
      $region219: #{decoder_layer_forward.1} parent=5 // pred_region
        %s2662 = ssub.s32 %s52, 2
        // Predicated region
        $region221: #{decoder_layer_forward.1} parent=219 // pred_check
          %p2663 = pneg %p605
        $region222: #{decoder_layer_forward.1} parent=219 // pred_check_branch
          %2665 = sbr.rel (%p2663) target = $region224
        $region223: #{decoder_layer_forward.1} parent=219 // pred_region
          %s2666 = sand.u32 %s590, 1
          %s2667 = scalar_lea.sflag [#allocation4], %s2666
          %s2668 = sand.u32 %s590, 1
          %s2669 = smul.addr %s2668, 8
          %s2670 = scalar_lea.vmem [#allocation40], %s2669
          %2671 = dma.done %s2667, 128
        $region224: #{decoder_layer_forward.1} parent=219 // pred_fallthru
          _
      $region220: #{decoder_layer_forward.1} parent=5 // pred_fallthru
        _
    $region6: #{decoder_layer_forward.1} parent=1 // loop_footer
      %s56 = sadd.s32 1, %s52
    $region7: #{decoder_layer_forward.1} parent=1 // loop_footer_branch
      %51 = sbr.rel target = $region3
    $region8: #{decoder_layer_forward.1} parent=1 // loop_exit
      _
    %2672 = vsyncpa [#allocation3], 1
    %s2673 = scalar_lea.sflag [#allocation3], 1
    %2674 = vsyncpa %s2673, 1
    %2675 = vsyncpa [#allocation6], 1
    %s2676 = scalar_lea.sflag [#allocation6], 1
    %2677 = vsyncpa %s2676, 1
    %2678 = vsyncpa [#allocation9], 1
    %s2679 = scalar_lea.sflag [#allocation9], 1
    %2680 = vsyncpa %s2679, 1
    %2681 = vsyncpa [#allocation12], 1
    %2682 = vsyncpa [#allocation15], 1
    %2683 = vsyncpa [#allocation18], 1
    %2684 = vsyncpa [#allocation21], 1
    %2685 = vsyncpa [#allocation24], 1
    %2686 = vsyncpa [#allocation27], 1
    %2687 = vsyncpa [#allocation30], 1
    %2688 = vsyncpa [#allocation33], 1
    %2689 = vsyncpa [#allocation36], 1
    %2690 = vsyncpa [#allocation39], 1
    %2691 = vsyncpa [#allocation4], 1
    %s2692 = scalar_lea.sflag [#allocation4], 1
    %2693 = vsyncpa %s2692, 1

</llo_original>
